<compile_context>
chip_gen: v7x
topology: tpu7x:2x2x1
jax: 0.10.0
libtpu: 0.0.40
codegen_flags: <defaults>
</compile_context>

<pallas_src>
import jax
import jax.numpy as jnp
from jax.experimental import pallas as pl
from jax.experimental.pallas import tpu as pltpu

# ---- problem sizes (small, consistent with a classifier forward) ----------
B = 2            # batch
CIN = 4          # input channels
H = W = 16       # spatial
CMID = 8         # conv output channels
NUM_CLASSES = 10 # model.fc.out_features
KH = KW = 3      # conv kernel

HW = H * W
HP, WP = H + 2, W + 2          # spatially padded input (pad=1, SAME)
K_IM2COL = KH * KW * CIN       # 36
C_PAD = 128                    # pad conv-output channels to a full lane width
N_PAD = 128                    # pad num_classes (lane-dense output store)
M_ROWS = 8                     # output rows padded to one sublane group


def _classifier_kernel(x_ref, wk_ref, cb_ref, fcw_ref, fcb_ref, pool_ref,
                       out_ref):
    """Whole forward in one grid point (everything resident in VMEM).

    x_ref    : (B, H+2, W+2, CIN) bf16  spatially padded NHWC input
    wk_ref   : (K_IM2COL, C_PAD)  bf16  conv weight (kh,kw,cin)xCMID, *1/HW, padded
    cb_ref   : (1, C_PAD)         f32   conv bias * 1/HW (zero-padded)
    fcw_ref  : (C_PAD, N_PAD)     bf16  fc weight (CMID x NUM_CLASSES, padded)
    fcb_ref  : (1, N_PAD)         f32   fc bias (zero-padded)
    pool_ref : (M_ROWS, B*HW)     bf16  block-diagonal sum matrix (rows >= B are 0)
    out_ref  : (M_ROWS, N_PAD)    f32   padded logits
    """
    # ---- in-kernel im2col: 9 shifted static slices -> (B*HW, 36) bf16 ------
    cols = [x_ref[:, kh:kh + H, kw:kw + W, :].reshape(B * HW, CIN)
            for kh in range(KH) for kw in range(KW)]
    patches = jnp.concatenate(cols, axis=-1)                     # (B*HW, 36)

    # ---- conv as one dense MXU matmul, bf16 in / f32 accumulate ------------
    conv = jnp.dot(patches, wk_ref[...],
                   preferred_element_type=jnp.float32)           # (B*HW, C_PAD)
    conv = jnp.maximum(conv + cb_ref[...], 0.0)                  # bias + ReLU (f32)

    # ---- global average pool on the MXU (1/HW already folded into conv) ----
    pooled = jnp.dot(pool_ref[...], conv.astype(jnp.bfloat16),
                     preferred_element_type=jnp.float32)         # (M_ROWS, C_PAD)

    # ---- final fc (model.fc), bf16 operands / f32 accumulate ---------------
    logits = jnp.dot(pooled.astype(jnp.bfloat16), fcw_ref[...],
                     preferred_element_type=jnp.float32) + fcb_ref[...]
    out_ref[...] = logits


def prepare_params(conv_w_oihw, conv_b, fc_w, fc_b):
    """One-time weight preprocessing (hoisted out of the per-forward path).

    conv_w_oihw: (CMID, CIN, KH, KW) PyTorch Conv2d weight layout
    conv_b     : (CMID,)
    fc_w       : (NUM_CLASSES, CMID) PyTorch Linear weight layout
    fc_b       : (NUM_CLASSES,)
    """
    inv_hw = jnp.float32(1.0 / HW)   # folded into conv weight+bias (ReLU is
                                     # positively homogeneous, pool/fc linear)

    # conv weight OIHW -> (KH,KW,I,O) -> (36, CMID), scaled, padded, bf16
    wk = jnp.transpose(conv_w_oihw, (2, 3, 1, 0)).reshape(K_IM2COL, CMID)
    wk = (wk.astype(jnp.float32) * inv_hw)
    wk = jnp.pad(wk, ((0, 0), (0, C_PAD - CMID))).astype(jnp.bfloat16)

    cb = jnp.pad((conv_b.astype(jnp.float32) * inv_hw).reshape(1, CMID),
                 ((0, 0), (0, C_PAD - CMID)))

    # fc weight: (CMID, NUM_CLASSES), padded, bf16 (no pooling scale here)
    fcw = jnp.pad(fc_w.T.astype(jnp.float32),
                  ((0, C_PAD - CMID), (0, N_PAD - NUM_CLASSES))
                  ).astype(jnp.bfloat16)
    fcb = jnp.pad(fc_b.reshape(1, NUM_CLASSES).astype(jnp.float32),
                  ((0, 0), (0, N_PAD - NUM_CLASSES)))

    # block-diagonal pooling (sum) matrix: row b selects rows of batch b
    rows = jnp.arange(M_ROWS, dtype=jnp.int32)[:, None]          # (8, 1)
    colsi = jnp.arange(B * HW, dtype=jnp.int32)[None, :]         # (1, B*HW)
    pool = ((colsi // HW) == rows).astype(jnp.bfloat16)          # (8, B*HW)

    return wk, cb, fcw, fcb, pool


@jax.jit
def ref_model_forward(x_nchw, wk, cb, fcw, fcb, pool):
    """Mirrors Ref_Model.forward: x -> model(x) -> logits.

    x_nchw : (B, CIN, H, W) PyTorch-layout input
    others : preprocessed params from prepare_params()
    returns: (B, NUM_CLASSES) float32 logits
    """
    # Only per-call layout plumbing: NCHW -> NHWC, SAME pad, bf16 cast (~2.5 KiB)
    x_nhwc = jnp.transpose(x_nchw, (0, 2, 3, 1))
    x_pad = jnp.pad(x_nhwc, ((0, 0), (1, 1), (1, 1), (0, 0))
                    ).astype(jnp.bfloat16)

    vmem = pl.BlockSpec(memory_space=pltpu.MemorySpace.VMEM)
    logits_padded = pl.pallas_call(
        _classifier_kernel,
        out_shape=jax.ShapeDtypeStruct((M_ROWS, N_PAD), jnp.float32),
        in_specs=[vmem, vmem, vmem, vmem, vmem, vmem],
        out_specs=vmem,
    )(x_pad, wk, cb, fcw, fcb, pool)

    return logits_padded[:B, :NUM_CLASSES]


def _reference_forward(x_nchw, conv_w_oihw, conv_b, fc_w, fc_b):
    """Pure-JAX f32 reference (same math, lax.conv) for correctness check."""
    y = jax.lax.conv_general_dilated(
        x_nchw, conv_w_oihw, window_strides=(1, 1), padding="SAME",
        dimension_numbers=("NCHW", "OIHW", "NCHW"))
    y = y + conv_b.reshape(1, CMID, 1, 1)
    y = jnp.maximum(y, 0.0)
    pooled = y.mean(axis=(2, 3))                                  # (B, CMID)
    return pooled @ fc_w.T + fc_b


if __name__ == "__main__":
    key = jax.random.PRNGKey(0)
    k_x, k_cw, k_cb, k_fw, k_fb = jax.random.split(key, 5)

    x = jax.random.normal(k_x, (B, CIN, H, W), dtype=jnp.float32)
    conv_w = jax.random.normal(k_cw, (CMID, CIN, KH, KW), jnp.float32) * 0.1
    conv_b = jax.random.normal(k_cb, (CMID,), jnp.float32) * 0.1
    fc_w = jax.random.normal(k_fw, (NUM_CLASSES, CMID), jnp.float32) * 0.1
    fc_b = jax.random.normal(k_fb, (NUM_CLASSES,), jnp.float32) * 0.1

    # One-time weight prep (call-invariant, kept out of the per-forward jit).
    params = prepare_params(conv_w, conv_b, fc_w, fc_b)

    out = ref_model_forward(x, *params)
    jax.block_until_ready(out)

    ref = _reference_forward(x, conv_w, conv_b, fc_w, fc_b)
    assert out.shape == (B, NUM_CLASSES)
    # bf16 MXU operands (f32 accumulation) -> relaxed tolerance vs f32 reference
    assert jnp.allclose(out, ref, atol=2e-2, rtol=2e-2), "mismatch vs reference"

    # TODO(synk): RPC/RRef plumbing (to_here, parameter_rrefs, state_dict RRefs,
    # dist_autograd gradients) has no Pallas equivalent; only the model forward
    # is implemented.
    print("KERNEL_OK")
</pallas_src>

<mosaic_0001>
module attributes {stable_mosaic.version = 11 : i64} {
  func.func @_classifier_kernel(%arg0: memref<2x18x18x4xbf16, #tpu.memory_space<vmem>>, %arg1: memref<36x128xbf16, #tpu.memory_space<vmem>>, %arg2: memref<1x128xf32, #tpu.memory_space<vmem>>, %arg3: memref<128x128xbf16, #tpu.memory_space<vmem>>, %arg4: memref<1x128xf32, #tpu.memory_space<vmem>>, %arg5: memref<8x512xbf16, #tpu.memory_space<vmem>>, %arg6: memref<8x128xf32, #tpu.memory_space<vmem>>) attributes {dimension_semantics = [], scalar_prefetch = 0 : i64, scratch_operands = 0 : i64, tpu.core_type = #tpu.core_type<tc>} {
    %c0 = arith.constant 0 : index
    %c0_0 = arith.constant 0 : index
    %c0_1 = arith.constant 0 : index
    %c0_2 = arith.constant 0 : index
    %0 = vector.load %arg0[%c0, %c0_0, %c0_1, %c0_2] : memref<2x18x18x4xbf16, #tpu.memory_space<vmem>>, vector<2x16x16x4xbf16>
    %1 = vector.shape_cast %0 : vector<2x16x16x4xbf16> to vector<512x4xbf16>
    %c0_3 = arith.constant 0 : index
    %c0_4 = arith.constant 0 : index
    %c1 = arith.constant 1 : index
    %c0_5 = arith.constant 0 : index
    %2 = vector.load %arg0[%c0_3, %c0_4, %c1, %c0_5] : memref<2x18x18x4xbf16, #tpu.memory_space<vmem>>, vector<2x16x16x4xbf16>
    %3 = vector.shape_cast %2 : vector<2x16x16x4xbf16> to vector<512x4xbf16>
    %c0_6 = arith.constant 0 : index
    %c0_7 = arith.constant 0 : index
    %c2 = arith.constant 2 : index
    %c0_8 = arith.constant 0 : index
    %4 = vector.load %arg0[%c0_6, %c0_7, %c2, %c0_8] : memref<2x18x18x4xbf16, #tpu.memory_space<vmem>>, vector<2x16x16x4xbf16>
    %5 = vector.shape_cast %4 : vector<2x16x16x4xbf16> to vector<512x4xbf16>
    %c0_9 = arith.constant 0 : index
    %c1_10 = arith.constant 1 : index
    %c0_11 = arith.constant 0 : index
    %c0_12 = arith.constant 0 : index
    %6 = vector.load %arg0[%c0_9, %c1_10, %c0_11, %c0_12] : memref<2x18x18x4xbf16, #tpu.memory_space<vmem>>, vector<2x16x16x4xbf16>
    %7 = vector.shape_cast %6 : vector<2x16x16x4xbf16> to vector<512x4xbf16>
    %c0_13 = arith.constant 0 : index
    %c1_14 = arith.constant 1 : index
    %c1_15 = arith.constant 1 : index
    %c0_16 = arith.constant 0 : index
    %8 = vector.load %arg0[%c0_13, %c1_14, %c1_15, %c0_16] : memref<2x18x18x4xbf16, #tpu.memory_space<vmem>>, vector<2x16x16x4xbf16>
    %9 = vector.shape_cast %8 : vector<2x16x16x4xbf16> to vector<512x4xbf16>
    %c0_17 = arith.constant 0 : index
    %c1_18 = arith.constant 1 : index
    %c2_19 = arith.constant 2 : index
    %c0_20 = arith.constant 0 : index
    %10 = vector.load %arg0[%c0_17, %c1_18, %c2_19, %c0_20] : memref<2x18x18x4xbf16, #tpu.memory_space<vmem>>, vector<2x16x16x4xbf16>
    %11 = vector.shape_cast %10 : vector<2x16x16x4xbf16> to vector<512x4xbf16>
    %c0_21 = arith.constant 0 : index
    %c2_22 = arith.constant 2 : index
    %c0_23 = arith.constant 0 : index
    %c0_24 = arith.constant 0 : index
    %12 = vector.load %arg0[%c0_21, %c2_22, %c0_23, %c0_24] : memref<2x18x18x4xbf16, #tpu.memory_space<vmem>>, vector<2x16x16x4xbf16>
    %13 = vector.shape_cast %12 : vector<2x16x16x4xbf16> to vector<512x4xbf16>
    %c0_25 = arith.constant 0 : index
    %c2_26 = arith.constant 2 : index
    %c1_27 = arith.constant 1 : index
    %c0_28 = arith.constant 0 : index
    %14 = vector.load %arg0[%c0_25, %c2_26, %c1_27, %c0_28] : memref<2x18x18x4xbf16, #tpu.memory_space<vmem>>, vector<2x16x16x4xbf16>
    %15 = vector.shape_cast %14 : vector<2x16x16x4xbf16> to vector<512x4xbf16>
    %c0_29 = arith.constant 0 : index
    %c2_30 = arith.constant 2 : index
    %c2_31 = arith.constant 2 : index
    %c0_32 = arith.constant 0 : index
    %16 = vector.load %arg0[%c0_29, %c2_30, %c2_31, %c0_32] : memref<2x18x18x4xbf16, #tpu.memory_space<vmem>>, vector<2x16x16x4xbf16>
    %17 = vector.shape_cast %16 : vector<2x16x16x4xbf16> to vector<512x4xbf16>
    %18 = tpu.concatenate %1, %3, %5, %7, %9, %11, %13, %15, %17 in 1 : vector<512x4xbf16>, vector<512x4xbf16>, vector<512x4xbf16>, vector<512x4xbf16>, vector<512x4xbf16>, vector<512x4xbf16>, vector<512x4xbf16>, vector<512x4xbf16>, vector<512x4xbf16> -> vector<512x36xbf16>
    %c0_33 = arith.constant 0 : index
    %c0_34 = arith.constant 0 : index
    %19 = vector.load %arg1[%c0_33, %c0_34] : memref<36x128xbf16, #tpu.memory_space<vmem>>, vector<36x128xbf16>
    %cst = arith.constant dense<0.000000e+00> : vector<512x128xf32>
    %20 = tpu.matmul %18, %19, %cst {dimension_numbers = #tpu.dot_dimension_numbers<[1], [0], [0], [1], [0, 0, 1, 1], [], []>} : vector<512x36xbf16>, vector<36x128xbf16>, vector<512x128xf32> -> vector<512x128xf32>
    %c0_35 = arith.constant 0 : index
    %c0_36 = arith.constant 0 : index
    %21 = vector.load %arg2[%c0_35, %c0_36] : memref<1x128xf32, #tpu.memory_space<vmem>>, vector<1x128xf32>
    %22 = vector.broadcast %21 : vector<1x128xf32> to vector<512x128xf32>
    %23 = arith.addf %20, %22 : vector<512x128xf32>
    %cst_37 = arith.constant 0.000000e+00 : f32
    %24 = vector.broadcast %cst_37 : f32 to vector<512x128xf32>
    %25 = arith.maximumf %23, %24 : vector<512x128xf32>
    %c0_38 = arith.constant 0 : index
    %c0_39 = arith.constant 0 : index
    %26 = vector.load %arg5[%c0_38, %c0_39] : memref<8x512xbf16, #tpu.memory_space<vmem>>, vector<8x512xbf16>
    %27 = arith.truncf %25 : vector<512x128xf32> to vector<512x128xbf16>
    %cst_40 = arith.constant dense<0.000000e+00> : vector<8x128xf32>
    %28 = tpu.matmul %26, %27, %cst_40 {dimension_numbers = #tpu.dot_dimension_numbers<[1], [0], [0], [1], [0, 0, 1, 1], [], []>} : vector<8x512xbf16>, vector<512x128xbf16>, vector<8x128xf32> -> vector<8x128xf32>
    %29 = arith.truncf %28 : vector<8x128xf32> to vector<8x128xbf16>
    %c0_41 = arith.constant 0 : index
    %c0_42 = arith.constant 0 : index
    %30 = vector.load %arg3[%c0_41, %c0_42] : memref<128x128xbf16, #tpu.memory_space<vmem>>, vector<128x128xbf16>
    %cst_43 = arith.constant dense<0.000000e+00> : vector<8x128xf32>
    %31 = tpu.matmul %29, %30, %cst_43 {dimension_numbers = #tpu.dot_dimension_numbers<[1], [0], [0], [1], [0, 0, 1, 1], [], []>} : vector<8x128xbf16>, vector<128x128xbf16>, vector<8x128xf32> -> vector<8x128xf32>
    %c0_44 = arith.constant 0 : index
    %c0_45 = arith.constant 0 : index
    %32 = vector.load %arg4[%c0_44, %c0_45] : memref<1x128xf32, #tpu.memory_space<vmem>>, vector<1x128xf32>
    %33 = vector.broadcast %32 : vector<1x128xf32> to vector<8x128xf32>
    %34 = arith.addf %31, %33 : vector<8x128xf32>
    %c0_46 = arith.constant 0 : index
    %c0_47 = arith.constant 0 : index
    %35 = vector.load %arg6[%c0_46, %c0_47] : memref<8x128xf32, #tpu.memory_space<vmem>>, vector<8x128xf32>
    tpu.vector_store %arg6[%c0_46, %c0_47], %34 {strides = array<i32>} : memref<8x128xf32, #tpu.memory_space<vmem>>, vector<8x128xf32>,
    return
  }
}

</mosaic_0001>

<llo_original>
// kernel: ref_model_forward.1
$region0: #{ref_model_forward.1}
  #allocation0 [shape = 'u32[]', space=smem, size = 0x4, offset = 0x4, fixed_abs, tag = 'smem constant byte address 0x4 - core index']
  #allocation1 [shape = 'u32[144,128]{1,0:T(1,128)}', space=vmem, size = 0x12000, scoped, tag = 'internal scratch']
  %s0 = inlined_call_operand.vmem [shape: bf16[2,18,18,4], index: 0, kind: input, shape index: {}]
  %s1 = inlined_call_operand.vmem [shape: bf16[36,128], index: 1, kind: input, shape index: {}]
  %s2 = inlined_call_operand.vmem [shape: f32[1,128], index: 2, kind: input, shape index: {}]
  %s3 = inlined_call_operand.vmem [shape: bf16[128,128], index: 3, kind: input, shape index: {}]
  %s4 = inlined_call_operand.vmem [shape: f32[1,128], index: 4, kind: input, shape index: {}]
  %s5 = inlined_call_operand.vmem [shape: bf16[8,512], index: 5, kind: input, shape index: {}]
  %s6 = inlined_call_operand.vmem [shape: f32[8,128], index: 6, kind: output, shape index: {}]
  %s7 = sld [smem:[#allocation0]]
  $region34: #{ref_model_forward.1} parent=0
    _
  %s9 = ssub.s32 1, %s7
  %s10 = scalar_select 0, %s9, %s7
  // Predicated region
  $region2: #{ref_model_forward.1} parent=0 // pred_check
    _
  $region3: #{ref_model_forward.1} parent=0 // pred_check_branch
    %12 = sbr.rel (0) target = $region5
  $region4: #{ref_model_forward.1} parent=0 // pred_region
    _
  $region5: #{ref_model_forward.1} parent=0 // pred_fallthru
    _
  // Predicated region
  $region6: #{ref_model_forward.1} parent=0 // pred_check
    _
  $region7: #{ref_model_forward.1} parent=0 // pred_check_branch
    %14 = sbr.rel (0) target = $region9
  $region8: #{ref_model_forward.1} parent=0 // pred_region
    _
  $region9: #{ref_model_forward.1} parent=0 // pred_fallthru
    _
  // Predicated region
  $region10: #{ref_model_forward.1} parent=0 // pred_check
    _
  $region11: #{ref_model_forward.1} parent=0 // pred_check_branch
    %16 = sbr.rel (0) target = $region13
  $region12: #{ref_model_forward.1} parent=0 // pred_region
    _
  $region13: #{ref_model_forward.1} parent=0 // pred_fallthru
    _
  // Predicated region
  $region14: #{ref_model_forward.1} parent=0 // pred_check
    _
  $region15: #{ref_model_forward.1} parent=0 // pred_check_branch
    %18 = sbr.rel (0) target = $region17
  $region16: #{ref_model_forward.1} parent=0 // pred_region
    _
  $region17: #{ref_model_forward.1} parent=0 // pred_fallthru
    _
  // Predicated region
  $region18: #{ref_model_forward.1} parent=0 // pred_check
    _
  $region19: #{ref_model_forward.1} parent=0 // pred_check_branch
    %20 = sbr.rel (0) target = $region21
  $region20: #{ref_model_forward.1} parent=0 // pred_region
    _
  $region21: #{ref_model_forward.1} parent=0 // pred_fallthru
    _
  // Predicated region
  $region22: #{ref_model_forward.1} parent=0 // pred_check
    _
  $region23: #{ref_model_forward.1} parent=0 // pred_check_branch
    %22 = sbr.rel (0) target = $region25
  $region24: #{ref_model_forward.1} parent=0 // pred_region
    _
  $region25: #{ref_model_forward.1} parent=0 // pred_fallthru
    _
  %v24 = vld [vmem:[%s0] sm:$0xf]
  %v25 = vld [vmem:[%s0 + $0x4] sm:$0xf]
  %v26 = vld [vmem:[%s0 + $0xc] sm:$0xf]
  %v27 = vld [vmem:[%s0 + $0x10] sm:$0xf]
  %v28 = vld [vmem:[%s0 + $0x18] sm:$0xf]
  %v29 = vld [vmem:[%s0 + $0x1c] sm:$0xf]
  %v30 = vld [vmem:[%s0 + $0x24] sm:$0xf]
  %v31 = vld [vmem:[%s0 + $0x28] sm:$0xf]
  %v32 = vld [vmem:[%s0 + $0x30] sm:$0xf]
  %v33 = vld [vmem:[%s0 + $0x34] sm:$0xf]
  %v34 = vld [vmem:[%s0 + $0x3c] sm:$0xf]
  %v35 = vld [vmem:[%s0 + $0x40] sm:$0xf]
  %v36 = vld [vmem:[%s0 + $0x48] sm:$0xf]
  %v37 = vld [vmem:[%s0 + $0x4c] sm:$0xf]
  %v38 = vld [vmem:[%s0 + $0x54] sm:$0xf]
  %v39 = vld [vmem:[%s0 + $0x58] sm:$0xf]
  %v40 = vld [vmem:[%s0 + $0x60] sm:$0xf]
  %v41 = vld [vmem:[%s0 + $0x64] sm:$0xf]
  %v42 = vld [vmem:[%s0 + $0x6c] sm:$0xf]
  %v43 = vld [vmem:[%s0 + $0x70] sm:$0xf]
  %v44 = vld [vmem:[%s0 + $0x78] sm:$0xf]
  %v45 = vld [vmem:[%s0 + $0x7c] sm:$0xf]
  %v46 = vld [vmem:[%s0 + $0x84] sm:$0xf]
  %v47 = vld [vmem:[%s0 + $0x88] sm:$0xf]
  %v48 = vld [vmem:[%s0 + $0x90] sm:$0xf]
  %v49 = vld [vmem:[%s0 + $0x94] sm:$0xf]
  %v50 = vld [vmem:[%s0 + $0x9c] sm:$0xf]
  %v51 = vld [vmem:[%s0 + $0xa0] sm:$0xf]
  %v52 = vld [vmem:[%s0 + $0xa8] sm:$0xf]
  %v53 = vld [vmem:[%s0 + $0xac] sm:$0xf]
  %v54 = vld [vmem:[%s0 + $0xb4] sm:$0xf]
  %v55 = vld [vmem:[%s0 + $0xb8] sm:$0xf]
  %v56 = vld [vmem:[%s0 + $0xd8] sm:$0xf]
  %v57 = vld [vmem:[%s0 + $0xdc] sm:$0xf]
  %v58 = vld [vmem:[%s0 + $0xe4] sm:$0xf]
  %v59 = vld [vmem:[%s0 + $0xe8] sm:$0xf]
  %v60 = vld [vmem:[%s0 + $0xf0] sm:$0xf]
  %v61 = vld [vmem:[%s0 + $0xf4] sm:$0xf]
  %v62 = vld [vmem:[%s0 + $0xfc] sm:$0xf]
  %v63 = vld [vmem:[%s0 + $0x100] sm:$0xf]
  %v64 = vld [vmem:[%s0 + $0x108] sm:$0xf]
  %v65 = vld [vmem:[%s0 + $0x10c] sm:$0xf]
  %v66 = vld [vmem:[%s0 + $0x114] sm:$0xf]
  %v67 = vld [vmem:[%s0 + $0x118] sm:$0xf]
  %v68 = vld [vmem:[%s0 + $0x120] sm:$0xf]
  %v69 = vld [vmem:[%s0 + $0x124] sm:$0xf]
  %v70 = vld [vmem:[%s0 + $0x12c] sm:$0xf]
  %v71 = vld [vmem:[%s0 + $0x130] sm:$0xf]
  %v72 = vld [vmem:[%s0 + $0x138] sm:$0xf]
  %v73 = vld [vmem:[%s0 + $0x13c] sm:$0xf]
  %v74 = vld [vmem:[%s0 + $0x144] sm:$0xf]
  %v75 = vld [vmem:[%s0 + $0x148] sm:$0xf]
  %v76 = vld [vmem:[%s0 + $0x150] sm:$0xf]
  %v77 = vld [vmem:[%s0 + $0x154] sm:$0xf]
  %v78 = vld [vmem:[%s0 + $0x15c] sm:$0xf]
  %v79 = vld [vmem:[%s0 + $0x160] sm:$0xf]
  %v80 = vld [vmem:[%s0 + $0x168] sm:$0xf]
  %v81 = vld [vmem:[%s0 + $0x16c] sm:$0xf]
  %v82 = vld [vmem:[%s0 + $0x174] sm:$0xf]
  %v83 = vld [vmem:[%s0 + $0x178] sm:$0xf]
  %v84 = vld [vmem:[%s0 + $0x180] sm:$0xf]
  %v85 = vld [vmem:[%s0 + $0x184] sm:$0xf]
  %v86 = vld [vmem:[%s0 + $0x18c] sm:$0xf]
  %v87 = vld [vmem:[%s0 + $0x190] sm:$0xf]
  %v88 = vld [vmem:[%s0 + $0x8] sm:$0x1]
  %v89 = vld [vmem:[%s0 + $0x14] sm:$0x1]
  %v90 = vld [vmem:[%s0 + $0x20] sm:$0x1]
  %v91 = vld [vmem:[%s0 + $0x2c] sm:$0x1]
  %v92 = vld [vmem:[%s0 + $0x38] sm:$0x1]
  %v93 = vld [vmem:[%s0 + $0x44] sm:$0x1]
  %v94 = vld [vmem:[%s0 + $0x50] sm:$0x1]
  %v95 = vld [vmem:[%s0 + $0x5c] sm:$0x1]
  %v96 = vld [vmem:[%s0 + $0x68] sm:$0x1]
  %v97 = vld [vmem:[%s0 + $0x74] sm:$0x1]
  %v98 = vld [vmem:[%s0 + $0x80] sm:$0x1]
  %v99 = vld [vmem:[%s0 + $0x8c] sm:$0x1]
  %v100 = vld [vmem:[%s0 + $0x98] sm:$0x1]
  %v101 = vld [vmem:[%s0 + $0xa4] sm:$0x1]
  %v102 = vld [vmem:[%s0 + $0xb0] sm:$0x1]
  %v103 = vld [vmem:[%s0 + $0xbc] sm:$0x1]
  %v104 = vld [vmem:[%s0 + $0xe0] sm:$0x1]
  %v105 = vld [vmem:[%s0 + $0xec] sm:$0x1]
  %v106 = vld [vmem:[%s0 + $0xf8] sm:$0x1]
  %v107 = vld [vmem:[%s0 + $0x104] sm:$0x1]
  %v108 = vld [vmem:[%s0 + $0x110] sm:$0x1]
  %v109 = vld [vmem:[%s0 + $0x11c] sm:$0x1]
  %v110 = vld [vmem:[%s0 + $0x128] sm:$0x1]
  %v111 = vld [vmem:[%s0 + $0x134] sm:$0x1]
  %v112 = vld [vmem:[%s0 + $0x140] sm:$0x1]
  %v113 = vld [vmem:[%s0 + $0x14c] sm:$0x1]
  %v114 = vld [vmem:[%s0 + $0x158] sm:$0x1]
  %v115 = vld [vmem:[%s0 + $0x164] sm:$0x1]
  %v116 = vld [vmem:[%s0 + $0x170] sm:$0x1]
  %v117 = vld [vmem:[%s0 + $0x17c] sm:$0x1]
  %v118 = vld [vmem:[%s0 + $0x188] sm:$0x1]
  %v119 = vld [vmem:[%s0 + $0x194] sm:$0x1]
  %vm120 = vsmask.f32 3328
  %vm121 = vsmask.f32 7440
  %vm122 = vmor %vm120, %vm121
  %v124 = vshrl.u32 %v24, 16
  %v126 = vrot.slane %v124, 4
  %v127 = vshll.u32 %v24, 16
  %v129 = vrot.slane %v127, 5
  %v130 = vor.u32 %v126, %v129
  %v131 = vrot.slane %v130, 4
  %v133 = vshll.u32 %v25, 16
  %v135 = vrot.slane %v133, 5
  %v136 = vsel %vm122, %v131, %v135
  %v137 = vshrl.u32 %v25, 16
  %v139 = vrot.slane %v137, 4
  %v140 = vor.u32 %v139, %v135
  %v141 = vrot.slane %v140, 4
  %v143 = vshll.u32 %v88, 16
  %v145 = vrot.slane %v143, 5
  %v146 = vsel %vm122, %v141, %v145
  %v148 = vshrl.u32 %v26, 16
  %v150 = vrot.slane %v148, 4
  %v151 = vshll.u32 %v26, 16
  %v153 = vrot.slane %v151, 5
  %v154 = vor.u32 %v150, %v153
  %v155 = vrot.slane %v154, 4
  %v157 = vshll.u32 %v27, 16
  %v159 = vrot.slane %v157, 5
  %v160 = vsel %vm122, %v155, %v159
  %v161 = vshrl.u32 %v27, 16
  %v163 = vrot.slane %v161, 4
  %v164 = vor.u32 %v163, %v159
  %v165 = vrot.slane %v164, 4
  %v167 = vshll.u32 %v89, 16
  %v169 = vrot.slane %v167, 5
  %v170 = vsel %vm122, %v165, %v169
  %v172 = vshrl.u32 %v28, 16
  %v174 = vrot.slane %v172, 4
  %v175 = vshll.u32 %v28, 16
  %v177 = vrot.slane %v175, 5
  %v178 = vor.u32 %v174, %v177
  %v179 = vrot.slane %v178, 4
  %v181 = vshll.u32 %v29, 16
  %v183 = vrot.slane %v181, 5
  %v184 = vsel %vm122, %v179, %v183
  %v185 = vshrl.u32 %v29, 16
  %v187 = vrot.slane %v185, 4
  %v188 = vor.u32 %v187, %v183
  %v189 = vrot.slane %v188, 4
  %v191 = vshll.u32 %v90, 16
  %v193 = vrot.slane %v191, 5
  %v194 = vsel %vm122, %v189, %v193
  %v196 = vshrl.u32 %v30, 16
  %v198 = vrot.slane %v196, 4
  %v199 = vshll.u32 %v30, 16
  %v201 = vrot.slane %v199, 5
  %v202 = vor.u32 %v198, %v201
  %v203 = vrot.slane %v202, 4
  %v205 = vshll.u32 %v31, 16
  %v207 = vrot.slane %v205, 5
  %v208 = vsel %vm122, %v203, %v207
  %v209 = vshrl.u32 %v31, 16
  %v211 = vrot.slane %v209, 4
  %v212 = vor.u32 %v211, %v207
  %v213 = vrot.slane %v212, 4
  %v215 = vshll.u32 %v91, 16
  %v217 = vrot.slane %v215, 5
  %v218 = vsel %vm122, %v213, %v217
  %v220 = vshrl.u32 %v32, 16
  %v222 = vrot.slane %v220, 4
  %v223 = vshll.u32 %v32, 16
  %v225 = vrot.slane %v223, 5
  %v226 = vor.u32 %v222, %v225
  %v227 = vrot.slane %v226, 4
  %v229 = vshll.u32 %v33, 16
  %v231 = vrot.slane %v229, 5
  %v232 = vsel %vm122, %v227, %v231
  %v233 = vshrl.u32 %v33, 16
  %v235 = vrot.slane %v233, 4
  %v236 = vor.u32 %v235, %v231
  %v237 = vrot.slane %v236, 4
  %v239 = vshll.u32 %v92, 16
  %v241 = vrot.slane %v239, 5
  %v242 = vsel %vm122, %v237, %v241
  %v244 = vshrl.u32 %v34, 16
  %v246 = vrot.slane %v244, 4
  %v247 = vshll.u32 %v34, 16
  %v249 = vrot.slane %v247, 5
  %v250 = vor.u32 %v246, %v249
  %v251 = vrot.slane %v250, 4
  %v253 = vshll.u32 %v35, 16
  %v255 = vrot.slane %v253, 5
  %v256 = vsel %vm122, %v251, %v255
  %v257 = vshrl.u32 %v35, 16
  %v259 = vrot.slane %v257, 4
  %v260 = vor.u32 %v259, %v255
  %v261 = vrot.slane %v260, 4
  %v263 = vshll.u32 %v93, 16
  %v265 = vrot.slane %v263, 5
  %v266 = vsel %vm122, %v261, %v265
  %v268 = vshrl.u32 %v36, 16
  %v270 = vrot.slane %v268, 4
  %v271 = vshll.u32 %v36, 16
  %v273 = vrot.slane %v271, 5
  %v274 = vor.u32 %v270, %v273
  %v275 = vrot.slane %v274, 4
  %v277 = vshll.u32 %v37, 16
  %v279 = vrot.slane %v277, 5
  %v280 = vsel %vm122, %v275, %v279
  %v281 = vshrl.u32 %v37, 16
  %v283 = vrot.slane %v281, 4
  %v284 = vor.u32 %v283, %v279
  %v285 = vrot.slane %v284, 4
  %v287 = vshll.u32 %v94, 16
  %v289 = vrot.slane %v287, 5
  %v290 = vsel %vm122, %v285, %v289
  %v292 = vshrl.u32 %v38, 16
  %v294 = vrot.slane %v292, 4
  %v295 = vshll.u32 %v38, 16
  %v297 = vrot.slane %v295, 5
  %v298 = vor.u32 %v294, %v297
  %v299 = vrot.slane %v298, 4
  %v301 = vshll.u32 %v39, 16
  %v303 = vrot.slane %v301, 5
  %v304 = vsel %vm122, %v299, %v303
  %v305 = vshrl.u32 %v39, 16
  %v307 = vrot.slane %v305, 4
  %v308 = vor.u32 %v307, %v303
  %v309 = vrot.slane %v308, 4
  %v311 = vshll.u32 %v95, 16
  %v313 = vrot.slane %v311, 5
  %v314 = vsel %vm122, %v309, %v313
  %v316 = vshrl.u32 %v40, 16
  %v318 = vrot.slane %v316, 4
  %v319 = vshll.u32 %v40, 16
  %v321 = vrot.slane %v319, 5
  %v322 = vor.u32 %v318, %v321
  %v323 = vrot.slane %v322, 4
  %v325 = vshll.u32 %v41, 16
  %v327 = vrot.slane %v325, 5
  %v328 = vsel %vm122, %v323, %v327
  %v329 = vshrl.u32 %v41, 16
  %v331 = vrot.slane %v329, 4
  %v332 = vor.u32 %v331, %v327
  %v333 = vrot.slane %v332, 4
  %v335 = vshll.u32 %v96, 16
  %v337 = vrot.slane %v335, 5
  %v338 = vsel %vm122, %v333, %v337
  %v340 = vshrl.u32 %v42, 16
  %v342 = vrot.slane %v340, 4
  %v343 = vshll.u32 %v42, 16
  %v345 = vrot.slane %v343, 5
  %v346 = vor.u32 %v342, %v345
  %v347 = vrot.slane %v346, 4
  %v349 = vshll.u32 %v43, 16
  %v351 = vrot.slane %v349, 5
  %v352 = vsel %vm122, %v347, %v351
  %v353 = vshrl.u32 %v43, 16
  %v355 = vrot.slane %v353, 4
  %v356 = vor.u32 %v355, %v351
  %v357 = vrot.slane %v356, 4
  %v359 = vshll.u32 %v97, 16
  %v361 = vrot.slane %v359, 5
  %v362 = vsel %vm122, %v357, %v361
  %v364 = vshrl.u32 %v44, 16
  %v366 = vrot.slane %v364, 4
  %v367 = vshll.u32 %v44, 16
  %v369 = vrot.slane %v367, 5
  %v370 = vor.u32 %v366, %v369
  %v371 = vrot.slane %v370, 4
  %v373 = vshll.u32 %v45, 16
  %v375 = vrot.slane %v373, 5
  %v376 = vsel %vm122, %v371, %v375
  %v377 = vshrl.u32 %v45, 16
  %v379 = vrot.slane %v377, 4
  %v380 = vor.u32 %v379, %v375
  %v381 = vrot.slane %v380, 4
  %v383 = vshll.u32 %v98, 16
  %v385 = vrot.slane %v383, 5
  %v386 = vsel %vm122, %v381, %v385
  %v388 = vshrl.u32 %v46, 16
  %v390 = vrot.slane %v388, 4
  %v391 = vshll.u32 %v46, 16
  %v393 = vrot.slane %v391, 5
  %v394 = vor.u32 %v390, %v393
  %v395 = vrot.slane %v394, 4
  %v397 = vshll.u32 %v47, 16
  %v399 = vrot.slane %v397, 5
  %v400 = vsel %vm122, %v395, %v399
  %v401 = vshrl.u32 %v47, 16
  %v403 = vrot.slane %v401, 4
  %v404 = vor.u32 %v403, %v399
  %v405 = vrot.slane %v404, 4
  %v407 = vshll.u32 %v99, 16
  %v409 = vrot.slane %v407, 5
  %v410 = vsel %vm122, %v405, %v409
  %v412 = vshrl.u32 %v48, 16
  %v414 = vrot.slane %v412, 4
  %v415 = vshll.u32 %v48, 16
  %v417 = vrot.slane %v415, 5
  %v418 = vor.u32 %v414, %v417
  %v419 = vrot.slane %v418, 4
  %v421 = vshll.u32 %v49, 16
  %v423 = vrot.slane %v421, 5
  %v424 = vsel %vm122, %v419, %v423
  %v425 = vshrl.u32 %v49, 16
  %v427 = vrot.slane %v425, 4
  %v428 = vor.u32 %v427, %v423
  %v429 = vrot.slane %v428, 4
  %v431 = vshll.u32 %v100, 16
  %v433 = vrot.slane %v431, 5
  %v434 = vsel %vm122, %v429, %v433
  %v436 = vshrl.u32 %v50, 16
  %v438 = vrot.slane %v436, 4
  %v439 = vshll.u32 %v50, 16
  %v441 = vrot.slane %v439, 5
  %v442 = vor.u32 %v438, %v441
  %v443 = vrot.slane %v442, 4
  %v445 = vshll.u32 %v51, 16
  %v447 = vrot.slane %v445, 5
  %v448 = vsel %vm122, %v443, %v447
  %v449 = vshrl.u32 %v51, 16
  %v451 = vrot.slane %v449, 4
  %v452 = vor.u32 %v451, %v447
  %v453 = vrot.slane %v452, 4
  %v455 = vshll.u32 %v101, 16
  %v457 = vrot.slane %v455, 5
  %v458 = vsel %vm122, %v453, %v457
  %v460 = vshrl.u32 %v52, 16
  %v462 = vrot.slane %v460, 4
  %v463 = vshll.u32 %v52, 16
  %v465 = vrot.slane %v463, 5
  %v466 = vor.u32 %v462, %v465
  %v467 = vrot.slane %v466, 4
  %v469 = vshll.u32 %v53, 16
  %v471 = vrot.slane %v469, 5
  %v472 = vsel %vm122, %v467, %v471
  %v473 = vshrl.u32 %v53, 16
  %v475 = vrot.slane %v473, 4
  %v476 = vor.u32 %v475, %v471
  %v477 = vrot.slane %v476, 4
  %v479 = vshll.u32 %v102, 16
  %v481 = vrot.slane %v479, 5
  %v482 = vsel %vm122, %v477, %v481
  %v484 = vshrl.u32 %v54, 16
  %v486 = vrot.slane %v484, 4
  %v487 = vshll.u32 %v54, 16
  %v489 = vrot.slane %v487, 5
  %v490 = vor.u32 %v486, %v489
  %v491 = vrot.slane %v490, 4
  %v493 = vshll.u32 %v55, 16
  %v495 = vrot.slane %v493, 5
  %v496 = vsel %vm122, %v491, %v495
  %v497 = vshrl.u32 %v55, 16
  %v499 = vrot.slane %v497, 4
  %v500 = vor.u32 %v499, %v495
  %v501 = vrot.slane %v500, 4
  %v503 = vshll.u32 %v103, 16
  %v505 = vrot.slane %v503, 5
  %v506 = vsel %vm122, %v501, %v505
  %v508 = vshrl.u32 %v56, 16
  %v510 = vrot.slane %v508, 4
  %v511 = vshll.u32 %v56, 16
  %v513 = vrot.slane %v511, 5
  %v514 = vor.u32 %v510, %v513
  %v515 = vrot.slane %v514, 4
  %v517 = vshll.u32 %v57, 16
  %v519 = vrot.slane %v517, 5
  %v520 = vsel %vm122, %v515, %v519
  %v521 = vshrl.u32 %v57, 16
  %v523 = vrot.slane %v521, 4
  %v524 = vor.u32 %v523, %v519
  %v525 = vrot.slane %v524, 4
  %v527 = vshll.u32 %v104, 16
  %v529 = vrot.slane %v527, 5
  %v530 = vsel %vm122, %v525, %v529
  %v532 = vshrl.u32 %v58, 16
  %v534 = vrot.slane %v532, 4
  %v535 = vshll.u32 %v58, 16
  %v537 = vrot.slane %v535, 5
  %v538 = vor.u32 %v534, %v537
  %v539 = vrot.slane %v538, 4
  %v541 = vshll.u32 %v59, 16
  %v543 = vrot.slane %v541, 5
  %v544 = vsel %vm122, %v539, %v543
  %v545 = vshrl.u32 %v59, 16
  %v547 = vrot.slane %v545, 4
  %v548 = vor.u32 %v547, %v543
  %v549 = vrot.slane %v548, 4
  %v551 = vshll.u32 %v105, 16
  %v553 = vrot.slane %v551, 5
  %v554 = vsel %vm122, %v549, %v553
  %v556 = vshrl.u32 %v60, 16
  %v558 = vrot.slane %v556, 4
  %v559 = vshll.u32 %v60, 16
  %v561 = vrot.slane %v559, 5
  %v562 = vor.u32 %v558, %v561
  %v563 = vrot.slane %v562, 4
  %v565 = vshll.u32 %v61, 16
  %v567 = vrot.slane %v565, 5
  %v568 = vsel %vm122, %v563, %v567
  %v569 = vshrl.u32 %v61, 16
  %v571 = vrot.slane %v569, 4
  %v572 = vor.u32 %v571, %v567
  %v573 = vrot.slane %v572, 4
  %v575 = vshll.u32 %v106, 16
  %v577 = vrot.slane %v575, 5
  %v578 = vsel %vm122, %v573, %v577
  %v580 = vshrl.u32 %v62, 16
  %v582 = vrot.slane %v580, 4
  %v583 = vshll.u32 %v62, 16
  %v585 = vrot.slane %v583, 5
  %v586 = vor.u32 %v582, %v585
  %v587 = vrot.slane %v586, 4
  %v589 = vshll.u32 %v63, 16
  %v591 = vrot.slane %v589, 5
  %v592 = vsel %vm122, %v587, %v591
  %v593 = vshrl.u32 %v63, 16
  %v595 = vrot.slane %v593, 4
  %v596 = vor.u32 %v595, %v591
  %v597 = vrot.slane %v596, 4
  %v599 = vshll.u32 %v107, 16
  %v601 = vrot.slane %v599, 5
  %v602 = vsel %vm122, %v597, %v601
  %v604 = vshrl.u32 %v64, 16
  %v606 = vrot.slane %v604, 4
  %v607 = vshll.u32 %v64, 16
  %v609 = vrot.slane %v607, 5
  %v610 = vor.u32 %v606, %v609
  %v611 = vrot.slane %v610, 4
  %v613 = vshll.u32 %v65, 16
  %v615 = vrot.slane %v613, 5
  %v616 = vsel %vm122, %v611, %v615
  %v617 = vshrl.u32 %v65, 16
  %v619 = vrot.slane %v617, 4
  %v620 = vor.u32 %v619, %v615
  %v621 = vrot.slane %v620, 4
  %v623 = vshll.u32 %v108, 16
  %v625 = vrot.slane %v623, 5
  %v626 = vsel %vm122, %v621, %v625
  %v628 = vshrl.u32 %v66, 16
  %v630 = vrot.slane %v628, 4
  %v631 = vshll.u32 %v66, 16
  %v633 = vrot.slane %v631, 5
  %v634 = vor.u32 %v630, %v633
  %v635 = vrot.slane %v634, 4
  %v637 = vshll.u32 %v67, 16
  %v639 = vrot.slane %v637, 5
  %v640 = vsel %vm122, %v635, %v639
  %v641 = vshrl.u32 %v67, 16
  %v643 = vrot.slane %v641, 4
  %v644 = vor.u32 %v643, %v639
  %v645 = vrot.slane %v644, 4
  %v647 = vshll.u32 %v109, 16
  %v649 = vrot.slane %v647, 5
  %v650 = vsel %vm122, %v645, %v649
  %v652 = vshrl.u32 %v68, 16
  %v654 = vrot.slane %v652, 4
  %v655 = vshll.u32 %v68, 16
  %v657 = vrot.slane %v655, 5
  %v658 = vor.u32 %v654, %v657
  %v659 = vrot.slane %v658, 4
  %v661 = vshll.u32 %v69, 16
  %v663 = vrot.slane %v661, 5
  %v664 = vsel %vm122, %v659, %v663
  %v665 = vshrl.u32 %v69, 16
  %v667 = vrot.slane %v665, 4
  %v668 = vor.u32 %v667, %v663
  %v669 = vrot.slane %v668, 4
  %v671 = vshll.u32 %v110, 16
  %v673 = vrot.slane %v671, 5
  %v674 = vsel %vm122, %v669, %v673
  %v676 = vshrl.u32 %v70, 16
  %v678 = vrot.slane %v676, 4
  %v679 = vshll.u32 %v70, 16
  %v681 = vrot.slane %v679, 5
  %v682 = vor.u32 %v678, %v681
  %v683 = vrot.slane %v682, 4
  %v685 = vshll.u32 %v71, 16
  %v687 = vrot.slane %v685, 5
  %v688 = vsel %vm122, %v683, %v687
  %v689 = vshrl.u32 %v71, 16
  %v691 = vrot.slane %v689, 4
  %v692 = vor.u32 %v691, %v687
  %v693 = vrot.slane %v692, 4
  %v695 = vshll.u32 %v111, 16
  %v697 = vrot.slane %v695, 5
  %v698 = vsel %vm122, %v693, %v697
  %v700 = vshrl.u32 %v72, 16
  %v702 = vrot.slane %v700, 4
  %v703 = vshll.u32 %v72, 16
  %v705 = vrot.slane %v703, 5
  %v706 = vor.u32 %v702, %v705
  %v707 = vrot.slane %v706, 4
  %v709 = vshll.u32 %v73, 16
  %v711 = vrot.slane %v709, 5
  %v712 = vsel %vm122, %v707, %v711
  %v713 = vshrl.u32 %v73, 16
  %v715 = vrot.slane %v713, 4
  %v716 = vor.u32 %v715, %v711
  %v717 = vrot.slane %v716, 4
  %v719 = vshll.u32 %v112, 16
  %v721 = vrot.slane %v719, 5
  %v722 = vsel %vm122, %v717, %v721
  %v724 = vshrl.u32 %v74, 16
  %v726 = vrot.slane %v724, 4
  %v727 = vshll.u32 %v74, 16
  %v729 = vrot.slane %v727, 5
  %v730 = vor.u32 %v726, %v729
  %v731 = vrot.slane %v730, 4
  %v733 = vshll.u32 %v75, 16
  %v735 = vrot.slane %v733, 5
  %v736 = vsel %vm122, %v731, %v735
  %v737 = vshrl.u32 %v75, 16
  %v739 = vrot.slane %v737, 4
  %v740 = vor.u32 %v739, %v735
  %v741 = vrot.slane %v740, 4
  %v743 = vshll.u32 %v113, 16
  %v745 = vrot.slane %v743, 5
  %v746 = vsel %vm122, %v741, %v745
  %v748 = vshrl.u32 %v76, 16
  %v750 = vrot.slane %v748, 4
  %v751 = vshll.u32 %v76, 16
  %v753 = vrot.slane %v751, 5
  %v754 = vor.u32 %v750, %v753
  %v755 = vrot.slane %v754, 4
  %v757 = vshll.u32 %v77, 16
  %v759 = vrot.slane %v757, 5
  %v760 = vsel %vm122, %v755, %v759
  %v761 = vshrl.u32 %v77, 16
  %v763 = vrot.slane %v761, 4
  %v764 = vor.u32 %v763, %v759
  %v765 = vrot.slane %v764, 4
  %v767 = vshll.u32 %v114, 16
  %v769 = vrot.slane %v767, 5
  %v770 = vsel %vm122, %v765, %v769
  %v772 = vshrl.u32 %v78, 16
  %v774 = vrot.slane %v772, 4
  %v775 = vshll.u32 %v78, 16
  %v777 = vrot.slane %v775, 5
  %v778 = vor.u32 %v774, %v777
  %v779 = vrot.slane %v778, 4
  %v781 = vshll.u32 %v79, 16
  %v783 = vrot.slane %v781, 5
  %v784 = vsel %vm122, %v779, %v783
  %v785 = vshrl.u32 %v79, 16
  %v787 = vrot.slane %v785, 4
  %v788 = vor.u32 %v787, %v783
  %v789 = vrot.slane %v788, 4
  %v791 = vshll.u32 %v115, 16
  %v793 = vrot.slane %v791, 5
  %v794 = vsel %vm122, %v789, %v793
  %v796 = vshrl.u32 %v80, 16
  %v798 = vrot.slane %v796, 4
  %v799 = vshll.u32 %v80, 16
  %v801 = vrot.slane %v799, 5
  %v802 = vor.u32 %v798, %v801
  %v803 = vrot.slane %v802, 4
  %v805 = vshll.u32 %v81, 16
  %v807 = vrot.slane %v805, 5
  %v808 = vsel %vm122, %v803, %v807
  %v809 = vshrl.u32 %v81, 16
  %v811 = vrot.slane %v809, 4
  %v812 = vor.u32 %v811, %v807
  %v813 = vrot.slane %v812, 4
  %v815 = vshll.u32 %v116, 16
  %v817 = vrot.slane %v815, 5
  %v818 = vsel %vm122, %v813, %v817
  %v820 = vshrl.u32 %v82, 16
  %v822 = vrot.slane %v820, 4
  %v823 = vshll.u32 %v82, 16
  %v825 = vrot.slane %v823, 5
  %v826 = vor.u32 %v822, %v825
  %v827 = vrot.slane %v826, 4
  %v829 = vshll.u32 %v83, 16
  %v831 = vrot.slane %v829, 5
  %v832 = vsel %vm122, %v827, %v831
  %v833 = vshrl.u32 %v83, 16
  %v835 = vrot.slane %v833, 4
  %v836 = vor.u32 %v835, %v831
  %v837 = vrot.slane %v836, 4
  %v839 = vshll.u32 %v117, 16
  %v841 = vrot.slane %v839, 5
  %v842 = vsel %vm122, %v837, %v841
  %v844 = vshrl.u32 %v84, 16
  %v846 = vrot.slane %v844, 4
  %v847 = vshll.u32 %v84, 16
  %v849 = vrot.slane %v847, 5
  %v850 = vor.u32 %v846, %v849
  %v851 = vrot.slane %v850, 4
  %v853 = vshll.u32 %v85, 16
  %v855 = vrot.slane %v853, 5
  %v856 = vsel %vm122, %v851, %v855
  %v857 = vshrl.u32 %v85, 16
  %v859 = vrot.slane %v857, 4
  %v860 = vor.u32 %v859, %v855
  %v861 = vrot.slane %v860, 4
  %v863 = vshll.u32 %v118, 16
  %v865 = vrot.slane %v863, 5
  %v866 = vsel %vm122, %v861, %v865
  %v868 = vshrl.u32 %v86, 16
  %v870 = vrot.slane %v868, 4
  %v871 = vshll.u32 %v86, 16
  %v873 = vrot.slane %v871, 5
  %v874 = vor.u32 %v870, %v873
  %v875 = vrot.slane %v874, 4
  %v877 = vshll.u32 %v87, 16
  %v879 = vrot.slane %v877, 5
  %v880 = vsel %vm122, %v875, %v879
  %v881 = vshrl.u32 %v87, 16
  %v883 = vrot.slane %v881, 4
  %v884 = vor.u32 %v883, %v879
  %v885 = vrot.slane %v884, 4
  %v887 = vshll.u32 %v119, 16
  %v889 = vrot.slane %v887, 5
  %v890 = vsel %vm122, %v885, %v889
  %v891 = vld [vmem:[%s0] sm:$0xe]
  %v892 = vld [vmem:[%s0 + $0xc] sm:$0xe]
  %v893 = vld [vmem:[%s0 + $0x18] sm:$0xe]
  %v894 = vld [vmem:[%s0 + $0x24] sm:$0xe]
  %v895 = vld [vmem:[%s0 + $0x30] sm:$0xe]
  %v896 = vld [vmem:[%s0 + $0x3c] sm:$0xe]
  %v897 = vld [vmem:[%s0 + $0x48] sm:$0xe]
  %v898 = vld [vmem:[%s0 + $0x54] sm:$0xe]
  %v899 = vld [vmem:[%s0 + $0x60] sm:$0xe]
  %v900 = vld [vmem:[%s0 + $0x6c] sm:$0xe]
  %v901 = vld [vmem:[%s0 + $0x78] sm:$0xe]
  %v902 = vld [vmem:[%s0 + $0x84] sm:$0xe]
  %v903 = vld [vmem:[%s0 + $0x90] sm:$0xe]
  %v904 = vld [vmem:[%s0 + $0x9c] sm:$0xe]
  %v905 = vld [vmem:[%s0 + $0xa8] sm:$0xe]
  %v906 = vld [vmem:[%s0 + $0xb4] sm:$0xe]
  %v907 = vld [vmem:[%s0 + $0xd8] sm:$0xe]
  %v908 = vld [vmem:[%s0 + $0xe4] sm:$0xe]
  %v909 = vld [vmem:[%s0 + $0xf0] sm:$0xe]
  %v910 = vld [vmem:[%s0 + $0xfc] sm:$0xe]
  %v911 = vld [vmem:[%s0 + $0x108] sm:$0xe]
  %v912 = vld [vmem:[%s0 + $0x114] sm:$0xe]
  %v913 = vld [vmem:[%s0 + $0x120] sm:$0xe]
  %v914 = vld [vmem:[%s0 + $0x12c] sm:$0xe]
  %v915 = vld [vmem:[%s0 + $0x138] sm:$0xe]
  %v916 = vld [vmem:[%s0 + $0x144] sm:$0xe]
  %v917 = vld [vmem:[%s0 + $0x150] sm:$0xe]
  %v918 = vld [vmem:[%s0 + $0x15c] sm:$0xe]
  %v919 = vld [vmem:[%s0 + $0x168] sm:$0xe]
  %v920 = vld [vmem:[%s0 + $0x174] sm:$0xe]
  %v921 = vld [vmem:[%s0 + $0x180] sm:$0xe]
  %v922 = vld [vmem:[%s0 + $0x18c] sm:$0xe]
  %vm1019 = vcmask 1042432
  %vm1020 = vcmask 1046532
  %vm1021 = vmor %vm1019, %vm1020
  %v1022 = vrot.slane %v891, 5
  %v1023 = vrot.slane %v1022, 4
  %v1024 = vrot.slane %v25, 5
  %v1025 = vsel %vm1021, %v1023, %v1024
  %v1026 = vrot.slane %v1024, 4
  %v1027 = vrot.slane %v88, 5
  %v1028 = vsel %vm1021, %v1026, %v1027
  %v1029 = vrot.slane %v892, 5
  %v1030 = vrot.slane %v1029, 4
  %v1031 = vrot.slane %v27, 5
  %v1032 = vsel %vm1021, %v1030, %v1031
  %v1033 = vrot.slane %v1031, 4
  %v1034 = vrot.slane %v89, 5
  %v1035 = vsel %vm1021, %v1033, %v1034
  %v1036 = vrot.slane %v893, 5
  %v1037 = vrot.slane %v1036, 4
  %v1038 = vrot.slane %v29, 5
  %v1039 = vsel %vm1021, %v1037, %v1038
  %v1040 = vrot.slane %v1038, 4
  %v1041 = vrot.slane %v90, 5
  %v1042 = vsel %vm1021, %v1040, %v1041
  %v1043 = vrot.slane %v894, 5
  %v1044 = vrot.slane %v1043, 4
  %v1045 = vrot.slane %v31, 5
  %v1046 = vsel %vm1021, %v1044, %v1045
  %v1047 = vrot.slane %v1045, 4
  %v1048 = vrot.slane %v91, 5
  %v1049 = vsel %vm1021, %v1047, %v1048
  %v1050 = vrot.slane %v895, 5
  %v1051 = vrot.slane %v1050, 4
  %v1052 = vrot.slane %v33, 5
  %v1053 = vsel %vm1021, %v1051, %v1052
  %v1054 = vrot.slane %v1052, 4
  %v1055 = vrot.slane %v92, 5
  %v1056 = vsel %vm1021, %v1054, %v1055
  %v1057 = vrot.slane %v896, 5
  %v1058 = vrot.slane %v1057, 4
  %v1059 = vrot.slane %v35, 5
  %v1060 = vsel %vm1021, %v1058, %v1059
  %v1061 = vrot.slane %v1059, 4
  %v1062 = vrot.slane %v93, 5
  %v1063 = vsel %vm1021, %v1061, %v1062
  %v1064 = vrot.slane %v897, 5
  %v1065 = vrot.slane %v1064, 4
  %v1066 = vrot.slane %v37, 5
  %v1067 = vsel %vm1021, %v1065, %v1066
  %v1068 = vrot.slane %v1066, 4
  %v1069 = vrot.slane %v94, 5
  %v1070 = vsel %vm1021, %v1068, %v1069
  %v1071 = vrot.slane %v898, 5
  %v1072 = vrot.slane %v1071, 4
  %v1073 = vrot.slane %v39, 5
  %v1074 = vsel %vm1021, %v1072, %v1073
  %v1075 = vrot.slane %v1073, 4
  %v1076 = vrot.slane %v95, 5
  %v1077 = vsel %vm1021, %v1075, %v1076
  %v1078 = vrot.slane %v899, 5
  %v1079 = vrot.slane %v1078, 4
  %v1080 = vrot.slane %v41, 5
  %v1081 = vsel %vm1021, %v1079, %v1080
  %v1082 = vrot.slane %v1080, 4
  %v1083 = vrot.slane %v96, 5
  %v1084 = vsel %vm1021, %v1082, %v1083
  %v1085 = vrot.slane %v900, 5
  %v1086 = vrot.slane %v1085, 4
  %v1087 = vrot.slane %v43, 5
  %v1088 = vsel %vm1021, %v1086, %v1087
  %v1089 = vrot.slane %v1087, 4
  %v1090 = vrot.slane %v97, 5
  %v1091 = vsel %vm1021, %v1089, %v1090
  %v1092 = vrot.slane %v901, 5
  %v1093 = vrot.slane %v1092, 4
  %v1094 = vrot.slane %v45, 5
  %v1095 = vsel %vm1021, %v1093, %v1094
  %v1096 = vrot.slane %v1094, 4
  %v1097 = vrot.slane %v98, 5
  %v1098 = vsel %vm1021, %v1096, %v1097
  %v1099 = vrot.slane %v902, 5
  %v1100 = vrot.slane %v1099, 4
  %v1101 = vrot.slane %v47, 5
  %v1102 = vsel %vm1021, %v1100, %v1101
  %v1103 = vrot.slane %v1101, 4
  %v1104 = vrot.slane %v99, 5
  %v1105 = vsel %vm1021, %v1103, %v1104
  %v1106 = vrot.slane %v903, 5
  %v1107 = vrot.slane %v1106, 4
  %v1108 = vrot.slane %v49, 5
  %v1109 = vsel %vm1021, %v1107, %v1108
  %v1110 = vrot.slane %v1108, 4
  %v1111 = vrot.slane %v100, 5
  %v1112 = vsel %vm1021, %v1110, %v1111
  %v1113 = vrot.slane %v904, 5
  %v1114 = vrot.slane %v1113, 4
  %v1115 = vrot.slane %v51, 5
  %v1116 = vsel %vm1021, %v1114, %v1115
  %v1117 = vrot.slane %v1115, 4
  %v1118 = vrot.slane %v101, 5
  %v1119 = vsel %vm1021, %v1117, %v1118
  %v1120 = vrot.slane %v905, 5
  %v1121 = vrot.slane %v1120, 4
  %v1122 = vrot.slane %v53, 5
  %v1123 = vsel %vm1021, %v1121, %v1122
  %v1124 = vrot.slane %v1122, 4
  %v1125 = vrot.slane %v102, 5
  %v1126 = vsel %vm1021, %v1124, %v1125
  %v1127 = vrot.slane %v906, 5
  %v1128 = vrot.slane %v1127, 4
  %v1129 = vrot.slane %v55, 5
  %v1130 = vsel %vm1021, %v1128, %v1129
  %v1131 = vrot.slane %v1129, 4
  %v1132 = vrot.slane %v103, 5
  %v1133 = vsel %vm1021, %v1131, %v1132
  %v1134 = vrot.slane %v907, 5
  %v1135 = vrot.slane %v1134, 4
  %v1136 = vrot.slane %v57, 5
  %v1137 = vsel %vm1021, %v1135, %v1136
  %v1138 = vrot.slane %v1136, 4
  %v1139 = vrot.slane %v104, 5
  %v1140 = vsel %vm1021, %v1138, %v1139
  %v1141 = vrot.slane %v908, 5
  %v1142 = vrot.slane %v1141, 4
  %v1143 = vrot.slane %v59, 5
  %v1144 = vsel %vm1021, %v1142, %v1143
  %v1145 = vrot.slane %v1143, 4
  %v1146 = vrot.slane %v105, 5
  %v1147 = vsel %vm1021, %v1145, %v1146
  %v1148 = vrot.slane %v909, 5
  %v1149 = vrot.slane %v1148, 4
  %v1150 = vrot.slane %v61, 5
  %v1151 = vsel %vm1021, %v1149, %v1150
  %v1152 = vrot.slane %v1150, 4
  %v1153 = vrot.slane %v106, 5
  %v1154 = vsel %vm1021, %v1152, %v1153
  %v1155 = vrot.slane %v910, 5
  %v1156 = vrot.slane %v1155, 4
  %v1157 = vrot.slane %v63, 5
  %v1158 = vsel %vm1021, %v1156, %v1157
  %v1159 = vrot.slane %v1157, 4
  %v1160 = vrot.slane %v107, 5
  %v1161 = vsel %vm1021, %v1159, %v1160
  %v1162 = vrot.slane %v911, 5
  %v1163 = vrot.slane %v1162, 4
  %v1164 = vrot.slane %v65, 5
  %v1165 = vsel %vm1021, %v1163, %v1164
  %v1166 = vrot.slane %v1164, 4
  %v1167 = vrot.slane %v108, 5
  %v1168 = vsel %vm1021, %v1166, %v1167
  %v1169 = vrot.slane %v912, 5
  %v1170 = vrot.slane %v1169, 4
  %v1171 = vrot.slane %v67, 5
  %v1172 = vsel %vm1021, %v1170, %v1171
  %v1173 = vrot.slane %v1171, 4
  %v1174 = vrot.slane %v109, 5
  %v1175 = vsel %vm1021, %v1173, %v1174
  %v1176 = vrot.slane %v913, 5
  %v1177 = vrot.slane %v1176, 4
  %v1178 = vrot.slane %v69, 5
  %v1179 = vsel %vm1021, %v1177, %v1178
  %v1180 = vrot.slane %v1178, 4
  %v1181 = vrot.slane %v110, 5
  %v1182 = vsel %vm1021, %v1180, %v1181
  %v1183 = vrot.slane %v914, 5
  %v1184 = vrot.slane %v1183, 4
  %v1185 = vrot.slane %v71, 5
  %v1186 = vsel %vm1021, %v1184, %v1185
  %v1187 = vrot.slane %v1185, 4
  %v1188 = vrot.slane %v111, 5
  %v1189 = vsel %vm1021, %v1187, %v1188
  %v1190 = vrot.slane %v915, 5
  %v1191 = vrot.slane %v1190, 4
  %v1192 = vrot.slane %v73, 5
  %v1193 = vsel %vm1021, %v1191, %v1192
  %v1194 = vrot.slane %v1192, 4
  %v1195 = vrot.slane %v112, 5
  %v1196 = vsel %vm1021, %v1194, %v1195
  %v1197 = vrot.slane %v916, 5
  %v1198 = vrot.slane %v1197, 4
  %v1199 = vrot.slane %v75, 5
  %v1200 = vsel %vm1021, %v1198, %v1199
  %v1201 = vrot.slane %v1199, 4
  %v1202 = vrot.slane %v113, 5
  %v1203 = vsel %vm1021, %v1201, %v1202
  %v1204 = vrot.slane %v917, 5
  %v1205 = vrot.slane %v1204, 4
  %v1206 = vrot.slane %v77, 5
  %v1207 = vsel %vm1021, %v1205, %v1206
  %v1208 = vrot.slane %v1206, 4
  %v1209 = vrot.slane %v114, 5
  %v1210 = vsel %vm1021, %v1208, %v1209
  %v1211 = vrot.slane %v918, 5
  %v1212 = vrot.slane %v1211, 4
  %v1213 = vrot.slane %v79, 5
  %v1214 = vsel %vm1021, %v1212, %v1213
  %v1215 = vrot.slane %v1213, 4
  %v1216 = vrot.slane %v115, 5
  %v1217 = vsel %vm1021, %v1215, %v1216
  %v1218 = vrot.slane %v919, 5
  %v1219 = vrot.slane %v1218, 4
  %v1220 = vrot.slane %v81, 5
  %v1221 = vsel %vm1021, %v1219, %v1220
  %v1222 = vrot.slane %v1220, 4
  %v1223 = vrot.slane %v116, 5
  %v1224 = vsel %vm1021, %v1222, %v1223
  %v1225 = vrot.slane %v920, 5
  %v1226 = vrot.slane %v1225, 4
  %v1227 = vrot.slane %v83, 5
  %v1228 = vsel %vm1021, %v1226, %v1227
  %v1229 = vrot.slane %v1227, 4
  %v1230 = vrot.slane %v117, 5
  %v1231 = vsel %vm1021, %v1229, %v1230
  %v1232 = vrot.slane %v921, 5
  %v1233 = vrot.slane %v1232, 4
  %v1234 = vrot.slane %v85, 5
  %v1235 = vsel %vm1021, %v1233, %v1234
  %v1236 = vrot.slane %v1234, 4
  %v1237 = vrot.slane %v118, 5
  %v1238 = vsel %vm1021, %v1236, %v1237
  %v1239 = vrot.slane %v922, 5
  %v1240 = vrot.slane %v1239, 4
  %v1241 = vrot.slane %v87, 5
  %v1242 = vsel %vm1021, %v1240, %v1241
  %v1243 = vrot.slane %v1241, 4
  %v1244 = vrot.slane %v119, 5
  %v1245 = vsel %vm1021, %v1243, %v1244
  %s1246 = scalar_lea.vmem %s0, 12
  %v1247 = vld [vmem:[%s1246] sm:$0xf]
  %v1248 = vld [vmem:[%s1246 + $0x4] sm:$0xf]
  %v1249 = vld [vmem:[%s1246 + $0xc] sm:$0xf]
  %v1250 = vld [vmem:[%s1246 + $0x10] sm:$0xf]
  %v1251 = vld [vmem:[%s1246 + $0x18] sm:$0xf]
  %v1252 = vld [vmem:[%s1246 + $0x1c] sm:$0xf]
  %v1253 = vld [vmem:[%s1246 + $0x24] sm:$0xf]
  %v1254 = vld [vmem:[%s1246 + $0x28] sm:$0xf]
  %v1255 = vld [vmem:[%s1246 + $0x30] sm:$0xf]
  %v1256 = vld [vmem:[%s1246 + $0x34] sm:$0xf]
  %v1257 = vld [vmem:[%s1246 + $0x3c] sm:$0xf]
  %v1258 = vld [vmem:[%s1246 + $0x40] sm:$0xf]
  %v1259 = vld [vmem:[%s1246 + $0x48] sm:$0xf]
  %v1260 = vld [vmem:[%s1246 + $0x4c] sm:$0xf]
  %v1261 = vld [vmem:[%s1246 + $0x54] sm:$0xf]
  %v1262 = vld [vmem:[%s1246 + $0x58] sm:$0xf]
  %v1263 = vld [vmem:[%s1246 + $0x60] sm:$0xf]
  %v1264 = vld [vmem:[%s1246 + $0x64] sm:$0xf]
  %v1265 = vld [vmem:[%s1246 + $0x6c] sm:$0xf]
  %v1266 = vld [vmem:[%s1246 + $0x70] sm:$0xf]
  %v1267 = vld [vmem:[%s1246 + $0x78] sm:$0xf]
  %v1268 = vld [vmem:[%s1246 + $0x7c] sm:$0xf]
  %v1269 = vld [vmem:[%s1246 + $0x84] sm:$0xf]
  %v1270 = vld [vmem:[%s1246 + $0x88] sm:$0xf]
  %v1271 = vld [vmem:[%s1246 + $0x90] sm:$0xf]
  %v1272 = vld [vmem:[%s1246 + $0x94] sm:$0xf]
  %v1273 = vld [vmem:[%s1246 + $0x9c] sm:$0xf]
  %v1274 = vld [vmem:[%s1246 + $0xa0] sm:$0xf]
  %v1275 = vld [vmem:[%s1246 + $0xa8] sm:$0xf]
  %v1276 = vld [vmem:[%s1246 + $0xac] sm:$0xf]
  %v1277 = vld [vmem:[%s1246 + $0xb4] sm:$0xf]
  %v1278 = vld [vmem:[%s1246 + $0xb8] sm:$0xf]
  %v1279 = vld [vmem:[%s1246 + $0xd8] sm:$0xf]
  %v1280 = vld [vmem:[%s1246 + $0xdc] sm:$0xf]
  %v1281 = vld [vmem:[%s1246 + $0xe4] sm:$0xf]
  %v1282 = vld [vmem:[%s1246 + $0xe8] sm:$0xf]
  %v1283 = vld [vmem:[%s1246 + $0xf0] sm:$0xf]
  %v1284 = vld [vmem:[%s1246 + $0xf4] sm:$0xf]
  %v1285 = vld [vmem:[%s1246 + $0xfc] sm:$0xf]
  %v1286 = vld [vmem:[%s1246 + $0x100] sm:$0xf]
  %v1287 = vld [vmem:[%s1246 + $0x108] sm:$0xf]
  %v1288 = vld [vmem:[%s1246 + $0x10c] sm:$0xf]
  %v1289 = vld [vmem:[%s1246 + $0x114] sm:$0xf]
  %v1290 = vld [vmem:[%s1246 + $0x118] sm:$0xf]
  %v1291 = vld [vmem:[%s1246 + $0x120] sm:$0xf]
  %v1292 = vld [vmem:[%s1246 + $0x124] sm:$0xf]
  %v1293 = vld [vmem:[%s1246 + $0x12c] sm:$0xf]
  %v1294 = vld [vmem:[%s1246 + $0x130] sm:$0xf]
  %v1295 = vld [vmem:[%s1246 + $0x138] sm:$0xf]
  %v1296 = vld [vmem:[%s1246 + $0x13c] sm:$0xf]
  %v1297 = vld [vmem:[%s1246 + $0x144] sm:$0xf]
  %v1298 = vld [vmem:[%s1246 + $0x148] sm:$0xf]
  %v1299 = vld [vmem:[%s1246 + $0x150] sm:$0xf]
  %v1300 = vld [vmem:[%s1246 + $0x154] sm:$0xf]
  %v1301 = vld [vmem:[%s1246 + $0x15c] sm:$0xf]
  %v1302 = vld [vmem:[%s1246 + $0x160] sm:$0xf]
  %v1303 = vld [vmem:[%s1246 + $0x168] sm:$0xf]
  %v1304 = vld [vmem:[%s1246 + $0x16c] sm:$0xf]
  %v1305 = vld [vmem:[%s1246 + $0x174] sm:$0xf]
  %v1306 = vld [vmem:[%s1246 + $0x178] sm:$0xf]
  %v1307 = vld [vmem:[%s1246 + $0x180] sm:$0xf]
  %v1308 = vld [vmem:[%s1246 + $0x184] sm:$0xf]
  %v1309 = vld [vmem:[%s1246 + $0x18c] sm:$0xf]
  %v1310 = vld [vmem:[%s1246 + $0x190] sm:$0xf]
  %v1311 = vld [vmem:[%s1246 + $0x8] sm:$0x1]
  %v1312 = vld [vmem:[%s1246 + $0x14] sm:$0x1]
  %v1313 = vld [vmem:[%s1246 + $0x20] sm:$0x1]
  %v1314 = vld [vmem:[%s1246 + $0x2c] sm:$0x1]
  %v1315 = vld [vmem:[%s1246 + $0x38] sm:$0x1]
  %v1316 = vld [vmem:[%s1246 + $0x44] sm:$0x1]
  %v1317 = vld [vmem:[%s1246 + $0x50] sm:$0x1]
  %v1318 = vld [vmem:[%s1246 + $0x5c] sm:$0x1]
  %v1319 = vld [vmem:[%s1246 + $0x68] sm:$0x1]
  %v1320 = vld [vmem:[%s1246 + $0x74] sm:$0x1]
  %v1321 = vld [vmem:[%s1246 + $0x80] sm:$0x1]
  %v1322 = vld [vmem:[%s1246 + $0x8c] sm:$0x1]
  %v1323 = vld [vmem:[%s1246 + $0x98] sm:$0x1]
  %v1324 = vld [vmem:[%s1246 + $0xa4] sm:$0x1]
  %v1325 = vld [vmem:[%s1246 + $0xb0] sm:$0x1]
  %v1326 = vld [vmem:[%s1246 + $0xbc] sm:$0x1]
  %v1327 = vld [vmem:[%s1246 + $0xe0] sm:$0x1]
  %v1328 = vld [vmem:[%s1246 + $0xec] sm:$0x1]
  %v1329 = vld [vmem:[%s1246 + $0xf8] sm:$0x1]
  %v1330 = vld [vmem:[%s1246 + $0x104] sm:$0x1]
  %v1331 = vld [vmem:[%s1246 + $0x110] sm:$0x1]
  %v1332 = vld [vmem:[%s1246 + $0x11c] sm:$0x1]
  %v1333 = vld [vmem:[%s1246 + $0x128] sm:$0x1]
  %v1334 = vld [vmem:[%s1246 + $0x134] sm:$0x1]
  %v1335 = vld [vmem:[%s1246 + $0x140] sm:$0x1]
  %v1336 = vld [vmem:[%s1246 + $0x14c] sm:$0x1]
  %v1337 = vld [vmem:[%s1246 + $0x158] sm:$0x1]
  %v1338 = vld [vmem:[%s1246 + $0x164] sm:$0x1]
  %v1339 = vld [vmem:[%s1246 + $0x170] sm:$0x1]
  %v1340 = vld [vmem:[%s1246 + $0x17c] sm:$0x1]
  %v1341 = vld [vmem:[%s1246 + $0x188] sm:$0x1]
  %v1342 = vld [vmem:[%s1246 + $0x194] sm:$0x1]
  %v1344 = vshrl.u32 %v1247, 16
  %v1346 = vrot.slane %v1344, 4
  %v1347 = vshll.u32 %v1247, 16
  %v1349 = vrot.slane %v1347, 5
  %v1350 = vor.u32 %v1346, %v1349
  %v1351 = vrot.slane %v1350, 4
  %v1353 = vshll.u32 %v1248, 16
  %v1355 = vrot.slane %v1353, 5
  %v1356 = vsel %vm122, %v1351, %v1355
  %v1357 = vshrl.u32 %v1248, 16
  %v1359 = vrot.slane %v1357, 4
  %v1360 = vor.u32 %v1359, %v1355
  %v1361 = vrot.slane %v1360, 4
  %v1363 = vshll.u32 %v1311, 16
  %v1365 = vrot.slane %v1363, 5
  %v1366 = vsel %vm122, %v1361, %v1365
  %v1368 = vshrl.u32 %v1249, 16
  %v1370 = vrot.slane %v1368, 4
  %v1371 = vshll.u32 %v1249, 16
  %v1373 = vrot.slane %v1371, 5
  %v1374 = vor.u32 %v1370, %v1373
  %v1375 = vrot.slane %v1374, 4
  %v1377 = vshll.u32 %v1250, 16
  %v1379 = vrot.slane %v1377, 5
  %v1380 = vsel %vm122, %v1375, %v1379
  %v1381 = vshrl.u32 %v1250, 16
  %v1383 = vrot.slane %v1381, 4
  %v1384 = vor.u32 %v1383, %v1379
  %v1385 = vrot.slane %v1384, 4
  %v1387 = vshll.u32 %v1312, 16
  %v1389 = vrot.slane %v1387, 5
  %v1390 = vsel %vm122, %v1385, %v1389
  %v1392 = vshrl.u32 %v1251, 16
  %v1394 = vrot.slane %v1392, 4
  %v1395 = vshll.u32 %v1251, 16
  %v1397 = vrot.slane %v1395, 5
  %v1398 = vor.u32 %v1394, %v1397
  %v1399 = vrot.slane %v1398, 4
  %v1401 = vshll.u32 %v1252, 16
  %v1403 = vrot.slane %v1401, 5
  %v1404 = vsel %vm122, %v1399, %v1403
  %v1405 = vshrl.u32 %v1252, 16
  %v1407 = vrot.slane %v1405, 4
  %v1408 = vor.u32 %v1407, %v1403
  %v1409 = vrot.slane %v1408, 4
  %v1411 = vshll.u32 %v1313, 16
  %v1413 = vrot.slane %v1411, 5
  %v1414 = vsel %vm122, %v1409, %v1413
  %v1416 = vshrl.u32 %v1253, 16
  %v1418 = vrot.slane %v1416, 4
  %v1419 = vshll.u32 %v1253, 16
  %v1421 = vrot.slane %v1419, 5
  %v1422 = vor.u32 %v1418, %v1421
  %v1423 = vrot.slane %v1422, 4
  %v1425 = vshll.u32 %v1254, 16
  %v1427 = vrot.slane %v1425, 5
  %v1428 = vsel %vm122, %v1423, %v1427
  %v1429 = vshrl.u32 %v1254, 16
  %v1431 = vrot.slane %v1429, 4
  %v1432 = vor.u32 %v1431, %v1427
  %v1433 = vrot.slane %v1432, 4
  %v1435 = vshll.u32 %v1314, 16
  %v1437 = vrot.slane %v1435, 5
  %v1438 = vsel %vm122, %v1433, %v1437
  %v1440 = vshrl.u32 %v1255, 16
  %v1442 = vrot.slane %v1440, 4
  %v1443 = vshll.u32 %v1255, 16
  %v1445 = vrot.slane %v1443, 5
  %v1446 = vor.u32 %v1442, %v1445
  %v1447 = vrot.slane %v1446, 4
  %v1449 = vshll.u32 %v1256, 16
  %v1451 = vrot.slane %v1449, 5
  %v1452 = vsel %vm122, %v1447, %v1451
  %v1453 = vshrl.u32 %v1256, 16
  %v1455 = vrot.slane %v1453, 4
  %v1456 = vor.u32 %v1455, %v1451
  %v1457 = vrot.slane %v1456, 4
  %v1459 = vshll.u32 %v1315, 16
  %v1461 = vrot.slane %v1459, 5
  %v1462 = vsel %vm122, %v1457, %v1461
  %v1464 = vshrl.u32 %v1257, 16
  %v1466 = vrot.slane %v1464, 4
  %v1467 = vshll.u32 %v1257, 16
  %v1469 = vrot.slane %v1467, 5
  %v1470 = vor.u32 %v1466, %v1469
  %v1471 = vrot.slane %v1470, 4
  %v1473 = vshll.u32 %v1258, 16
  %v1475 = vrot.slane %v1473, 5
  %v1476 = vsel %vm122, %v1471, %v1475
  %v1477 = vshrl.u32 %v1258, 16
  %v1479 = vrot.slane %v1477, 4
  %v1480 = vor.u32 %v1479, %v1475
  %v1481 = vrot.slane %v1480, 4
  %v1483 = vshll.u32 %v1316, 16
  %v1485 = vrot.slane %v1483, 5
  %v1486 = vsel %vm122, %v1481, %v1485
  %v1488 = vshrl.u32 %v1259, 16
  %v1490 = vrot.slane %v1488, 4
  %v1491 = vshll.u32 %v1259, 16
  %v1493 = vrot.slane %v1491, 5
  %v1494 = vor.u32 %v1490, %v1493
  %v1495 = vrot.slane %v1494, 4
  %v1497 = vshll.u32 %v1260, 16
  %v1499 = vrot.slane %v1497, 5
  %v1500 = vsel %vm122, %v1495, %v1499
  %v1501 = vshrl.u32 %v1260, 16
  %v1503 = vrot.slane %v1501, 4
  %v1504 = vor.u32 %v1503, %v1499
  %v1505 = vrot.slane %v1504, 4
  %v1507 = vshll.u32 %v1317, 16
  %v1509 = vrot.slane %v1507, 5
  %v1510 = vsel %vm122, %v1505, %v1509
  %v1512 = vshrl.u32 %v1261, 16
  %v1514 = vrot.slane %v1512, 4
  %v1515 = vshll.u32 %v1261, 16
  %v1517 = vrot.slane %v1515, 5
  %v1518 = vor.u32 %v1514, %v1517
  %v1519 = vrot.slane %v1518, 4
  %v1521 = vshll.u32 %v1262, 16
  %v1523 = vrot.slane %v1521, 5
  %v1524 = vsel %vm122, %v1519, %v1523
  %v1525 = vshrl.u32 %v1262, 16
  %v1527 = vrot.slane %v1525, 4
  %v1528 = vor.u32 %v1527, %v1523
  %v1529 = vrot.slane %v1528, 4
  %v1531 = vshll.u32 %v1318, 16
  %v1533 = vrot.slane %v1531, 5
  %v1534 = vsel %vm122, %v1529, %v1533
  %v1536 = vshrl.u32 %v1263, 16
  %v1538 = vrot.slane %v1536, 4
  %v1539 = vshll.u32 %v1263, 16
  %v1541 = vrot.slane %v1539, 5
  %v1542 = vor.u32 %v1538, %v1541
  %v1543 = vrot.slane %v1542, 4
  %v1545 = vshll.u32 %v1264, 16
  %v1547 = vrot.slane %v1545, 5
  %v1548 = vsel %vm122, %v1543, %v1547
  %v1549 = vshrl.u32 %v1264, 16
  %v1551 = vrot.slane %v1549, 4
  %v1552 = vor.u32 %v1551, %v1547
  %v1553 = vrot.slane %v1552, 4
  %v1555 = vshll.u32 %v1319, 16
  %v1557 = vrot.slane %v1555, 5
  %v1558 = vsel %vm122, %v1553, %v1557
  %v1560 = vshrl.u32 %v1265, 16
  %v1562 = vrot.slane %v1560, 4
  %v1563 = vshll.u32 %v1265, 16
  %v1565 = vrot.slane %v1563, 5
  %v1566 = vor.u32 %v1562, %v1565
  %v1567 = vrot.slane %v1566, 4
  %v1569 = vshll.u32 %v1266, 16
  %v1571 = vrot.slane %v1569, 5
  %v1572 = vsel %vm122, %v1567, %v1571
  %v1573 = vshrl.u32 %v1266, 16
  %v1575 = vrot.slane %v1573, 4
  %v1576 = vor.u32 %v1575, %v1571
  %v1577 = vrot.slane %v1576, 4
  %v1579 = vshll.u32 %v1320, 16
  %v1581 = vrot.slane %v1579, 5
  %v1582 = vsel %vm122, %v1577, %v1581
  %v1584 = vshrl.u32 %v1267, 16
  %v1586 = vrot.slane %v1584, 4
  %v1587 = vshll.u32 %v1267, 16
  %v1589 = vrot.slane %v1587, 5
  %v1590 = vor.u32 %v1586, %v1589
  %v1591 = vrot.slane %v1590, 4
  %v1593 = vshll.u32 %v1268, 16
  %v1595 = vrot.slane %v1593, 5
  %v1596 = vsel %vm122, %v1591, %v1595
  %v1597 = vshrl.u32 %v1268, 16
  %v1599 = vrot.slane %v1597, 4
  %v1600 = vor.u32 %v1599, %v1595
  %v1601 = vrot.slane %v1600, 4
  %v1603 = vshll.u32 %v1321, 16
  %v1605 = vrot.slane %v1603, 5
  %v1606 = vsel %vm122, %v1601, %v1605
  %v1608 = vshrl.u32 %v1269, 16
  %v1610 = vrot.slane %v1608, 4
  %v1611 = vshll.u32 %v1269, 16
  %v1613 = vrot.slane %v1611, 5
  %v1614 = vor.u32 %v1610, %v1613
  %v1615 = vrot.slane %v1614, 4
  %v1617 = vshll.u32 %v1270, 16
  %v1619 = vrot.slane %v1617, 5
  %v1620 = vsel %vm122, %v1615, %v1619
  %v1621 = vshrl.u32 %v1270, 16
  %v1623 = vrot.slane %v1621, 4
  %v1624 = vor.u32 %v1623, %v1619
  %v1625 = vrot.slane %v1624, 4
  %v1627 = vshll.u32 %v1322, 16
  %v1629 = vrot.slane %v1627, 5
  %v1630 = vsel %vm122, %v1625, %v1629
  %v1632 = vshrl.u32 %v1271, 16
  %v1634 = vrot.slane %v1632, 4
  %v1635 = vshll.u32 %v1271, 16
  %v1637 = vrot.slane %v1635, 5
  %v1638 = vor.u32 %v1634, %v1637
  %v1639 = vrot.slane %v1638, 4
  %v1641 = vshll.u32 %v1272, 16
  %v1643 = vrot.slane %v1641, 5
  %v1644 = vsel %vm122, %v1639, %v1643
  %v1645 = vshrl.u32 %v1272, 16
  %v1647 = vrot.slane %v1645, 4
  %v1648 = vor.u32 %v1647, %v1643
  %v1649 = vrot.slane %v1648, 4
  %v1651 = vshll.u32 %v1323, 16
  %v1653 = vrot.slane %v1651, 5
  %v1654 = vsel %vm122, %v1649, %v1653
  %v1656 = vshrl.u32 %v1273, 16
  %v1658 = vrot.slane %v1656, 4
  %v1659 = vshll.u32 %v1273, 16
  %v1661 = vrot.slane %v1659, 5
  %v1662 = vor.u32 %v1658, %v1661
  %v1663 = vrot.slane %v1662, 4
  %v1665 = vshll.u32 %v1274, 16
  %v1667 = vrot.slane %v1665, 5
  %v1668 = vsel %vm122, %v1663, %v1667
  %v1669 = vshrl.u32 %v1274, 16
  %v1671 = vrot.slane %v1669, 4
  %v1672 = vor.u32 %v1671, %v1667
  %v1673 = vrot.slane %v1672, 4
  %v1675 = vshll.u32 %v1324, 16
  %v1677 = vrot.slane %v1675, 5
  %v1678 = vsel %vm122, %v1673, %v1677
  %v1680 = vshrl.u32 %v1275, 16
  %v1682 = vrot.slane %v1680, 4
  %v1683 = vshll.u32 %v1275, 16
  %v1685 = vrot.slane %v1683, 5
  %v1686 = vor.u32 %v1682, %v1685
  %v1687 = vrot.slane %v1686, 4
  %v1689 = vshll.u32 %v1276, 16
  %v1691 = vrot.slane %v1689, 5
  %v1692 = vsel %vm122, %v1687, %v1691
  %v1693 = vshrl.u32 %v1276, 16
  %v1695 = vrot.slane %v1693, 4
  %v1696 = vor.u32 %v1695, %v1691
  %v1697 = vrot.slane %v1696, 4
  %v1699 = vshll.u32 %v1325, 16
  %v1701 = vrot.slane %v1699, 5
  %v1702 = vsel %vm122, %v1697, %v1701
  %v1704 = vshrl.u32 %v1277, 16
  %v1706 = vrot.slane %v1704, 4
  %v1707 = vshll.u32 %v1277, 16
  %v1709 = vrot.slane %v1707, 5
  %v1710 = vor.u32 %v1706, %v1709
  %v1711 = vrot.slane %v1710, 4
  %v1713 = vshll.u32 %v1278, 16
  %v1715 = vrot.slane %v1713, 5
  %v1716 = vsel %vm122, %v1711, %v1715
  %v1717 = vshrl.u32 %v1278, 16
  %v1719 = vrot.slane %v1717, 4
  %v1720 = vor.u32 %v1719, %v1715
  %v1721 = vrot.slane %v1720, 4
  %v1723 = vshll.u32 %v1326, 16
  %v1725 = vrot.slane %v1723, 5
  %v1726 = vsel %vm122, %v1721, %v1725
  %v1728 = vshrl.u32 %v1279, 16
  %v1730 = vrot.slane %v1728, 4
  %v1731 = vshll.u32 %v1279, 16
  %v1733 = vrot.slane %v1731, 5
  %v1734 = vor.u32 %v1730, %v1733
  %v1735 = vrot.slane %v1734, 4
  %v1737 = vshll.u32 %v1280, 16
  %v1739 = vrot.slane %v1737, 5
  %v1740 = vsel %vm122, %v1735, %v1739
  %v1741 = vshrl.u32 %v1280, 16
  %v1743 = vrot.slane %v1741, 4
  %v1744 = vor.u32 %v1743, %v1739
  %v1745 = vrot.slane %v1744, 4
  %v1747 = vshll.u32 %v1327, 16
  %v1749 = vrot.slane %v1747, 5
  %v1750 = vsel %vm122, %v1745, %v1749
  %v1752 = vshrl.u32 %v1281, 16
  %v1754 = vrot.slane %v1752, 4
  %v1755 = vshll.u32 %v1281, 16
  %v1757 = vrot.slane %v1755, 5
  %v1758 = vor.u32 %v1754, %v1757
  %v1759 = vrot.slane %v1758, 4
  %v1761 = vshll.u32 %v1282, 16
  %v1763 = vrot.slane %v1761, 5
  %v1764 = vsel %vm122, %v1759, %v1763
  %v1765 = vshrl.u32 %v1282, 16
  %v1767 = vrot.slane %v1765, 4
  %v1768 = vor.u32 %v1767, %v1763
  %v1769 = vrot.slane %v1768, 4
  %v1771 = vshll.u32 %v1328, 16
  %v1773 = vrot.slane %v1771, 5
  %v1774 = vsel %vm122, %v1769, %v1773
  %v1776 = vshrl.u32 %v1283, 16
  %v1778 = vrot.slane %v1776, 4
  %v1779 = vshll.u32 %v1283, 16
  %v1781 = vrot.slane %v1779, 5
  %v1782 = vor.u32 %v1778, %v1781
  %v1783 = vrot.slane %v1782, 4
  %v1785 = vshll.u32 %v1284, 16
  %v1787 = vrot.slane %v1785, 5
  %v1788 = vsel %vm122, %v1783, %v1787
  %v1789 = vshrl.u32 %v1284, 16
  %v1791 = vrot.slane %v1789, 4
  %v1792 = vor.u32 %v1791, %v1787
  %v1793 = vrot.slane %v1792, 4
  %v1795 = vshll.u32 %v1329, 16
  %v1797 = vrot.slane %v1795, 5
  %v1798 = vsel %vm122, %v1793, %v1797
  %v1800 = vshrl.u32 %v1285, 16
  %v1802 = vrot.slane %v1800, 4
  %v1803 = vshll.u32 %v1285, 16
  %v1805 = vrot.slane %v1803, 5
  %v1806 = vor.u32 %v1802, %v1805
  %v1807 = vrot.slane %v1806, 4
  %v1809 = vshll.u32 %v1286, 16
  %v1811 = vrot.slane %v1809, 5
  %v1812 = vsel %vm122, %v1807, %v1811
  %v1813 = vshrl.u32 %v1286, 16
  %v1815 = vrot.slane %v1813, 4
  %v1816 = vor.u32 %v1815, %v1811
  %v1817 = vrot.slane %v1816, 4
  %v1819 = vshll.u32 %v1330, 16
  %v1821 = vrot.slane %v1819, 5
  %v1822 = vsel %vm122, %v1817, %v1821
  %v1824 = vshrl.u32 %v1287, 16
  %v1826 = vrot.slane %v1824, 4
  %v1827 = vshll.u32 %v1287, 16
  %v1829 = vrot.slane %v1827, 5
  %v1830 = vor.u32 %v1826, %v1829
  %v1831 = vrot.slane %v1830, 4
  %v1833 = vshll.u32 %v1288, 16
  %v1835 = vrot.slane %v1833, 5
  %v1836 = vsel %vm122, %v1831, %v1835
  %v1837 = vshrl.u32 %v1288, 16
  %v1839 = vrot.slane %v1837, 4
  %v1840 = vor.u32 %v1839, %v1835
  %v1841 = vrot.slane %v1840, 4
  %v1843 = vshll.u32 %v1331, 16
  %v1845 = vrot.slane %v1843, 5
  %v1846 = vsel %vm122, %v1841, %v1845
  %v1848 = vshrl.u32 %v1289, 16
  %v1850 = vrot.slane %v1848, 4
  %v1851 = vshll.u32 %v1289, 16
  %v1853 = vrot.slane %v1851, 5
  %v1854 = vor.u32 %v1850, %v1853
  %v1855 = vrot.slane %v1854, 4
  %v1857 = vshll.u32 %v1290, 16
  %v1859 = vrot.slane %v1857, 5
  %v1860 = vsel %vm122, %v1855, %v1859
  %v1861 = vshrl.u32 %v1290, 16
  %v1863 = vrot.slane %v1861, 4
  %v1864 = vor.u32 %v1863, %v1859
  %v1865 = vrot.slane %v1864, 4
  %v1867 = vshll.u32 %v1332, 16
  %v1869 = vrot.slane %v1867, 5
  %v1870 = vsel %vm122, %v1865, %v1869
  %v1872 = vshrl.u32 %v1291, 16
  %v1874 = vrot.slane %v1872, 4
  %v1875 = vshll.u32 %v1291, 16
  %v1877 = vrot.slane %v1875, 5
  %v1878 = vor.u32 %v1874, %v1877
  %v1879 = vrot.slane %v1878, 4
  %v1881 = vshll.u32 %v1292, 16
  %v1883 = vrot.slane %v1881, 5
  %v1884 = vsel %vm122, %v1879, %v1883
  %v1885 = vshrl.u32 %v1292, 16
  %v1887 = vrot.slane %v1885, 4
  %v1888 = vor.u32 %v1887, %v1883
  %v1889 = vrot.slane %v1888, 4
  %v1891 = vshll.u32 %v1333, 16
  %v1893 = vrot.slane %v1891, 5
  %v1894 = vsel %vm122, %v1889, %v1893
  %v1896 = vshrl.u32 %v1293, 16
  %v1898 = vrot.slane %v1896, 4
  %v1899 = vshll.u32 %v1293, 16
  %v1901 = vrot.slane %v1899, 5
  %v1902 = vor.u32 %v1898, %v1901
  %v1903 = vrot.slane %v1902, 4
  %v1905 = vshll.u32 %v1294, 16
  %v1907 = vrot.slane %v1905, 5
  %v1908 = vsel %vm122, %v1903, %v1907
  %v1909 = vshrl.u32 %v1294, 16
  %v1911 = vrot.slane %v1909, 4
  %v1912 = vor.u32 %v1911, %v1907
  %v1913 = vrot.slane %v1912, 4
  %v1915 = vshll.u32 %v1334, 16
  %v1917 = vrot.slane %v1915, 5
  %v1918 = vsel %vm122, %v1913, %v1917
  %v1920 = vshrl.u32 %v1295, 16
  %v1922 = vrot.slane %v1920, 4
  %v1923 = vshll.u32 %v1295, 16
  %v1925 = vrot.slane %v1923, 5
  %v1926 = vor.u32 %v1922, %v1925
  %v1927 = vrot.slane %v1926, 4
  %v1929 = vshll.u32 %v1296, 16
  %v1931 = vrot.slane %v1929, 5
  %v1932 = vsel %vm122, %v1927, %v1931
  %v1933 = vshrl.u32 %v1296, 16
  %v1935 = vrot.slane %v1933, 4
  %v1936 = vor.u32 %v1935, %v1931
  %v1937 = vrot.slane %v1936, 4
  %v1939 = vshll.u32 %v1335, 16
  %v1941 = vrot.slane %v1939, 5
  %v1942 = vsel %vm122, %v1937, %v1941
  %v1944 = vshrl.u32 %v1297, 16
  %v1946 = vrot.slane %v1944, 4
  %v1947 = vshll.u32 %v1297, 16
  %v1949 = vrot.slane %v1947, 5
  %v1950 = vor.u32 %v1946, %v1949
  %v1951 = vrot.slane %v1950, 4
  %v1953 = vshll.u32 %v1298, 16
  %v1955 = vrot.slane %v1953, 5
  %v1956 = vsel %vm122, %v1951, %v1955
  %v1957 = vshrl.u32 %v1298, 16
  %v1959 = vrot.slane %v1957, 4
  %v1960 = vor.u32 %v1959, %v1955
  %v1961 = vrot.slane %v1960, 4
  %v1963 = vshll.u32 %v1336, 16
  %v1965 = vrot.slane %v1963, 5
  %v1966 = vsel %vm122, %v1961, %v1965
  %v1968 = vshrl.u32 %v1299, 16
  %v1970 = vrot.slane %v1968, 4
  %v1971 = vshll.u32 %v1299, 16
  %v1973 = vrot.slane %v1971, 5
  %v1974 = vor.u32 %v1970, %v1973
  %v1975 = vrot.slane %v1974, 4
  %v1977 = vshll.u32 %v1300, 16
  %v1979 = vrot.slane %v1977, 5
  %v1980 = vsel %vm122, %v1975, %v1979
  %v1981 = vshrl.u32 %v1300, 16
  %v1983 = vrot.slane %v1981, 4
  %v1984 = vor.u32 %v1983, %v1979
  %v1985 = vrot.slane %v1984, 4
  %v1987 = vshll.u32 %v1337, 16
  %v1989 = vrot.slane %v1987, 5
  %v1990 = vsel %vm122, %v1985, %v1989
  %v1992 = vshrl.u32 %v1301, 16
  %v1994 = vrot.slane %v1992, 4
  %v1995 = vshll.u32 %v1301, 16
  %v1997 = vrot.slane %v1995, 5
  %v1998 = vor.u32 %v1994, %v1997
  %v1999 = vrot.slane %v1998, 4
  %v2001 = vshll.u32 %v1302, 16
  %v2003 = vrot.slane %v2001, 5
  %v2004 = vsel %vm122, %v1999, %v2003
  %v2005 = vshrl.u32 %v1302, 16
  %v2007 = vrot.slane %v2005, 4
  %v2008 = vor.u32 %v2007, %v2003
  %v2009 = vrot.slane %v2008, 4
  %v2011 = vshll.u32 %v1338, 16
  %v2013 = vrot.slane %v2011, 5
  %v2014 = vsel %vm122, %v2009, %v2013
  %v2016 = vshrl.u32 %v1303, 16
  %v2018 = vrot.slane %v2016, 4
  %v2019 = vshll.u32 %v1303, 16
  %v2021 = vrot.slane %v2019, 5
  %v2022 = vor.u32 %v2018, %v2021
  %v2023 = vrot.slane %v2022, 4
  %v2025 = vshll.u32 %v1304, 16
  %v2027 = vrot.slane %v2025, 5
  %v2028 = vsel %vm122, %v2023, %v2027
  %v2029 = vshrl.u32 %v1304, 16
  %v2031 = vrot.slane %v2029, 4
  %v2032 = vor.u32 %v2031, %v2027
  %v2033 = vrot.slane %v2032, 4
  %v2035 = vshll.u32 %v1339, 16
  %v2037 = vrot.slane %v2035, 5
  %v2038 = vsel %vm122, %v2033, %v2037
  %v2040 = vshrl.u32 %v1305, 16
  %v2042 = vrot.slane %v2040, 4
  %v2043 = vshll.u32 %v1305, 16
  %v2045 = vrot.slane %v2043, 5
  %v2046 = vor.u32 %v2042, %v2045
  %v2047 = vrot.slane %v2046, 4
  %v2049 = vshll.u32 %v1306, 16
  %v2051 = vrot.slane %v2049, 5
  %v2052 = vsel %vm122, %v2047, %v2051
  %v2053 = vshrl.u32 %v1306, 16
  %v2055 = vrot.slane %v2053, 4
  %v2056 = vor.u32 %v2055, %v2051
  %v2057 = vrot.slane %v2056, 4
  %v2059 = vshll.u32 %v1340, 16
  %v2061 = vrot.slane %v2059, 5
  %v2062 = vsel %vm122, %v2057, %v2061
  %v2064 = vshrl.u32 %v1307, 16
  %v2066 = vrot.slane %v2064, 4
  %v2067 = vshll.u32 %v1307, 16
  %v2069 = vrot.slane %v2067, 5
  %v2070 = vor.u32 %v2066, %v2069
  %v2071 = vrot.slane %v2070, 4
  %v2073 = vshll.u32 %v1308, 16
  %v2075 = vrot.slane %v2073, 5
  %v2076 = vsel %vm122, %v2071, %v2075
  %v2077 = vshrl.u32 %v1308, 16
  %v2079 = vrot.slane %v2077, 4
  %v2080 = vor.u32 %v2079, %v2075
  %v2081 = vrot.slane %v2080, 4
  %v2083 = vshll.u32 %v1341, 16
  %v2085 = vrot.slane %v2083, 5
  %v2086 = vsel %vm122, %v2081, %v2085
  %v2088 = vshrl.u32 %v1309, 16
  %v2090 = vrot.slane %v2088, 4
  %v2091 = vshll.u32 %v1309, 16
  %v2093 = vrot.slane %v2091, 5
  %v2094 = vor.u32 %v2090, %v2093
  %v2095 = vrot.slane %v2094, 4
  %v2097 = vshll.u32 %v1310, 16
  %v2099 = vrot.slane %v2097, 5
  %v2100 = vsel %vm122, %v2095, %v2099
  %v2101 = vshrl.u32 %v1310, 16
  %v2103 = vrot.slane %v2101, 4
  %v2104 = vor.u32 %v2103, %v2099
  %v2105 = vrot.slane %v2104, 4
  %v2107 = vshll.u32 %v1342, 16
  %v2109 = vrot.slane %v2107, 5
  %v2110 = vsel %vm122, %v2105, %v2109
  %v2111 = vld [vmem:[%s1246] sm:$0xe]
  %v2112 = vld [vmem:[%s1246 + $0xc] sm:$0xe]
  %v2113 = vld [vmem:[%s1246 + $0x18] sm:$0xe]
  %v2114 = vld [vmem:[%s1246 + $0x24] sm:$0xe]
  %v2115 = vld [vmem:[%s1246 + $0x30] sm:$0xe]
  %v2116 = vld [vmem:[%s1246 + $0x3c] sm:$0xe]
  %v2117 = vld [vmem:[%s1246 + $0x48] sm:$0xe]
  %v2118 = vld [vmem:[%s1246 + $0x54] sm:$0xe]
  %v2119 = vld [vmem:[%s1246 + $0x60] sm:$0xe]
  %v2120 = vld [vmem:[%s1246 + $0x6c] sm:$0xe]
  %v2121 = vld [vmem:[%s1246 + $0x78] sm:$0xe]
  %v2122 = vld [vmem:[%s1246 + $0x84] sm:$0xe]
  %v2123 = vld [vmem:[%s1246 + $0x90] sm:$0xe]
  %v2124 = vld [vmem:[%s1246 + $0x9c] sm:$0xe]
  %v2125 = vld [vmem:[%s1246 + $0xa8] sm:$0xe]
  %v2126 = vld [vmem:[%s1246 + $0xb4] sm:$0xe]
  %v2127 = vld [vmem:[%s1246 + $0xd8] sm:$0xe]
  %v2128 = vld [vmem:[%s1246 + $0xe4] sm:$0xe]
  %v2129 = vld [vmem:[%s1246 + $0xf0] sm:$0xe]
  %v2130 = vld [vmem:[%s1246 + $0xfc] sm:$0xe]
  %v2131 = vld [vmem:[%s1246 + $0x108] sm:$0xe]
  %v2132 = vld [vmem:[%s1246 + $0x114] sm:$0xe]
  %v2133 = vld [vmem:[%s1246 + $0x120] sm:$0xe]
  %v2134 = vld [vmem:[%s1246 + $0x12c] sm:$0xe]
  %v2135 = vld [vmem:[%s1246 + $0x138] sm:$0xe]
  %v2136 = vld [vmem:[%s1246 + $0x144] sm:$0xe]
  %v2137 = vld [vmem:[%s1246 + $0x150] sm:$0xe]
  %v2138 = vld [vmem:[%s1246 + $0x15c] sm:$0xe]
  %v2139 = vld [vmem:[%s1246 + $0x168] sm:$0xe]
  %v2140 = vld [vmem:[%s1246 + $0x174] sm:$0xe]
  %v2141 = vld [vmem:[%s1246 + $0x180] sm:$0xe]
  %v2142 = vld [vmem:[%s1246 + $0x18c] sm:$0xe]
  %v2239 = vrot.slane %v2111, 5
  %v2240 = vrot.slane %v2239, 4
  %v2241 = vrot.slane %v1248, 5
  %v2242 = vsel %vm1021, %v2240, %v2241
  %v2243 = vrot.slane %v2241, 4
  %v2244 = vrot.slane %v1311, 5
  %v2245 = vsel %vm1021, %v2243, %v2244
  %v2246 = vrot.slane %v2112, 5
  %v2247 = vrot.slane %v2246, 4
  %v2248 = vrot.slane %v1250, 5
  %v2249 = vsel %vm1021, %v2247, %v2248
  %v2250 = vrot.slane %v2248, 4
  %v2251 = vrot.slane %v1312, 5
  %v2252 = vsel %vm1021, %v2250, %v2251
  %v2253 = vrot.slane %v2113, 5
  %v2254 = vrot.slane %v2253, 4
  %v2255 = vrot.slane %v1252, 5
  %v2256 = vsel %vm1021, %v2254, %v2255
  %v2257 = vrot.slane %v2255, 4
  %v2258 = vrot.slane %v1313, 5
  %v2259 = vsel %vm1021, %v2257, %v2258
  %v2260 = vrot.slane %v2114, 5
  %v2261 = vrot.slane %v2260, 4
  %v2262 = vrot.slane %v1254, 5
  %v2263 = vsel %vm1021, %v2261, %v2262
  %v2264 = vrot.slane %v2262, 4
  %v2265 = vrot.slane %v1314, 5
  %v2266 = vsel %vm1021, %v2264, %v2265
  %v2267 = vrot.slane %v2115, 5
  %v2268 = vrot.slane %v2267, 4
  %v2269 = vrot.slane %v1256, 5
  %v2270 = vsel %vm1021, %v2268, %v2269
  %v2271 = vrot.slane %v2269, 4
  %v2272 = vrot.slane %v1315, 5
  %v2273 = vsel %vm1021, %v2271, %v2272
  %v2274 = vrot.slane %v2116, 5
  %v2275 = vrot.slane %v2274, 4
  %v2276 = vrot.slane %v1258, 5
  %v2277 = vsel %vm1021, %v2275, %v2276
  %v2278 = vrot.slane %v2276, 4
  %v2279 = vrot.slane %v1316, 5
  %v2280 = vsel %vm1021, %v2278, %v2279
  %v2281 = vrot.slane %v2117, 5
  %v2282 = vrot.slane %v2281, 4
  %v2283 = vrot.slane %v1260, 5
  %v2284 = vsel %vm1021, %v2282, %v2283
  %v2285 = vrot.slane %v2283, 4
  %v2286 = vrot.slane %v1317, 5
  %v2287 = vsel %vm1021, %v2285, %v2286
  %v2288 = vrot.slane %v2118, 5
  %v2289 = vrot.slane %v2288, 4
  %v2290 = vrot.slane %v1262, 5
  %v2291 = vsel %vm1021, %v2289, %v2290
  %v2292 = vrot.slane %v2290, 4
  %v2293 = vrot.slane %v1318, 5
  %v2294 = vsel %vm1021, %v2292, %v2293
  %v2295 = vrot.slane %v2119, 5
  %v2296 = vrot.slane %v2295, 4
  %v2297 = vrot.slane %v1264, 5
  %v2298 = vsel %vm1021, %v2296, %v2297
  %v2299 = vrot.slane %v2297, 4
  %v2300 = vrot.slane %v1319, 5
  %v2301 = vsel %vm1021, %v2299, %v2300
  %v2302 = vrot.slane %v2120, 5
  %v2303 = vrot.slane %v2302, 4
  %v2304 = vrot.slane %v1266, 5
  %v2305 = vsel %vm1021, %v2303, %v2304
  %v2306 = vrot.slane %v2304, 4
  %v2307 = vrot.slane %v1320, 5
  %v2308 = vsel %vm1021, %v2306, %v2307
  %v2309 = vrot.slane %v2121, 5
  %v2310 = vrot.slane %v2309, 4
  %v2311 = vrot.slane %v1268, 5
  %v2312 = vsel %vm1021, %v2310, %v2311
  %v2313 = vrot.slane %v2311, 4
  %v2314 = vrot.slane %v1321, 5
  %v2315 = vsel %vm1021, %v2313, %v2314
  %v2316 = vrot.slane %v2122, 5
  %v2317 = vrot.slane %v2316, 4
  %v2318 = vrot.slane %v1270, 5
  %v2319 = vsel %vm1021, %v2317, %v2318
  %v2320 = vrot.slane %v2318, 4
  %v2321 = vrot.slane %v1322, 5
  %v2322 = vsel %vm1021, %v2320, %v2321
  %v2323 = vrot.slane %v2123, 5
  %v2324 = vrot.slane %v2323, 4
  %v2325 = vrot.slane %v1272, 5
  %v2326 = vsel %vm1021, %v2324, %v2325
  %v2327 = vrot.slane %v2325, 4
  %v2328 = vrot.slane %v1323, 5
  %v2329 = vsel %vm1021, %v2327, %v2328
  %v2330 = vrot.slane %v2124, 5
  %v2331 = vrot.slane %v2330, 4
  %v2332 = vrot.slane %v1274, 5
  %v2333 = vsel %vm1021, %v2331, %v2332
  %v2334 = vrot.slane %v2332, 4
  %v2335 = vrot.slane %v1324, 5
  %v2336 = vsel %vm1021, %v2334, %v2335
  %v2337 = vrot.slane %v2125, 5
  %v2338 = vrot.slane %v2337, 4
  %v2339 = vrot.slane %v1276, 5
  %v2340 = vsel %vm1021, %v2338, %v2339
  %v2341 = vrot.slane %v2339, 4
  %v2342 = vrot.slane %v1325, 5
  %v2343 = vsel %vm1021, %v2341, %v2342
  %v2344 = vrot.slane %v2126, 5
  %v2345 = vrot.slane %v2344, 4
  %v2346 = vrot.slane %v1278, 5
  %v2347 = vsel %vm1021, %v2345, %v2346
  %v2348 = vrot.slane %v2346, 4
  %v2349 = vrot.slane %v1326, 5
  %v2350 = vsel %vm1021, %v2348, %v2349
  %v2351 = vrot.slane %v2127, 5
  %v2352 = vrot.slane %v2351, 4
  %v2353 = vrot.slane %v1280, 5
  %v2354 = vsel %vm1021, %v2352, %v2353
  %v2355 = vrot.slane %v2353, 4
  %v2356 = vrot.slane %v1327, 5
  %v2357 = vsel %vm1021, %v2355, %v2356
  %v2358 = vrot.slane %v2128, 5
  %v2359 = vrot.slane %v2358, 4
  %v2360 = vrot.slane %v1282, 5
  %v2361 = vsel %vm1021, %v2359, %v2360
  %v2362 = vrot.slane %v2360, 4
  %v2363 = vrot.slane %v1328, 5
  %v2364 = vsel %vm1021, %v2362, %v2363
  %v2365 = vrot.slane %v2129, 5
  %v2366 = vrot.slane %v2365, 4
  %v2367 = vrot.slane %v1284, 5
  %v2368 = vsel %vm1021, %v2366, %v2367
  %v2369 = vrot.slane %v2367, 4
  %v2370 = vrot.slane %v1329, 5
  %v2371 = vsel %vm1021, %v2369, %v2370
  %v2372 = vrot.slane %v2130, 5
  %v2373 = vrot.slane %v2372, 4
  %v2374 = vrot.slane %v1286, 5
  %v2375 = vsel %vm1021, %v2373, %v2374
  %v2376 = vrot.slane %v2374, 4
  %v2377 = vrot.slane %v1330, 5
  %v2378 = vsel %vm1021, %v2376, %v2377
  %v2379 = vrot.slane %v2131, 5
  %v2380 = vrot.slane %v2379, 4
  %v2381 = vrot.slane %v1288, 5
  %v2382 = vsel %vm1021, %v2380, %v2381
  %v2383 = vrot.slane %v2381, 4
  %v2384 = vrot.slane %v1331, 5
  %v2385 = vsel %vm1021, %v2383, %v2384
  %v2386 = vrot.slane %v2132, 5
  %v2387 = vrot.slane %v2386, 4
  %v2388 = vrot.slane %v1290, 5
  %v2389 = vsel %vm1021, %v2387, %v2388
  %v2390 = vrot.slane %v2388, 4
  %v2391 = vrot.slane %v1332, 5
  %v2392 = vsel %vm1021, %v2390, %v2391
  %v2393 = vrot.slane %v2133, 5
  %v2394 = vrot.slane %v2393, 4
  %v2395 = vrot.slane %v1292, 5
  %v2396 = vsel %vm1021, %v2394, %v2395
  %v2397 = vrot.slane %v2395, 4
  %v2398 = vrot.slane %v1333, 5
  %v2399 = vsel %vm1021, %v2397, %v2398
  %v2400 = vrot.slane %v2134, 5
  %v2401 = vrot.slane %v2400, 4
  %v2402 = vrot.slane %v1294, 5
  %v2403 = vsel %vm1021, %v2401, %v2402
  %v2404 = vrot.slane %v2402, 4
  %v2405 = vrot.slane %v1334, 5
  %v2406 = vsel %vm1021, %v2404, %v2405
  %v2407 = vrot.slane %v2135, 5
  %v2408 = vrot.slane %v2407, 4
  %v2409 = vrot.slane %v1296, 5
  %v2410 = vsel %vm1021, %v2408, %v2409
  %v2411 = vrot.slane %v2409, 4
  %v2412 = vrot.slane %v1335, 5
  %v2413 = vsel %vm1021, %v2411, %v2412
  %v2414 = vrot.slane %v2136, 5
  %v2415 = vrot.slane %v2414, 4
  %v2416 = vrot.slane %v1298, 5
  %v2417 = vsel %vm1021, %v2415, %v2416
  %v2418 = vrot.slane %v2416, 4
  %v2419 = vrot.slane %v1336, 5
  %v2420 = vsel %vm1021, %v2418, %v2419
  %v2421 = vrot.slane %v2137, 5
  %v2422 = vrot.slane %v2421, 4
  %v2423 = vrot.slane %v1300, 5
  %v2424 = vsel %vm1021, %v2422, %v2423
  %v2425 = vrot.slane %v2423, 4
  %v2426 = vrot.slane %v1337, 5
  %v2427 = vsel %vm1021, %v2425, %v2426
  %v2428 = vrot.slane %v2138, 5
  %v2429 = vrot.slane %v2428, 4
  %v2430 = vrot.slane %v1302, 5
  %v2431 = vsel %vm1021, %v2429, %v2430
  %v2432 = vrot.slane %v2430, 4
  %v2433 = vrot.slane %v1338, 5
  %v2434 = vsel %vm1021, %v2432, %v2433
  %v2435 = vrot.slane %v2139, 5
  %v2436 = vrot.slane %v2435, 4
  %v2437 = vrot.slane %v1304, 5
  %v2438 = vsel %vm1021, %v2436, %v2437
  %v2439 = vrot.slane %v2437, 4
  %v2440 = vrot.slane %v1339, 5
  %v2441 = vsel %vm1021, %v2439, %v2440
  %v2442 = vrot.slane %v2140, 5
  %v2443 = vrot.slane %v2442, 4
  %v2444 = vrot.slane %v1306, 5
  %v2445 = vsel %vm1021, %v2443, %v2444
  %v2446 = vrot.slane %v2444, 4
  %v2447 = vrot.slane %v1340, 5
  %v2448 = vsel %vm1021, %v2446, %v2447
  %v2449 = vrot.slane %v2141, 5
  %v2450 = vrot.slane %v2449, 4
  %v2451 = vrot.slane %v1308, 5
  %v2452 = vsel %vm1021, %v2450, %v2451
  %v2453 = vrot.slane %v2451, 4
  %v2454 = vrot.slane %v1341, 5
  %v2455 = vsel %vm1021, %v2453, %v2454
  %v2456 = vrot.slane %v2142, 5
  %v2457 = vrot.slane %v2456, 4
  %v2458 = vrot.slane %v1310, 5
  %v2459 = vsel %vm1021, %v2457, %v2458
  %v2460 = vrot.slane %v2458, 4
  %v2461 = vrot.slane %v1342, 5
  %v2462 = vsel %vm1021, %v2460, %v2461
  %s2463 = scalar_lea.vmem %s0, 24
  %v2464 = vld [vmem:[%s2463] sm:$0xf]
  %v2465 = vld [vmem:[%s2463 + $0x4] sm:$0xf]
  %v2466 = vld [vmem:[%s2463 + $0xc] sm:$0xf]
  %v2467 = vld [vmem:[%s2463 + $0x10] sm:$0xf]
  %v2468 = vld [vmem:[%s2463 + $0x18] sm:$0xf]
  %v2469 = vld [vmem:[%s2463 + $0x1c] sm:$0xf]
  %v2470 = vld [vmem:[%s2463 + $0x24] sm:$0xf]
  %v2471 = vld [vmem:[%s2463 + $0x28] sm:$0xf]
  %v2472 = vld [vmem:[%s2463 + $0x30] sm:$0xf]
  %v2473 = vld [vmem:[%s2463 + $0x34] sm:$0xf]
  %v2474 = vld [vmem:[%s2463 + $0x3c] sm:$0xf]
  %v2475 = vld [vmem:[%s2463 + $0x40] sm:$0xf]
  %v2476 = vld [vmem:[%s2463 + $0x48] sm:$0xf]
  %v2477 = vld [vmem:[%s2463 + $0x4c] sm:$0xf]
  %v2478 = vld [vmem:[%s2463 + $0x54] sm:$0xf]
  %v2479 = vld [vmem:[%s2463 + $0x58] sm:$0xf]
  %v2480 = vld [vmem:[%s2463 + $0x60] sm:$0xf]
  %v2481 = vld [vmem:[%s2463 + $0x64] sm:$0xf]
  %v2482 = vld [vmem:[%s2463 + $0x6c] sm:$0xf]
  %v2483 = vld [vmem:[%s2463 + $0x70] sm:$0xf]
  %v2484 = vld [vmem:[%s2463 + $0x78] sm:$0xf]
  %v2485 = vld [vmem:[%s2463 + $0x7c] sm:$0xf]
  %v2486 = vld [vmem:[%s2463 + $0x84] sm:$0xf]
  %v2487 = vld [vmem:[%s2463 + $0x88] sm:$0xf]
  %v2488 = vld [vmem:[%s2463 + $0x90] sm:$0xf]
  %v2489 = vld [vmem:[%s2463 + $0x94] sm:$0xf]
  %v2490 = vld [vmem:[%s2463 + $0x9c] sm:$0xf]
  %v2491 = vld [vmem:[%s2463 + $0xa0] sm:$0xf]
  %v2492 = vld [vmem:[%s2463 + $0xa8] sm:$0xf]
  %v2493 = vld [vmem:[%s2463 + $0xac] sm:$0xf]
  %v2494 = vld [vmem:[%s2463 + $0xb4] sm:$0xf]
  %v2495 = vld [vmem:[%s2463 + $0xb8] sm:$0xf]
  %v2496 = vld [vmem:[%s2463 + $0xd8] sm:$0xf]
  %v2497 = vld [vmem:[%s2463 + $0xdc] sm:$0xf]
  %v2498 = vld [vmem:[%s2463 + $0xe4] sm:$0xf]
  %v2499 = vld [vmem:[%s2463 + $0xe8] sm:$0xf]
  %v2500 = vld [vmem:[%s2463 + $0xf0] sm:$0xf]
  %v2501 = vld [vmem:[%s2463 + $0xf4] sm:$0xf]
  %v2502 = vld [vmem:[%s2463 + $0xfc] sm:$0xf]
  %v2503 = vld [vmem:[%s2463 + $0x100] sm:$0xf]
  %v2504 = vld [vmem:[%s2463 + $0x108] sm:$0xf]
  %v2505 = vld [vmem:[%s2463 + $0x10c] sm:$0xf]
  %v2506 = vld [vmem:[%s2463 + $0x114] sm:$0xf]
  %v2507 = vld [vmem:[%s2463 + $0x118] sm:$0xf]
  %v2508 = vld [vmem:[%s2463 + $0x120] sm:$0xf]
  %v2509 = vld [vmem:[%s2463 + $0x124] sm:$0xf]
  %v2510 = vld [vmem:[%s2463 + $0x12c] sm:$0xf]
  %v2511 = vld [vmem:[%s2463 + $0x130] sm:$0xf]
  %v2512 = vld [vmem:[%s2463 + $0x138] sm:$0xf]
  %v2513 = vld [vmem:[%s2463 + $0x13c] sm:$0xf]
  %v2514 = vld [vmem:[%s2463 + $0x144] sm:$0xf]
  %v2515 = vld [vmem:[%s2463 + $0x148] sm:$0xf]
  %v2516 = vld [vmem:[%s2463 + $0x150] sm:$0xf]
  %v2517 = vld [vmem:[%s2463 + $0x154] sm:$0xf]
  %v2518 = vld [vmem:[%s2463 + $0x15c] sm:$0xf]
  %v2519 = vld [vmem:[%s2463 + $0x160] sm:$0xf]
  %v2520 = vld [vmem:[%s2463 + $0x168] sm:$0xf]
  %v2521 = vld [vmem:[%s2463 + $0x16c] sm:$0xf]
  %v2522 = vld [vmem:[%s2463 + $0x174] sm:$0xf]
  %v2523 = vld [vmem:[%s2463 + $0x178] sm:$0xf]
  %v2524 = vld [vmem:[%s2463 + $0x180] sm:$0xf]
  %v2525 = vld [vmem:[%s2463 + $0x184] sm:$0xf]
  %v2526 = vld [vmem:[%s2463 + $0x18c] sm:$0xf]
  %v2527 = vld [vmem:[%s2463 + $0x190] sm:$0xf]
  %v2528 = vld [vmem:[%s2463 + $0x8] sm:$0x1]
  %v2529 = vld [vmem:[%s2463 + $0x14] sm:$0x1]
  %v2530 = vld [vmem:[%s2463 + $0x20] sm:$0x1]
  %v2531 = vld [vmem:[%s2463 + $0x2c] sm:$0x1]
  %v2532 = vld [vmem:[%s2463 + $0x38] sm:$0x1]
  %v2533 = vld [vmem:[%s2463 + $0x44] sm:$0x1]
  %v2534 = vld [vmem:[%s2463 + $0x50] sm:$0x1]
  %v2535 = vld [vmem:[%s2463 + $0x5c] sm:$0x1]
  %v2536 = vld [vmem:[%s2463 + $0x68] sm:$0x1]
  %v2537 = vld [vmem:[%s2463 + $0x74] sm:$0x1]
  %v2538 = vld [vmem:[%s2463 + $0x80] sm:$0x1]
  %v2539 = vld [vmem:[%s2463 + $0x8c] sm:$0x1]
  %v2540 = vld [vmem:[%s2463 + $0x98] sm:$0x1]
  %v2541 = vld [vmem:[%s2463 + $0xa4] sm:$0x1]
  %v2542 = vld [vmem:[%s2463 + $0xb0] sm:$0x1]
  %v2543 = vld [vmem:[%s2463 + $0xbc] sm:$0x1]
  %v2544 = vld [vmem:[%s2463 + $0xe0] sm:$0x1]
  %v2545 = vld [vmem:[%s2463 + $0xec] sm:$0x1]
  %v2546 = vld [vmem:[%s2463 + $0xf8] sm:$0x1]
  %v2547 = vld [vmem:[%s2463 + $0x104] sm:$0x1]
  %v2548 = vld [vmem:[%s2463 + $0x110] sm:$0x1]
  %v2549 = vld [vmem:[%s2463 + $0x11c] sm:$0x1]
  %v2550 = vld [vmem:[%s2463 + $0x128] sm:$0x1]
  %v2551 = vld [vmem:[%s2463 + $0x134] sm:$0x1]
  %v2552 = vld [vmem:[%s2463 + $0x140] sm:$0x1]
  %v2553 = vld [vmem:[%s2463 + $0x14c] sm:$0x1]
  %v2554 = vld [vmem:[%s2463 + $0x158] sm:$0x1]
  %v2555 = vld [vmem:[%s2463 + $0x164] sm:$0x1]
  %v2556 = vld [vmem:[%s2463 + $0x170] sm:$0x1]
  %v2557 = vld [vmem:[%s2463 + $0x17c] sm:$0x1]
  %v2558 = vld [vmem:[%s2463 + $0x188] sm:$0x1]
  %v2559 = vld [vmem:[%s2463 + $0x194] sm:$0x1]
  %v2561 = vshrl.u32 %v2464, 16
  %v2563 = vrot.slane %v2561, 4
  %v2564 = vshll.u32 %v2464, 16
  %v2566 = vrot.slane %v2564, 5
  %v2567 = vor.u32 %v2563, %v2566
  %v2568 = vrot.slane %v2567, 4
  %v2570 = vshll.u32 %v2465, 16
  %v2572 = vrot.slane %v2570, 5
  %v2573 = vsel %vm122, %v2568, %v2572
  %v2574 = vshrl.u32 %v2465, 16
  %v2576 = vrot.slane %v2574, 4
  %v2577 = vor.u32 %v2576, %v2572
  %v2578 = vrot.slane %v2577, 4
  %v2580 = vshll.u32 %v2528, 16
  %v2582 = vrot.slane %v2580, 5
  %v2583 = vsel %vm122, %v2578, %v2582
  %v2585 = vshrl.u32 %v2466, 16
  %v2587 = vrot.slane %v2585, 4
  %v2588 = vshll.u32 %v2466, 16
  %v2590 = vrot.slane %v2588, 5
  %v2591 = vor.u32 %v2587, %v2590
  %v2592 = vrot.slane %v2591, 4
  %v2594 = vshll.u32 %v2467, 16
  %v2596 = vrot.slane %v2594, 5
  %v2597 = vsel %vm122, %v2592, %v2596
  %v2598 = vshrl.u32 %v2467, 16
  %v2600 = vrot.slane %v2598, 4
  %v2601 = vor.u32 %v2600, %v2596
  %v2602 = vrot.slane %v2601, 4
  %v2604 = vshll.u32 %v2529, 16
  %v2606 = vrot.slane %v2604, 5
  %v2607 = vsel %vm122, %v2602, %v2606
  %v2609 = vshrl.u32 %v2468, 16
  %v2611 = vrot.slane %v2609, 4
  %v2612 = vshll.u32 %v2468, 16
  %v2614 = vrot.slane %v2612, 5
  %v2615 = vor.u32 %v2611, %v2614
  %v2616 = vrot.slane %v2615, 4
  %v2618 = vshll.u32 %v2469, 16
  %v2620 = vrot.slane %v2618, 5
  %v2621 = vsel %vm122, %v2616, %v2620
  %v2622 = vshrl.u32 %v2469, 16
  %v2624 = vrot.slane %v2622, 4
  %v2625 = vor.u32 %v2624, %v2620
  %v2626 = vrot.slane %v2625, 4
  %v2628 = vshll.u32 %v2530, 16
  %v2630 = vrot.slane %v2628, 5
  %v2631 = vsel %vm122, %v2626, %v2630
  %v2633 = vshrl.u32 %v2470, 16
  %v2635 = vrot.slane %v2633, 4
  %v2636 = vshll.u32 %v2470, 16
  %v2638 = vrot.slane %v2636, 5
  %v2639 = vor.u32 %v2635, %v2638
  %v2640 = vrot.slane %v2639, 4
  %v2642 = vshll.u32 %v2471, 16
  %v2644 = vrot.slane %v2642, 5
  %v2645 = vsel %vm122, %v2640, %v2644
  %v2646 = vshrl.u32 %v2471, 16
  %v2648 = vrot.slane %v2646, 4
  %v2649 = vor.u32 %v2648, %v2644
  %v2650 = vrot.slane %v2649, 4
  %v2652 = vshll.u32 %v2531, 16
  %v2654 = vrot.slane %v2652, 5
  %v2655 = vsel %vm122, %v2650, %v2654
  %v2657 = vshrl.u32 %v2472, 16
  %v2659 = vrot.slane %v2657, 4
  %v2660 = vshll.u32 %v2472, 16
  %v2662 = vrot.slane %v2660, 5
  %v2663 = vor.u32 %v2659, %v2662
  %v2664 = vrot.slane %v2663, 4
  %v2666 = vshll.u32 %v2473, 16
  %v2668 = vrot.slane %v2666, 5
  %v2669 = vsel %vm122, %v2664, %v2668
  %v2670 = vshrl.u32 %v2473, 16
  %v2672 = vrot.slane %v2670, 4
  %v2673 = vor.u32 %v2672, %v2668
  %v2674 = vrot.slane %v2673, 4
  %v2676 = vshll.u32 %v2532, 16
  %v2678 = vrot.slane %v2676, 5
  %v2679 = vsel %vm122, %v2674, %v2678
  %v2681 = vshrl.u32 %v2474, 16
  %v2683 = vrot.slane %v2681, 4
  %v2684 = vshll.u32 %v2474, 16
  %v2686 = vrot.slane %v2684, 5
  %v2687 = vor.u32 %v2683, %v2686
  %v2688 = vrot.slane %v2687, 4
  %v2690 = vshll.u32 %v2475, 16
  %v2692 = vrot.slane %v2690, 5
  %v2693 = vsel %vm122, %v2688, %v2692
  %v2694 = vshrl.u32 %v2475, 16
  %v2696 = vrot.slane %v2694, 4
  %v2697 = vor.u32 %v2696, %v2692
  %v2698 = vrot.slane %v2697, 4
  %v2700 = vshll.u32 %v2533, 16
  %v2702 = vrot.slane %v2700, 5
  %v2703 = vsel %vm122, %v2698, %v2702
  %v2705 = vshrl.u32 %v2476, 16
  %v2707 = vrot.slane %v2705, 4
  %v2708 = vshll.u32 %v2476, 16
  %v2710 = vrot.slane %v2708, 5
  %v2711 = vor.u32 %v2707, %v2710
  %v2712 = vrot.slane %v2711, 4
  %v2714 = vshll.u32 %v2477, 16
  %v2716 = vrot.slane %v2714, 5
  %v2717 = vsel %vm122, %v2712, %v2716
  %v2718 = vshrl.u32 %v2477, 16
  %v2720 = vrot.slane %v2718, 4
  %v2721 = vor.u32 %v2720, %v2716
  %v2722 = vrot.slane %v2721, 4
  %v2724 = vshll.u32 %v2534, 16
  %v2726 = vrot.slane %v2724, 5
  %v2727 = vsel %vm122, %v2722, %v2726
  %v2729 = vshrl.u32 %v2478, 16
  %v2731 = vrot.slane %v2729, 4
  %v2732 = vshll.u32 %v2478, 16
  %v2734 = vrot.slane %v2732, 5
  %v2735 = vor.u32 %v2731, %v2734
  %v2736 = vrot.slane %v2735, 4
  %v2738 = vshll.u32 %v2479, 16
  %v2740 = vrot.slane %v2738, 5
  %v2741 = vsel %vm122, %v2736, %v2740
  %v2742 = vshrl.u32 %v2479, 16
  %v2744 = vrot.slane %v2742, 4
  %v2745 = vor.u32 %v2744, %v2740
  %v2746 = vrot.slane %v2745, 4
  %v2748 = vshll.u32 %v2535, 16
  %v2750 = vrot.slane %v2748, 5
  %v2751 = vsel %vm122, %v2746, %v2750
  %v2753 = vshrl.u32 %v2480, 16
  %v2755 = vrot.slane %v2753, 4
  %v2756 = vshll.u32 %v2480, 16
  %v2758 = vrot.slane %v2756, 5
  %v2759 = vor.u32 %v2755, %v2758
  %v2760 = vrot.slane %v2759, 4
  %v2762 = vshll.u32 %v2481, 16
  %v2764 = vrot.slane %v2762, 5
  %v2765 = vsel %vm122, %v2760, %v2764
  %v2766 = vshrl.u32 %v2481, 16
  %v2768 = vrot.slane %v2766, 4
  %v2769 = vor.u32 %v2768, %v2764
  %v2770 = vrot.slane %v2769, 4
  %v2772 = vshll.u32 %v2536, 16
  %v2774 = vrot.slane %v2772, 5
  %v2775 = vsel %vm122, %v2770, %v2774
  %v2777 = vshrl.u32 %v2482, 16
  %v2779 = vrot.slane %v2777, 4
  %v2780 = vshll.u32 %v2482, 16
  %v2782 = vrot.slane %v2780, 5
  %v2783 = vor.u32 %v2779, %v2782
  %v2784 = vrot.slane %v2783, 4
  %v2786 = vshll.u32 %v2483, 16
  %v2788 = vrot.slane %v2786, 5
  %v2789 = vsel %vm122, %v2784, %v2788
  %v2790 = vshrl.u32 %v2483, 16
  %v2792 = vrot.slane %v2790, 4
  %v2793 = vor.u32 %v2792, %v2788
  %v2794 = vrot.slane %v2793, 4
  %v2796 = vshll.u32 %v2537, 16
  %v2798 = vrot.slane %v2796, 5
  %v2799 = vsel %vm122, %v2794, %v2798
  %v2801 = vshrl.u32 %v2484, 16
  %v2803 = vrot.slane %v2801, 4
  %v2804 = vshll.u32 %v2484, 16
  %v2806 = vrot.slane %v2804, 5
  %v2807 = vor.u32 %v2803, %v2806
  %v2808 = vrot.slane %v2807, 4
  %v2810 = vshll.u32 %v2485, 16
  %v2812 = vrot.slane %v2810, 5
  %v2813 = vsel %vm122, %v2808, %v2812
  %v2814 = vshrl.u32 %v2485, 16
  %v2816 = vrot.slane %v2814, 4
  %v2817 = vor.u32 %v2816, %v2812
  %v2818 = vrot.slane %v2817, 4
  %v2820 = vshll.u32 %v2538, 16
  %v2822 = vrot.slane %v2820, 5
  %v2823 = vsel %vm122, %v2818, %v2822
  %v2825 = vshrl.u32 %v2486, 16
  %v2827 = vrot.slane %v2825, 4
  %v2828 = vshll.u32 %v2486, 16
  %v2830 = vrot.slane %v2828, 5
  %v2831 = vor.u32 %v2827, %v2830
  %v2832 = vrot.slane %v2831, 4
  %v2834 = vshll.u32 %v2487, 16
  %v2836 = vrot.slane %v2834, 5
  %v2837 = vsel %vm122, %v2832, %v2836
  %v2838 = vshrl.u32 %v2487, 16
  %v2840 = vrot.slane %v2838, 4
  %v2841 = vor.u32 %v2840, %v2836
  %v2842 = vrot.slane %v2841, 4
  %v2844 = vshll.u32 %v2539, 16
  %v2846 = vrot.slane %v2844, 5
  %v2847 = vsel %vm122, %v2842, %v2846
  %v2849 = vshrl.u32 %v2488, 16
  %v2851 = vrot.slane %v2849, 4
  %v2852 = vshll.u32 %v2488, 16
  %v2854 = vrot.slane %v2852, 5
  %v2855 = vor.u32 %v2851, %v2854
  %v2856 = vrot.slane %v2855, 4
  %v2858 = vshll.u32 %v2489, 16
  %v2860 = vrot.slane %v2858, 5
  %v2861 = vsel %vm122, %v2856, %v2860
  %v2862 = vshrl.u32 %v2489, 16
  %v2864 = vrot.slane %v2862, 4
  %v2865 = vor.u32 %v2864, %v2860
  %v2866 = vrot.slane %v2865, 4
  %v2868 = vshll.u32 %v2540, 16
  %v2870 = vrot.slane %v2868, 5
  %v2871 = vsel %vm122, %v2866, %v2870
  %v2873 = vshrl.u32 %v2490, 16
  %v2875 = vrot.slane %v2873, 4
  %v2876 = vshll.u32 %v2490, 16
  %v2878 = vrot.slane %v2876, 5
  %v2879 = vor.u32 %v2875, %v2878
  %v2880 = vrot.slane %v2879, 4
  %v2882 = vshll.u32 %v2491, 16
  %v2884 = vrot.slane %v2882, 5
  %v2885 = vsel %vm122, %v2880, %v2884
  %v2886 = vshrl.u32 %v2491, 16
  %v2888 = vrot.slane %v2886, 4
  %v2889 = vor.u32 %v2888, %v2884
  %v2890 = vrot.slane %v2889, 4
  %v2892 = vshll.u32 %v2541, 16
  %v2894 = vrot.slane %v2892, 5
  %v2895 = vsel %vm122, %v2890, %v2894
  %v2897 = vshrl.u32 %v2492, 16
  %v2899 = vrot.slane %v2897, 4
  %v2900 = vshll.u32 %v2492, 16
  %v2902 = vrot.slane %v2900, 5
  %v2903 = vor.u32 %v2899, %v2902
  %v2904 = vrot.slane %v2903, 4
  %v2906 = vshll.u32 %v2493, 16
  %v2908 = vrot.slane %v2906, 5
  %v2909 = vsel %vm122, %v2904, %v2908
  %v2910 = vshrl.u32 %v2493, 16
  %v2912 = vrot.slane %v2910, 4
  %v2913 = vor.u32 %v2912, %v2908
  %v2914 = vrot.slane %v2913, 4
  %v2916 = vshll.u32 %v2542, 16
  %v2918 = vrot.slane %v2916, 5
  %v2919 = vsel %vm122, %v2914, %v2918
  %v2921 = vshrl.u32 %v2494, 16
  %v2923 = vrot.slane %v2921, 4
  %v2924 = vshll.u32 %v2494, 16
  %v2926 = vrot.slane %v2924, 5
  %v2927 = vor.u32 %v2923, %v2926
  %v2928 = vrot.slane %v2927, 4
  %v2930 = vshll.u32 %v2495, 16
  %v2932 = vrot.slane %v2930, 5
  %v2933 = vsel %vm122, %v2928, %v2932
  %v2934 = vshrl.u32 %v2495, 16
  %v2936 = vrot.slane %v2934, 4
  %v2937 = vor.u32 %v2936, %v2932
  %v2938 = vrot.slane %v2937, 4
  %v2940 = vshll.u32 %v2543, 16
  %v2942 = vrot.slane %v2940, 5
  %v2943 = vsel %vm122, %v2938, %v2942
  %v2945 = vshrl.u32 %v2496, 16
  %v2947 = vrot.slane %v2945, 4
  %v2948 = vshll.u32 %v2496, 16
  %v2950 = vrot.slane %v2948, 5
  %v2951 = vor.u32 %v2947, %v2950
  %v2952 = vrot.slane %v2951, 4
  %v2954 = vshll.u32 %v2497, 16
  %v2956 = vrot.slane %v2954, 5
  %v2957 = vsel %vm122, %v2952, %v2956
  %v2958 = vshrl.u32 %v2497, 16
  %v2960 = vrot.slane %v2958, 4
  %v2961 = vor.u32 %v2960, %v2956
  %v2962 = vrot.slane %v2961, 4
  %v2964 = vshll.u32 %v2544, 16
  %v2966 = vrot.slane %v2964, 5
  %v2967 = vsel %vm122, %v2962, %v2966
  %v2969 = vshrl.u32 %v2498, 16
  %v2971 = vrot.slane %v2969, 4
  %v2972 = vshll.u32 %v2498, 16
  %v2974 = vrot.slane %v2972, 5
  %v2975 = vor.u32 %v2971, %v2974
  %v2976 = vrot.slane %v2975, 4
  %v2978 = vshll.u32 %v2499, 16
  %v2980 = vrot.slane %v2978, 5
  %v2981 = vsel %vm122, %v2976, %v2980
  %v2982 = vshrl.u32 %v2499, 16
  %v2984 = vrot.slane %v2982, 4
  %v2985 = vor.u32 %v2984, %v2980
  %v2986 = vrot.slane %v2985, 4
  %v2988 = vshll.u32 %v2545, 16
  %v2990 = vrot.slane %v2988, 5
  %v2991 = vsel %vm122, %v2986, %v2990
  %v2993 = vshrl.u32 %v2500, 16
  %v2995 = vrot.slane %v2993, 4
  %v2996 = vshll.u32 %v2500, 16
  %v2998 = vrot.slane %v2996, 5
  %v2999 = vor.u32 %v2995, %v2998
  %v3000 = vrot.slane %v2999, 4
  %v3002 = vshll.u32 %v2501, 16
  %v3004 = vrot.slane %v3002, 5
  %v3005 = vsel %vm122, %v3000, %v3004
  %v3006 = vshrl.u32 %v2501, 16
  %v3008 = vrot.slane %v3006, 4
  %v3009 = vor.u32 %v3008, %v3004
  %v3010 = vrot.slane %v3009, 4
  %v3012 = vshll.u32 %v2546, 16
  %v3014 = vrot.slane %v3012, 5
  %v3015 = vsel %vm122, %v3010, %v3014
  %v3017 = vshrl.u32 %v2502, 16
  %v3019 = vrot.slane %v3017, 4
  %v3020 = vshll.u32 %v2502, 16
  %v3022 = vrot.slane %v3020, 5
  %v3023 = vor.u32 %v3019, %v3022
  %v3024 = vrot.slane %v3023, 4
  %v3026 = vshll.u32 %v2503, 16
  %v3028 = vrot.slane %v3026, 5
  %v3029 = vsel %vm122, %v3024, %v3028
  %v3030 = vshrl.u32 %v2503, 16
  %v3032 = vrot.slane %v3030, 4
  %v3033 = vor.u32 %v3032, %v3028
  %v3034 = vrot.slane %v3033, 4
  %v3036 = vshll.u32 %v2547, 16
  %v3038 = vrot.slane %v3036, 5
  %v3039 = vsel %vm122, %v3034, %v3038
  %v3041 = vshrl.u32 %v2504, 16
  %v3043 = vrot.slane %v3041, 4
  %v3044 = vshll.u32 %v2504, 16
  %v3046 = vrot.slane %v3044, 5
  %v3047 = vor.u32 %v3043, %v3046
  %v3048 = vrot.slane %v3047, 4
  %v3050 = vshll.u32 %v2505, 16
  %v3052 = vrot.slane %v3050, 5
  %v3053 = vsel %vm122, %v3048, %v3052
  %v3054 = vshrl.u32 %v2505, 16
  %v3056 = vrot.slane %v3054, 4
  %v3057 = vor.u32 %v3056, %v3052
  %v3058 = vrot.slane %v3057, 4
  %v3060 = vshll.u32 %v2548, 16
  %v3062 = vrot.slane %v3060, 5
  %v3063 = vsel %vm122, %v3058, %v3062
  %v3065 = vshrl.u32 %v2506, 16
  %v3067 = vrot.slane %v3065, 4
  %v3068 = vshll.u32 %v2506, 16
  %v3070 = vrot.slane %v3068, 5
  %v3071 = vor.u32 %v3067, %v3070
  %v3072 = vrot.slane %v3071, 4
  %v3074 = vshll.u32 %v2507, 16
  %v3076 = vrot.slane %v3074, 5
  %v3077 = vsel %vm122, %v3072, %v3076
  %v3078 = vshrl.u32 %v2507, 16
  %v3080 = vrot.slane %v3078, 4
  %v3081 = vor.u32 %v3080, %v3076
  %v3082 = vrot.slane %v3081, 4
  %v3084 = vshll.u32 %v2549, 16
  %v3086 = vrot.slane %v3084, 5
  %v3087 = vsel %vm122, %v3082, %v3086
  %v3089 = vshrl.u32 %v2508, 16
  %v3091 = vrot.slane %v3089, 4
  %v3092 = vshll.u32 %v2508, 16
  %v3094 = vrot.slane %v3092, 5
  %v3095 = vor.u32 %v3091, %v3094
  %v3096 = vrot.slane %v3095, 4
  %v3098 = vshll.u32 %v2509, 16
  %v3100 = vrot.slane %v3098, 5
  %v3101 = vsel %vm122, %v3096, %v3100
  %v3102 = vshrl.u32 %v2509, 16
  %v3104 = vrot.slane %v3102, 4
  %v3105 = vor.u32 %v3104, %v3100
  %v3106 = vrot.slane %v3105, 4
  %v3108 = vshll.u32 %v2550, 16
  %v3110 = vrot.slane %v3108, 5
  %v3111 = vsel %vm122, %v3106, %v3110
  %v3113 = vshrl.u32 %v2510, 16
  %v3115 = vrot.slane %v3113, 4
  %v3116 = vshll.u32 %v2510, 16
  %v3118 = vrot.slane %v3116, 5
  %v3119 = vor.u32 %v3115, %v3118
  %v3120 = vrot.slane %v3119, 4
  %v3122 = vshll.u32 %v2511, 16
  %v3124 = vrot.slane %v3122, 5
  %v3125 = vsel %vm122, %v3120, %v3124
  %v3126 = vshrl.u32 %v2511, 16
  %v3128 = vrot.slane %v3126, 4
  %v3129 = vor.u32 %v3128, %v3124
  %v3130 = vrot.slane %v3129, 4
  %v3132 = vshll.u32 %v2551, 16
  %v3134 = vrot.slane %v3132, 5
  %v3135 = vsel %vm122, %v3130, %v3134
  %v3137 = vshrl.u32 %v2512, 16
  %v3139 = vrot.slane %v3137, 4
  %v3140 = vshll.u32 %v2512, 16
  %v3142 = vrot.slane %v3140, 5
  %v3143 = vor.u32 %v3139, %v3142
  %v3144 = vrot.slane %v3143, 4
  %v3146 = vshll.u32 %v2513, 16
  %v3148 = vrot.slane %v3146, 5
  %v3149 = vsel %vm122, %v3144, %v3148
  %v3150 = vshrl.u32 %v2513, 16
  %v3152 = vrot.slane %v3150, 4
  %v3153 = vor.u32 %v3152, %v3148
  %v3154 = vrot.slane %v3153, 4
  %v3156 = vshll.u32 %v2552, 16
  %v3158 = vrot.slane %v3156, 5
  %v3159 = vsel %vm122, %v3154, %v3158
  %v3161 = vshrl.u32 %v2514, 16
  %v3163 = vrot.slane %v3161, 4
  %v3164 = vshll.u32 %v2514, 16
  %v3166 = vrot.slane %v3164, 5
  %v3167 = vor.u32 %v3163, %v3166
  %v3168 = vrot.slane %v3167, 4
  %v3170 = vshll.u32 %v2515, 16
  %v3172 = vrot.slane %v3170, 5
  %v3173 = vsel %vm122, %v3168, %v3172
  %v3174 = vshrl.u32 %v2515, 16
  %v3176 = vrot.slane %v3174, 4
  %v3177 = vor.u32 %v3176, %v3172
  %v3178 = vrot.slane %v3177, 4
  %v3180 = vshll.u32 %v2553, 16
  %v3182 = vrot.slane %v3180, 5
  %v3183 = vsel %vm122, %v3178, %v3182
  %v3185 = vshrl.u32 %v2516, 16
  %v3187 = vrot.slane %v3185, 4
  %v3188 = vshll.u32 %v2516, 16
  %v3190 = vrot.slane %v3188, 5
  %v3191 = vor.u32 %v3187, %v3190
  %v3192 = vrot.slane %v3191, 4
  %v3194 = vshll.u32 %v2517, 16
  %v3196 = vrot.slane %v3194, 5
  %v3197 = vsel %vm122, %v3192, %v3196
  %v3198 = vshrl.u32 %v2517, 16
  %v3200 = vrot.slane %v3198, 4
  %v3201 = vor.u32 %v3200, %v3196
  %v3202 = vrot.slane %v3201, 4
  %v3204 = vshll.u32 %v2554, 16
  %v3206 = vrot.slane %v3204, 5
  %v3207 = vsel %vm122, %v3202, %v3206
  %v3209 = vshrl.u32 %v2518, 16
  %v3211 = vrot.slane %v3209, 4
  %v3212 = vshll.u32 %v2518, 16
  %v3214 = vrot.slane %v3212, 5
  %v3215 = vor.u32 %v3211, %v3214
  %v3216 = vrot.slane %v3215, 4
  %v3218 = vshll.u32 %v2519, 16
  %v3220 = vrot.slane %v3218, 5
  %v3221 = vsel %vm122, %v3216, %v3220
  %v3222 = vshrl.u32 %v2519, 16
  %v3224 = vrot.slane %v3222, 4
  %v3225 = vor.u32 %v3224, %v3220
  %v3226 = vrot.slane %v3225, 4
  %v3228 = vshll.u32 %v2555, 16
  %v3230 = vrot.slane %v3228, 5
  %v3231 = vsel %vm122, %v3226, %v3230
  %v3233 = vshrl.u32 %v2520, 16
  %v3235 = vrot.slane %v3233, 4
  %v3236 = vshll.u32 %v2520, 16
  %v3238 = vrot.slane %v3236, 5
  %v3239 = vor.u32 %v3235, %v3238
  %v3240 = vrot.slane %v3239, 4
  %v3242 = vshll.u32 %v2521, 16
  %v3244 = vrot.slane %v3242, 5
  %v3245 = vsel %vm122, %v3240, %v3244
  %v3246 = vshrl.u32 %v2521, 16
  %v3248 = vrot.slane %v3246, 4
  %v3249 = vor.u32 %v3248, %v3244
  %v3250 = vrot.slane %v3249, 4
  %v3252 = vshll.u32 %v2556, 16
  %v3254 = vrot.slane %v3252, 5
  %v3255 = vsel %vm122, %v3250, %v3254
  %v3257 = vshrl.u32 %v2522, 16
  %v3259 = vrot.slane %v3257, 4
  %v3260 = vshll.u32 %v2522, 16
  %v3262 = vrot.slane %v3260, 5
  %v3263 = vor.u32 %v3259, %v3262
  %v3264 = vrot.slane %v3263, 4
  %v3266 = vshll.u32 %v2523, 16
  %v3268 = vrot.slane %v3266, 5
  %v3269 = vsel %vm122, %v3264, %v3268
  %v3270 = vshrl.u32 %v2523, 16
  %v3272 = vrot.slane %v3270, 4
  %v3273 = vor.u32 %v3272, %v3268
  %v3274 = vrot.slane %v3273, 4
  %v3276 = vshll.u32 %v2557, 16
  %v3278 = vrot.slane %v3276, 5
  %v3279 = vsel %vm122, %v3274, %v3278
  %v3281 = vshrl.u32 %v2524, 16
  %v3283 = vrot.slane %v3281, 4
  %v3284 = vshll.u32 %v2524, 16
  %v3286 = vrot.slane %v3284, 5
  %v3287 = vor.u32 %v3283, %v3286
  %v3288 = vrot.slane %v3287, 4
  %v3290 = vshll.u32 %v2525, 16
  %v3292 = vrot.slane %v3290, 5
  %v3293 = vsel %vm122, %v3288, %v3292
  %v3294 = vshrl.u32 %v2525, 16
  %v3296 = vrot.slane %v3294, 4
  %v3297 = vor.u32 %v3296, %v3292
  %v3298 = vrot.slane %v3297, 4
  %v3300 = vshll.u32 %v2558, 16
  %v3302 = vrot.slane %v3300, 5
  %v3303 = vsel %vm122, %v3298, %v3302
  %v3305 = vshrl.u32 %v2526, 16
  %v3307 = vrot.slane %v3305, 4
  %v3308 = vshll.u32 %v2526, 16
  %v3310 = vrot.slane %v3308, 5
  %v3311 = vor.u32 %v3307, %v3310
  %v3312 = vrot.slane %v3311, 4
  %v3314 = vshll.u32 %v2527, 16
  %v3316 = vrot.slane %v3314, 5
  %v3317 = vsel %vm122, %v3312, %v3316
  %v3318 = vshrl.u32 %v2527, 16
  %v3320 = vrot.slane %v3318, 4
  %v3321 = vor.u32 %v3320, %v3316
  %v3322 = vrot.slane %v3321, 4
  %v3324 = vshll.u32 %v2559, 16
  %v3326 = vrot.slane %v3324, 5
  %v3327 = vsel %vm122, %v3322, %v3326
  %v3328 = vld [vmem:[%s2463] sm:$0xe]
  %v3329 = vld [vmem:[%s2463 + $0xc] sm:$0xe]
  %v3330 = vld [vmem:[%s2463 + $0x18] sm:$0xe]
  %v3331 = vld [vmem:[%s2463 + $0x24] sm:$0xe]
  %v3332 = vld [vmem:[%s2463 + $0x30] sm:$0xe]
  %v3333 = vld [vmem:[%s2463 + $0x3c] sm:$0xe]
  %v3334 = vld [vmem:[%s2463 + $0x48] sm:$0xe]
  %v3335 = vld [vmem:[%s2463 + $0x54] sm:$0xe]
  %v3336 = vld [vmem:[%s2463 + $0x60] sm:$0xe]
  %v3337 = vld [vmem:[%s2463 + $0x6c] sm:$0xe]
  %v3338 = vld [vmem:[%s2463 + $0x78] sm:$0xe]
  %v3339 = vld [vmem:[%s2463 + $0x84] sm:$0xe]
  %v3340 = vld [vmem:[%s2463 + $0x90] sm:$0xe]
  %v3341 = vld [vmem:[%s2463 + $0x9c] sm:$0xe]
  %v3342 = vld [vmem:[%s2463 + $0xa8] sm:$0xe]
  %v3343 = vld [vmem:[%s2463 + $0xb4] sm:$0xe]
  %v3344 = vld [vmem:[%s2463 + $0xd8] sm:$0xe]
  %v3345 = vld [vmem:[%s2463 + $0xe4] sm:$0xe]
  %v3346 = vld [vmem:[%s2463 + $0xf0] sm:$0xe]
  %v3347 = vld [vmem:[%s2463 + $0xfc] sm:$0xe]
  %v3348 = vld [vmem:[%s2463 + $0x108] sm:$0xe]
  %v3349 = vld [vmem:[%s2463 + $0x114] sm:$0xe]
  %v3350 = vld [vmem:[%s2463 + $0x120] sm:$0xe]
  %v3351 = vld [vmem:[%s2463 + $0x12c] sm:$0xe]
  %v3352 = vld [vmem:[%s2463 + $0x138] sm:$0xe]
  %v3353 = vld [vmem:[%s2463 + $0x144] sm:$0xe]
  %v3354 = vld [vmem:[%s2463 + $0x150] sm:$0xe]
  %v3355 = vld [vmem:[%s2463 + $0x15c] sm:$0xe]
  %v3356 = vld [vmem:[%s2463 + $0x168] sm:$0xe]
  %v3357 = vld [vmem:[%s2463 + $0x174] sm:$0xe]
  %v3358 = vld [vmem:[%s2463 + $0x180] sm:$0xe]
  %v3359 = vld [vmem:[%s2463 + $0x18c] sm:$0xe]
  %v3456 = vrot.slane %v3328, 5
  %v3457 = vrot.slane %v3456, 4
  %v3458 = vrot.slane %v2465, 5
  %v3459 = vsel %vm1021, %v3457, %v3458
  %v3460 = vrot.slane %v3458, 4
  %v3461 = vrot.slane %v2528, 5
  %v3462 = vsel %vm1021, %v3460, %v3461
  %v3463 = vrot.slane %v3329, 5
  %v3464 = vrot.slane %v3463, 4
  %v3465 = vrot.slane %v2467, 5
  %v3466 = vsel %vm1021, %v3464, %v3465
  %v3467 = vrot.slane %v3465, 4
  %v3468 = vrot.slane %v2529, 5
  %v3469 = vsel %vm1021, %v3467, %v3468
  %v3470 = vrot.slane %v3330, 5
  %v3471 = vrot.slane %v3470, 4
  %v3472 = vrot.slane %v2469, 5
  %v3473 = vsel %vm1021, %v3471, %v3472
  %v3474 = vrot.slane %v3472, 4
  %v3475 = vrot.slane %v2530, 5
  %v3476 = vsel %vm1021, %v3474, %v3475
  %v3477 = vrot.slane %v3331, 5
  %v3478 = vrot.slane %v3477, 4
  %v3479 = vrot.slane %v2471, 5
  %v3480 = vsel %vm1021, %v3478, %v3479
  %v3481 = vrot.slane %v3479, 4
  %v3482 = vrot.slane %v2531, 5
  %v3483 = vsel %vm1021, %v3481, %v3482
  %v3484 = vrot.slane %v3332, 5
  %v3485 = vrot.slane %v3484, 4
  %v3486 = vrot.slane %v2473, 5
  %v3487 = vsel %vm1021, %v3485, %v3486
  %v3488 = vrot.slane %v3486, 4
  %v3489 = vrot.slane %v2532, 5
  %v3490 = vsel %vm1021, %v3488, %v3489
  %v3491 = vrot.slane %v3333, 5
  %v3492 = vrot.slane %v3491, 4
  %v3493 = vrot.slane %v2475, 5
  %v3494 = vsel %vm1021, %v3492, %v3493
  %v3495 = vrot.slane %v3493, 4
  %v3496 = vrot.slane %v2533, 5
  %v3497 = vsel %vm1021, %v3495, %v3496
  %v3498 = vrot.slane %v3334, 5
  %v3499 = vrot.slane %v3498, 4
  %v3500 = vrot.slane %v2477, 5
  %v3501 = vsel %vm1021, %v3499, %v3500
  %v3502 = vrot.slane %v3500, 4
  %v3503 = vrot.slane %v2534, 5
  %v3504 = vsel %vm1021, %v3502, %v3503
  %v3505 = vrot.slane %v3335, 5
  %v3506 = vrot.slane %v3505, 4
  %v3507 = vrot.slane %v2479, 5
  %v3508 = vsel %vm1021, %v3506, %v3507
  %v3509 = vrot.slane %v3507, 4
  %v3510 = vrot.slane %v2535, 5
  %v3511 = vsel %vm1021, %v3509, %v3510
  %v3512 = vrot.slane %v3336, 5
  %v3513 = vrot.slane %v3512, 4
  %v3514 = vrot.slane %v2481, 5
  %v3515 = vsel %vm1021, %v3513, %v3514
  %v3516 = vrot.slane %v3514, 4
  %v3517 = vrot.slane %v2536, 5
  %v3518 = vsel %vm1021, %v3516, %v3517
  %v3519 = vrot.slane %v3337, 5
  %v3520 = vrot.slane %v3519, 4
  %v3521 = vrot.slane %v2483, 5
  %v3522 = vsel %vm1021, %v3520, %v3521
  %v3523 = vrot.slane %v3521, 4
  %v3524 = vrot.slane %v2537, 5
  %v3525 = vsel %vm1021, %v3523, %v3524
  %v3526 = vrot.slane %v3338, 5
  %v3527 = vrot.slane %v3526, 4
  %v3528 = vrot.slane %v2485, 5
  %v3529 = vsel %vm1021, %v3527, %v3528
  %v3530 = vrot.slane %v3528, 4
  %v3531 = vrot.slane %v2538, 5
  %v3532 = vsel %vm1021, %v3530, %v3531
  %v3533 = vrot.slane %v3339, 5
  %v3534 = vrot.slane %v3533, 4
  %v3535 = vrot.slane %v2487, 5
  %v3536 = vsel %vm1021, %v3534, %v3535
  %v3537 = vrot.slane %v3535, 4
  %v3538 = vrot.slane %v2539, 5
  %v3539 = vsel %vm1021, %v3537, %v3538
  %v3540 = vrot.slane %v3340, 5
  %v3541 = vrot.slane %v3540, 4
  %v3542 = vrot.slane %v2489, 5
  %v3543 = vsel %vm1021, %v3541, %v3542
  %v3544 = vrot.slane %v3542, 4
  %v3545 = vrot.slane %v2540, 5
  %v3546 = vsel %vm1021, %v3544, %v3545
  %v3547 = vrot.slane %v3341, 5
  %v3548 = vrot.slane %v3547, 4
  %v3549 = vrot.slane %v2491, 5
  %v3550 = vsel %vm1021, %v3548, %v3549
  %v3551 = vrot.slane %v3549, 4
  %v3552 = vrot.slane %v2541, 5
  %v3553 = vsel %vm1021, %v3551, %v3552
  %v3554 = vrot.slane %v3342, 5
  %v3555 = vrot.slane %v3554, 4
  %v3556 = vrot.slane %v2493, 5
  %v3557 = vsel %vm1021, %v3555, %v3556
  %v3558 = vrot.slane %v3556, 4
  %v3559 = vrot.slane %v2542, 5
  %v3560 = vsel %vm1021, %v3558, %v3559
  %v3561 = vrot.slane %v3343, 5
  %v3562 = vrot.slane %v3561, 4
  %v3563 = vrot.slane %v2495, 5
  %v3564 = vsel %vm1021, %v3562, %v3563
  %v3565 = vrot.slane %v3563, 4
  %v3566 = vrot.slane %v2543, 5
  %v3567 = vsel %vm1021, %v3565, %v3566
  %v3568 = vrot.slane %v3344, 5
  %v3569 = vrot.slane %v3568, 4
  %v3570 = vrot.slane %v2497, 5
  %v3571 = vsel %vm1021, %v3569, %v3570
  %v3572 = vrot.slane %v3570, 4
  %v3573 = vrot.slane %v2544, 5
  %v3574 = vsel %vm1021, %v3572, %v3573
  %v3575 = vrot.slane %v3345, 5
  %v3576 = vrot.slane %v3575, 4
  %v3577 = vrot.slane %v2499, 5
  %v3578 = vsel %vm1021, %v3576, %v3577
  %v3579 = vrot.slane %v3577, 4
  %v3580 = vrot.slane %v2545, 5
  %v3581 = vsel %vm1021, %v3579, %v3580
  %v3582 = vrot.slane %v3346, 5
  %v3583 = vrot.slane %v3582, 4
  %v3584 = vrot.slane %v2501, 5
  %v3585 = vsel %vm1021, %v3583, %v3584
  %v3586 = vrot.slane %v3584, 4
  %v3587 = vrot.slane %v2546, 5
  %v3588 = vsel %vm1021, %v3586, %v3587
  %v3589 = vrot.slane %v3347, 5
  %v3590 = vrot.slane %v3589, 4
  %v3591 = vrot.slane %v2503, 5
  %v3592 = vsel %vm1021, %v3590, %v3591
  %v3593 = vrot.slane %v3591, 4
  %v3594 = vrot.slane %v2547, 5
  %v3595 = vsel %vm1021, %v3593, %v3594
  %v3596 = vrot.slane %v3348, 5
  %v3597 = vrot.slane %v3596, 4
  %v3598 = vrot.slane %v2505, 5
  %v3599 = vsel %vm1021, %v3597, %v3598
  %v3600 = vrot.slane %v3598, 4
  %v3601 = vrot.slane %v2548, 5
  %v3602 = vsel %vm1021, %v3600, %v3601
  %v3603 = vrot.slane %v3349, 5
  %v3604 = vrot.slane %v3603, 4
  %v3605 = vrot.slane %v2507, 5
  %v3606 = vsel %vm1021, %v3604, %v3605
  %v3607 = vrot.slane %v3605, 4
  %v3608 = vrot.slane %v2549, 5
  %v3609 = vsel %vm1021, %v3607, %v3608
  %v3610 = vrot.slane %v3350, 5
  %v3611 = vrot.slane %v3610, 4
  %v3612 = vrot.slane %v2509, 5
  %v3613 = vsel %vm1021, %v3611, %v3612
  %v3614 = vrot.slane %v3612, 4
  %v3615 = vrot.slane %v2550, 5
  %v3616 = vsel %vm1021, %v3614, %v3615
  %v3617 = vrot.slane %v3351, 5
  %v3618 = vrot.slane %v3617, 4
  %v3619 = vrot.slane %v2511, 5
  %v3620 = vsel %vm1021, %v3618, %v3619
  %v3621 = vrot.slane %v3619, 4
  %v3622 = vrot.slane %v2551, 5
  %v3623 = vsel %vm1021, %v3621, %v3622
  %v3624 = vrot.slane %v3352, 5
  %v3625 = vrot.slane %v3624, 4
  %v3626 = vrot.slane %v2513, 5
  %v3627 = vsel %vm1021, %v3625, %v3626
  %v3628 = vrot.slane %v3626, 4
  %v3629 = vrot.slane %v2552, 5
  %v3630 = vsel %vm1021, %v3628, %v3629
  %v3631 = vrot.slane %v3353, 5
  %v3632 = vrot.slane %v3631, 4
  %v3633 = vrot.slane %v2515, 5
  %v3634 = vsel %vm1021, %v3632, %v3633
  %v3635 = vrot.slane %v3633, 4
  %v3636 = vrot.slane %v2553, 5
  %v3637 = vsel %vm1021, %v3635, %v3636
  %v3638 = vrot.slane %v3354, 5
  %v3639 = vrot.slane %v3638, 4
  %v3640 = vrot.slane %v2517, 5
  %v3641 = vsel %vm1021, %v3639, %v3640
  %v3642 = vrot.slane %v3640, 4
  %v3643 = vrot.slane %v2554, 5
  %v3644 = vsel %vm1021, %v3642, %v3643
  %v3645 = vrot.slane %v3355, 5
  %v3646 = vrot.slane %v3645, 4
  %v3647 = vrot.slane %v2519, 5
  %v3648 = vsel %vm1021, %v3646, %v3647
  %v3649 = vrot.slane %v3647, 4
  %v3650 = vrot.slane %v2555, 5
  %v3651 = vsel %vm1021, %v3649, %v3650
  %v3652 = vrot.slane %v3356, 5
  %v3653 = vrot.slane %v3652, 4
  %v3654 = vrot.slane %v2521, 5
  %v3655 = vsel %vm1021, %v3653, %v3654
  %v3656 = vrot.slane %v3654, 4
  %v3657 = vrot.slane %v2556, 5
  %v3658 = vsel %vm1021, %v3656, %v3657
  %v3659 = vrot.slane %v3357, 5
  %v3660 = vrot.slane %v3659, 4
  %v3661 = vrot.slane %v2523, 5
  %v3662 = vsel %vm1021, %v3660, %v3661
  %v3663 = vrot.slane %v3661, 4
  %v3664 = vrot.slane %v2557, 5
  %v3665 = vsel %vm1021, %v3663, %v3664
  %v3666 = vrot.slane %v3358, 5
  %v3667 = vrot.slane %v3666, 4
  %v3668 = vrot.slane %v2525, 5
  %v3669 = vsel %vm1021, %v3667, %v3668
  %v3670 = vrot.slane %v3668, 4
  %v3671 = vrot.slane %v2558, 5
  %v3672 = vsel %vm1021, %v3670, %v3671
  %v3673 = vrot.slane %v3359, 5
  %v3674 = vrot.slane %v3673, 4
  %v3675 = vrot.slane %v2527, 5
  %v3676 = vsel %vm1021, %v3674, %v3675
  %v3677 = vrot.slane %v3675, 4
  %v3678 = vrot.slane %v2559, 5
  %v3679 = vsel %vm1021, %v3677, %v3678
  %v3712 = vunpack.c.l.b16 %v24
  %v3713 = vunpack.c.l.b16 %v25
  %v3714 = vunpack.c.l.b16 %v26
  %v3715 = vunpack.c.l.b16 %v27
  %v3716 = vunpack.c.l.b16 %v28
  %v3717 = vunpack.c.l.b16 %v29
  %v3718 = vunpack.c.l.b16 %v30
  %v3719 = vunpack.c.l.b16 %v31
  %v3720 = vunpack.c.l.b16 %v32
  %v3721 = vunpack.c.l.b16 %v33
  %v3722 = vunpack.c.l.b16 %v34
  %v3723 = vunpack.c.l.b16 %v35
  %v3724 = vunpack.c.l.b16 %v36
  %v3725 = vunpack.c.l.b16 %v37
  %v3726 = vunpack.c.l.b16 %v38
  %v3727 = vunpack.c.l.b16 %v39
  %v3728 = vunpack.c.l.b16 %v40
  %v3729 = vunpack.c.l.b16 %v41
  %v3730 = vunpack.c.l.b16 %v42
  %v3731 = vunpack.c.l.b16 %v43
  %v3732 = vunpack.c.l.b16 %v44
  %v3733 = vunpack.c.l.b16 %v45
  %v3734 = vunpack.c.l.b16 %v46
  %v3735 = vunpack.c.l.b16 %v47
  %v3736 = vunpack.c.l.b16 %v48
  %v3737 = vunpack.c.l.b16 %v49
  %v3738 = vunpack.c.l.b16 %v50
  %v3739 = vunpack.c.l.b16 %v51
  %v3740 = vunpack.c.l.b16 %v52
  %v3741 = vunpack.c.l.b16 %v53
  %v3742 = vunpack.c.l.b16 %v54
  %v3743 = vunpack.c.l.b16 %v55
  %v3744 = vunpack.c.l.b16 %v56
  %v3745 = vunpack.c.l.b16 %v57
  %v3746 = vunpack.c.l.b16 %v58
  %v3747 = vunpack.c.l.b16 %v59
  %v3748 = vunpack.c.l.b16 %v60
  %v3749 = vunpack.c.l.b16 %v61
  %v3750 = vunpack.c.l.b16 %v62
  %v3751 = vunpack.c.l.b16 %v63
  %v3752 = vunpack.c.l.b16 %v64
  %v3753 = vunpack.c.l.b16 %v65
  %v3754 = vunpack.c.l.b16 %v66
  %v3755 = vunpack.c.l.b16 %v67
  %v3756 = vunpack.c.l.b16 %v68
  %v3757 = vunpack.c.l.b16 %v69
  %v3758 = vunpack.c.l.b16 %v70
  %v3759 = vunpack.c.l.b16 %v71
  %v3760 = vunpack.c.l.b16 %v72
  %v3761 = vunpack.c.l.b16 %v73
  %v3762 = vunpack.c.l.b16 %v74
  %v3763 = vunpack.c.l.b16 %v75
  %v3764 = vunpack.c.l.b16 %v76
  %v3765 = vunpack.c.l.b16 %v77
  %v3766 = vunpack.c.l.b16 %v78
  %v3767 = vunpack.c.l.b16 %v79
  %v3768 = vunpack.c.l.b16 %v80
  %v3769 = vunpack.c.l.b16 %v81
  %v3770 = vunpack.c.l.b16 %v82
  %v3771 = vunpack.c.l.b16 %v83
  %v3772 = vunpack.c.l.b16 %v84
  %v3773 = vunpack.c.l.b16 %v85
  %v3774 = vunpack.c.l.b16 %v86
  %v3775 = vunpack.c.l.b16 %v87
  %v3776 = vpack.c.b16 %v3713, %v3712
  %v3777 = vpack.c.b16 %v3715, %v3714
  %v3778 = vpack.c.b16 %v3717, %v3716
  %v3779 = vpack.c.b16 %v3719, %v3718
  %v3780 = vpack.c.b16 %v3721, %v3720
  %v3781 = vpack.c.b16 %v3723, %v3722
  %v3782 = vpack.c.b16 %v3725, %v3724
  %v3783 = vpack.c.b16 %v3727, %v3726
  %v3784 = vpack.c.b16 %v3729, %v3728
  %v3785 = vpack.c.b16 %v3731, %v3730
  %v3786 = vpack.c.b16 %v3733, %v3732
  %v3787 = vpack.c.b16 %v3735, %v3734
  %v3788 = vpack.c.b16 %v3737, %v3736
  %v3789 = vpack.c.b16 %v3739, %v3738
  %v3790 = vpack.c.b16 %v3741, %v3740
  %v3791 = vpack.c.b16 %v3743, %v3742
  %v3792 = vpack.c.b16 %v3745, %v3744
  %v3793 = vpack.c.b16 %v3747, %v3746
  %v3794 = vpack.c.b16 %v3749, %v3748
  %v3795 = vpack.c.b16 %v3751, %v3750
  %v3796 = vpack.c.b16 %v3753, %v3752
  %v3797 = vpack.c.b16 %v3755, %v3754
  %v3798 = vpack.c.b16 %v3757, %v3756
  %v3799 = vpack.c.b16 %v3759, %v3758
  %v3800 = vpack.c.b16 %v3761, %v3760
  %v3801 = vpack.c.b16 %v3763, %v3762
  %v3802 = vpack.c.b16 %v3765, %v3764
  %v3803 = vpack.c.b16 %v3767, %v3766
  %v3804 = vpack.c.b16 %v3769, %v3768
  %v3805 = vpack.c.b16 %v3771, %v3770
  %v3806 = vpack.c.b16 %v3773, %v3772
  %v3807 = vpack.c.b16 %v3775, %v3774
  %v3808 = vunpack.c.l.b16 %v136
  %v3809 = vunpack.c.l.b16 %v146
  %v3810 = vunpack.c.l.b16 %v160
  %v3811 = vunpack.c.l.b16 %v170
  %v3812 = vunpack.c.l.b16 %v184
  %v3813 = vunpack.c.l.b16 %v194
  %v3814 = vunpack.c.l.b16 %v208
  %v3815 = vunpack.c.l.b16 %v218
  %v3816 = vunpack.c.l.b16 %v232
  %v3817 = vunpack.c.l.b16 %v242
  %v3818 = vunpack.c.l.b16 %v256
  %v3819 = vunpack.c.l.b16 %v266
  %v3820 = vunpack.c.l.b16 %v280
  %v3821 = vunpack.c.l.b16 %v290
  %v3822 = vunpack.c.l.b16 %v304
  %v3823 = vunpack.c.l.b16 %v314
  %v3824 = vunpack.c.l.b16 %v328
  %v3825 = vunpack.c.l.b16 %v338
  %v3826 = vunpack.c.l.b16 %v352
  %v3827 = vunpack.c.l.b16 %v362
  %v3828 = vunpack.c.l.b16 %v376
  %v3829 = vunpack.c.l.b16 %v386
  %v3830 = vunpack.c.l.b16 %v400
  %v3831 = vunpack.c.l.b16 %v410
  %v3832 = vunpack.c.l.b16 %v424
  %v3833 = vunpack.c.l.b16 %v434
  %v3834 = vunpack.c.l.b16 %v448
  %v3835 = vunpack.c.l.b16 %v458
  %v3836 = vunpack.c.l.b16 %v472
  %v3837 = vunpack.c.l.b16 %v482
  %v3838 = vunpack.c.l.b16 %v496
  %v3839 = vunpack.c.l.b16 %v506
  %v3840 = vunpack.c.l.b16 %v520
  %v3841 = vunpack.c.l.b16 %v530
  %v3842 = vunpack.c.l.b16 %v544
  %v3843 = vunpack.c.l.b16 %v554
  %v3844 = vunpack.c.l.b16 %v568
  %v3845 = vunpack.c.l.b16 %v578
  %v3846 = vunpack.c.l.b16 %v592
  %v3847 = vunpack.c.l.b16 %v602
  %v3848 = vunpack.c.l.b16 %v616
  %v3849 = vunpack.c.l.b16 %v626
  %v3850 = vunpack.c.l.b16 %v640
  %v3851 = vunpack.c.l.b16 %v650
  %v3852 = vunpack.c.l.b16 %v664
  %v3853 = vunpack.c.l.b16 %v674
  %v3854 = vunpack.c.l.b16 %v688
  %v3855 = vunpack.c.l.b16 %v698
  %v3856 = vunpack.c.l.b16 %v712
  %v3857 = vunpack.c.l.b16 %v722
  %v3858 = vunpack.c.l.b16 %v736
  %v3859 = vunpack.c.l.b16 %v746
  %v3860 = vunpack.c.l.b16 %v760
  %v3861 = vunpack.c.l.b16 %v770
  %v3862 = vunpack.c.l.b16 %v784
  %v3863 = vunpack.c.l.b16 %v794
  %v3864 = vunpack.c.l.b16 %v808
  %v3865 = vunpack.c.l.b16 %v818
  %v3866 = vunpack.c.l.b16 %v832
  %v3867 = vunpack.c.l.b16 %v842
  %v3868 = vunpack.c.l.b16 %v856
  %v3869 = vunpack.c.l.b16 %v866
  %v3870 = vunpack.c.l.b16 %v880
  %v3871 = vunpack.c.l.b16 %v890
  %v3872 = vpack.c.b16 %v3809, %v3808
  %v3873 = vpack.c.b16 %v3811, %v3810
  %v3874 = vpack.c.b16 %v3813, %v3812
  %v3875 = vpack.c.b16 %v3815, %v3814
  %v3876 = vpack.c.b16 %v3817, %v3816
  %v3877 = vpack.c.b16 %v3819, %v3818
  %v3878 = vpack.c.b16 %v3821, %v3820
  %v3879 = vpack.c.b16 %v3823, %v3822
  %v3880 = vpack.c.b16 %v3825, %v3824
  %v3881 = vpack.c.b16 %v3827, %v3826
  %v3882 = vpack.c.b16 %v3829, %v3828
  %v3883 = vpack.c.b16 %v3831, %v3830
  %v3884 = vpack.c.b16 %v3833, %v3832
  %v3885 = vpack.c.b16 %v3835, %v3834
  %v3886 = vpack.c.b16 %v3837, %v3836
  %v3887 = vpack.c.b16 %v3839, %v3838
  %v3888 = vpack.c.b16 %v3841, %v3840
  %v3889 = vpack.c.b16 %v3843, %v3842
  %v3890 = vpack.c.b16 %v3845, %v3844
  %v3891 = vpack.c.b16 %v3847, %v3846
  %v3892 = vpack.c.b16 %v3849, %v3848
  %v3893 = vpack.c.b16 %v3851, %v3850
  %v3894 = vpack.c.b16 %v3853, %v3852
  %v3895 = vpack.c.b16 %v3855, %v3854
  %v3896 = vpack.c.b16 %v3857, %v3856
  %v3897 = vpack.c.b16 %v3859, %v3858
  %v3898 = vpack.c.b16 %v3861, %v3860
  %v3899 = vpack.c.b16 %v3863, %v3862
  %v3900 = vpack.c.b16 %v3865, %v3864
  %v3901 = vpack.c.b16 %v3867, %v3866
  %v3902 = vpack.c.b16 %v3869, %v3868
  %v3903 = vpack.c.b16 %v3871, %v3870
  %3904 = vrot.lane.b32.xlu0 %v3872, 4
  %v3905 = vpop.permute.xlu0 %3904
  %3906 = vrot.lane.b32.xlu0 %v3873, 4
  %v3907 = vpop.permute.xlu0 %3906
  %3908 = vrot.lane.b32.xlu0 %v3874, 4
  %v3909 = vpop.permute.xlu0 %3908
  %3910 = vrot.lane.b32.xlu0 %v3875, 4
  %v3911 = vpop.permute.xlu0 %3910
  %3912 = vrot.lane.b32.xlu0 %v3876, 4
  %v3913 = vpop.permute.xlu0 %3912
  %3914 = vrot.lane.b32.xlu0 %v3877, 4
  %v3915 = vpop.permute.xlu0 %3914
  %3916 = vrot.lane.b32.xlu0 %v3878, 4
  %v3917 = vpop.permute.xlu0 %3916
  %3918 = vrot.lane.b32.xlu0 %v3879, 4
  %v3919 = vpop.permute.xlu0 %3918
  %3920 = vrot.lane.b32.xlu0 %v3880, 4
  %v3921 = vpop.permute.xlu0 %3920
  %3922 = vrot.lane.b32.xlu0 %v3881, 4
  %v3923 = vpop.permute.xlu0 %3922
  %3924 = vrot.lane.b32.xlu0 %v3882, 4
  %v3925 = vpop.permute.xlu0 %3924
  %3926 = vrot.lane.b32.xlu0 %v3883, 4
  %v3927 = vpop.permute.xlu0 %3926
  %3928 = vrot.lane.b32.xlu0 %v3884, 4
  %v3929 = vpop.permute.xlu0 %3928
  %3930 = vrot.lane.b32.xlu0 %v3885, 4
  %v3931 = vpop.permute.xlu0 %3930
  %3932 = vrot.lane.b32.xlu0 %v3886, 4
  %v3933 = vpop.permute.xlu0 %3932
  %3934 = vrot.lane.b32.xlu0 %v3887, 4
  %v3935 = vpop.permute.xlu0 %3934
  %3936 = vrot.lane.b32.xlu0 %v3888, 4
  %v3937 = vpop.permute.xlu0 %3936
  %3938 = vrot.lane.b32.xlu0 %v3889, 4
  %v3939 = vpop.permute.xlu0 %3938
  %3940 = vrot.lane.b32.xlu0 %v3890, 4
  %v3941 = vpop.permute.xlu0 %3940
  %3942 = vrot.lane.b32.xlu0 %v3891, 4
  %v3943 = vpop.permute.xlu0 %3942
  %3944 = vrot.lane.b32.xlu0 %v3892, 4
  %v3945 = vpop.permute.xlu0 %3944
  %3946 = vrot.lane.b32.xlu0 %v3893, 4
  %v3947 = vpop.permute.xlu0 %3946
  %3948 = vrot.lane.b32.xlu0 %v3894, 4
  %v3949 = vpop.permute.xlu0 %3948
  %3950 = vrot.lane.b32.xlu0 %v3895, 4
  %v3951 = vpop.permute.xlu0 %3950
  %3952 = vrot.lane.b32.xlu0 %v3896, 4
  %v3953 = vpop.permute.xlu0 %3952
  %3954 = vrot.lane.b32.xlu0 %v3897, 4
  %v3955 = vpop.permute.xlu0 %3954
  %3956 = vrot.lane.b32.xlu0 %v3898, 4
  %v3957 = vpop.permute.xlu0 %3956
  %3958 = vrot.lane.b32.xlu0 %v3899, 4
  %v3959 = vpop.permute.xlu0 %3958
  %3960 = vrot.lane.b32.xlu0 %v3900, 4
  %v3961 = vpop.permute.xlu0 %3960
  %3962 = vrot.lane.b32.xlu0 %v3901, 4
  %v3963 = vpop.permute.xlu0 %3962
  %3964 = vrot.lane.b32.xlu0 %v3902, 4
  %v3965 = vpop.permute.xlu0 %3964
  %3966 = vrot.lane.b32.xlu0 %v3903, 4
  %v3967 = vpop.permute.xlu0 %3966
  %v3968 = vunpack.c.l.b16 %v1025
  %v3969 = vunpack.c.l.b16 %v1028
  %v3970 = vunpack.c.l.b16 %v1032
  %v3971 = vunpack.c.l.b16 %v1035
  %v3972 = vunpack.c.l.b16 %v1039
  %v3973 = vunpack.c.l.b16 %v1042
  %v3974 = vunpack.c.l.b16 %v1046
  %v3975 = vunpack.c.l.b16 %v1049
  %v3976 = vunpack.c.l.b16 %v1053
  %v3977 = vunpack.c.l.b16 %v1056
  %v3978 = vunpack.c.l.b16 %v1060
  %v3979 = vunpack.c.l.b16 %v1063
  %v3980 = vunpack.c.l.b16 %v1067
  %v3981 = vunpack.c.l.b16 %v1070
  %v3982 = vunpack.c.l.b16 %v1074
  %v3983 = vunpack.c.l.b16 %v1077
  %v3984 = vunpack.c.l.b16 %v1081
  %v3985 = vunpack.c.l.b16 %v1084
  %v3986 = vunpack.c.l.b16 %v1088
  %v3987 = vunpack.c.l.b16 %v1091
  %v3988 = vunpack.c.l.b16 %v1095
  %v3989 = vunpack.c.l.b16 %v1098
  %v3990 = vunpack.c.l.b16 %v1102
  %v3991 = vunpack.c.l.b16 %v1105
  %v3992 = vunpack.c.l.b16 %v1109
  %v3993 = vunpack.c.l.b16 %v1112
  %v3994 = vunpack.c.l.b16 %v1116
  %v3995 = vunpack.c.l.b16 %v1119
  %v3996 = vunpack.c.l.b16 %v1123
  %v3997 = vunpack.c.l.b16 %v1126
  %v3998 = vunpack.c.l.b16 %v1130
  %v3999 = vunpack.c.l.b16 %v1133
  %v4000 = vunpack.c.l.b16 %v1137
  %v4001 = vunpack.c.l.b16 %v1140
  %v4002 = vunpack.c.l.b16 %v1144
  %v4003 = vunpack.c.l.b16 %v1147
  %v4004 = vunpack.c.l.b16 %v1151
  %v4005 = vunpack.c.l.b16 %v1154
  %v4006 = vunpack.c.l.b16 %v1158
  %v4007 = vunpack.c.l.b16 %v1161
  %v4008 = vunpack.c.l.b16 %v1165
  %v4009 = vunpack.c.l.b16 %v1168
  %v4010 = vunpack.c.l.b16 %v1172
  %v4011 = vunpack.c.l.b16 %v1175
  %v4012 = vunpack.c.l.b16 %v1179
  %v4013 = vunpack.c.l.b16 %v1182
  %v4014 = vunpack.c.l.b16 %v1186
  %v4015 = vunpack.c.l.b16 %v1189
  %v4016 = vunpack.c.l.b16 %v1193
  %v4017 = vunpack.c.l.b16 %v1196
  %v4018 = vunpack.c.l.b16 %v1200
  %v4019 = vunpack.c.l.b16 %v1203
  %v4020 = vunpack.c.l.b16 %v1207
  %v4021 = vunpack.c.l.b16 %v1210
  %v4022 = vunpack.c.l.b16 %v1214
  %v4023 = vunpack.c.l.b16 %v1217
  %v4024 = vunpack.c.l.b16 %v1221
  %v4025 = vunpack.c.l.b16 %v1224
  %v4026 = vunpack.c.l.b16 %v1228
  %v4027 = vunpack.c.l.b16 %v1231
  %v4028 = vunpack.c.l.b16 %v1235
  %v4029 = vunpack.c.l.b16 %v1238
  %v4030 = vunpack.c.l.b16 %v1242
  %v4031 = vunpack.c.l.b16 %v1245
  %v4032 = vpack.c.b16 %v3969, %v3968
  %v4033 = vpack.c.b16 %v3971, %v3970
  %v4034 = vpack.c.b16 %v3973, %v3972
  %v4035 = vpack.c.b16 %v3975, %v3974
  %v4036 = vpack.c.b16 %v3977, %v3976
  %v4037 = vpack.c.b16 %v3979, %v3978
  %v4038 = vpack.c.b16 %v3981, %v3980
  %v4039 = vpack.c.b16 %v3983, %v3982
  %v4040 = vpack.c.b16 %v3985, %v3984
  %v4041 = vpack.c.b16 %v3987, %v3986
  %v4042 = vpack.c.b16 %v3989, %v3988
  %v4043 = vpack.c.b16 %v3991, %v3990
  %v4044 = vpack.c.b16 %v3993, %v3992
  %v4045 = vpack.c.b16 %v3995, %v3994
  %v4046 = vpack.c.b16 %v3997, %v3996
  %v4047 = vpack.c.b16 %v3999, %v3998
  %v4048 = vpack.c.b16 %v4001, %v4000
  %v4049 = vpack.c.b16 %v4003, %v4002
  %v4050 = vpack.c.b16 %v4005, %v4004
  %v4051 = vpack.c.b16 %v4007, %v4006
  %v4052 = vpack.c.b16 %v4009, %v4008
  %v4053 = vpack.c.b16 %v4011, %v4010
  %v4054 = vpack.c.b16 %v4013, %v4012
  %v4055 = vpack.c.b16 %v4015, %v4014
  %v4056 = vpack.c.b16 %v4017, %v4016
  %v4057 = vpack.c.b16 %v4019, %v4018
  %v4058 = vpack.c.b16 %v4021, %v4020
  %v4059 = vpack.c.b16 %v4023, %v4022
  %v4060 = vpack.c.b16 %v4025, %v4024
  %v4061 = vpack.c.b16 %v4027, %v4026
  %v4062 = vpack.c.b16 %v4029, %v4028
  %v4063 = vpack.c.b16 %v4031, %v4030
  %4064 = vrot.lane.b32.xlu0 %v4032, 8
  %v4065 = vpop.permute.xlu0 %4064
  %4066 = vrot.lane.b32.xlu0 %v4033, 8
  %v4067 = vpop.permute.xlu0 %4066
  %4068 = vrot.lane.b32.xlu0 %v4034, 8
  %v4069 = vpop.permute.xlu0 %4068
  %4070 = vrot.lane.b32.xlu0 %v4035, 8
  %v4071 = vpop.permute.xlu0 %4070
  %4072 = vrot.lane.b32.xlu0 %v4036, 8
  %v4073 = vpop.permute.xlu0 %4072
  %4074 = vrot.lane.b32.xlu0 %v4037, 8
  %v4075 = vpop.permute.xlu0 %4074
  %4076 = vrot.lane.b32.xlu0 %v4038, 8
  %v4077 = vpop.permute.xlu0 %4076
  %4078 = vrot.lane.b32.xlu0 %v4039, 8
  %v4079 = vpop.permute.xlu0 %4078
  %4080 = vrot.lane.b32.xlu0 %v4040, 8
  %v4081 = vpop.permute.xlu0 %4080
  %4082 = vrot.lane.b32.xlu0 %v4041, 8
  %v4083 = vpop.permute.xlu0 %4082
  %4084 = vrot.lane.b32.xlu0 %v4042, 8
  %v4085 = vpop.permute.xlu0 %4084
  %4086 = vrot.lane.b32.xlu0 %v4043, 8
  %v4087 = vpop.permute.xlu0 %4086
  %4088 = vrot.lane.b32.xlu0 %v4044, 8
  %v4089 = vpop.permute.xlu0 %4088
  %4090 = vrot.lane.b32.xlu0 %v4045, 8
  %v4091 = vpop.permute.xlu0 %4090
  %4092 = vrot.lane.b32.xlu0 %v4046, 8
  %v4093 = vpop.permute.xlu0 %4092
  %4094 = vrot.lane.b32.xlu0 %v4047, 8
  %v4095 = vpop.permute.xlu0 %4094
  %4096 = vrot.lane.b32.xlu0 %v4048, 8
  %v4097 = vpop.permute.xlu0 %4096
  %4098 = vrot.lane.b32.xlu0 %v4049, 8
  %v4099 = vpop.permute.xlu0 %4098
  %4100 = vrot.lane.b32.xlu0 %v4050, 8
  %v4101 = vpop.permute.xlu0 %4100
  %4102 = vrot.lane.b32.xlu0 %v4051, 8
  %v4103 = vpop.permute.xlu0 %4102
  %4104 = vrot.lane.b32.xlu0 %v4052, 8
  %v4105 = vpop.permute.xlu0 %4104
  %4106 = vrot.lane.b32.xlu0 %v4053, 8
  %v4107 = vpop.permute.xlu0 %4106
  %4108 = vrot.lane.b32.xlu0 %v4054, 8
  %v4109 = vpop.permute.xlu0 %4108
  %4110 = vrot.lane.b32.xlu0 %v4055, 8
  %v4111 = vpop.permute.xlu0 %4110
  %4112 = vrot.lane.b32.xlu0 %v4056, 8
  %v4113 = vpop.permute.xlu0 %4112
  %4114 = vrot.lane.b32.xlu0 %v4057, 8
  %v4115 = vpop.permute.xlu0 %4114
  %4116 = vrot.lane.b32.xlu0 %v4058, 8
  %v4117 = vpop.permute.xlu0 %4116
  %4118 = vrot.lane.b32.xlu0 %v4059, 8
  %v4119 = vpop.permute.xlu0 %4118
  %4120 = vrot.lane.b32.xlu0 %v4060, 8
  %v4121 = vpop.permute.xlu0 %4120
  %4122 = vrot.lane.b32.xlu0 %v4061, 8
  %v4123 = vpop.permute.xlu0 %4122
  %4124 = vrot.lane.b32.xlu0 %v4062, 8
  %v4125 = vpop.permute.xlu0 %4124
  %4126 = vrot.lane.b32.xlu0 %v4063, 8
  %v4127 = vpop.permute.xlu0 %4126
  %v4160 = vunpack.c.l.b16 %v1247
  %v4161 = vunpack.c.l.b16 %v1248
  %v4162 = vunpack.c.l.b16 %v1249
  %v4163 = vunpack.c.l.b16 %v1250
  %v4164 = vunpack.c.l.b16 %v1251
  %v4165 = vunpack.c.l.b16 %v1252
  %v4166 = vunpack.c.l.b16 %v1253
  %v4167 = vunpack.c.l.b16 %v1254
  %v4168 = vunpack.c.l.b16 %v1255
  %v4169 = vunpack.c.l.b16 %v1256
  %v4170 = vunpack.c.l.b16 %v1257
  %v4171 = vunpack.c.l.b16 %v1258
  %v4172 = vunpack.c.l.b16 %v1259
  %v4173 = vunpack.c.l.b16 %v1260
  %v4174 = vunpack.c.l.b16 %v1261
  %v4175 = vunpack.c.l.b16 %v1262
  %v4176 = vunpack.c.l.b16 %v1263
  %v4177 = vunpack.c.l.b16 %v1264
  %v4178 = vunpack.c.l.b16 %v1265
  %v4179 = vunpack.c.l.b16 %v1266
  %v4180 = vunpack.c.l.b16 %v1267
  %v4181 = vunpack.c.l.b16 %v1268
  %v4182 = vunpack.c.l.b16 %v1269
  %v4183 = vunpack.c.l.b16 %v1270
  %v4184 = vunpack.c.l.b16 %v1271
  %v4185 = vunpack.c.l.b16 %v1272
  %v4186 = vunpack.c.l.b16 %v1273
  %v4187 = vunpack.c.l.b16 %v1274
  %v4188 = vunpack.c.l.b16 %v1275
  %v4189 = vunpack.c.l.b16 %v1276
  %v4190 = vunpack.c.l.b16 %v1277
  %v4191 = vunpack.c.l.b16 %v1278
  %v4192 = vunpack.c.l.b16 %v1279
  %v4193 = vunpack.c.l.b16 %v1280
  %v4194 = vunpack.c.l.b16 %v1281
  %v4195 = vunpack.c.l.b16 %v1282
  %v4196 = vunpack.c.l.b16 %v1283
  %v4197 = vunpack.c.l.b16 %v1284
  %v4198 = vunpack.c.l.b16 %v1285
  %v4199 = vunpack.c.l.b16 %v1286
  %v4200 = vunpack.c.l.b16 %v1287
  %v4201 = vunpack.c.l.b16 %v1288
  %v4202 = vunpack.c.l.b16 %v1289
  %v4203 = vunpack.c.l.b16 %v1290
  %v4204 = vunpack.c.l.b16 %v1291
  %v4205 = vunpack.c.l.b16 %v1292
  %v4206 = vunpack.c.l.b16 %v1293
  %v4207 = vunpack.c.l.b16 %v1294
  %v4208 = vunpack.c.l.b16 %v1295
  %v4209 = vunpack.c.l.b16 %v1296
  %v4210 = vunpack.c.l.b16 %v1297
  %v4211 = vunpack.c.l.b16 %v1298
  %v4212 = vunpack.c.l.b16 %v1299
  %v4213 = vunpack.c.l.b16 %v1300
  %v4214 = vunpack.c.l.b16 %v1301
  %v4215 = vunpack.c.l.b16 %v1302
  %v4216 = vunpack.c.l.b16 %v1303
  %v4217 = vunpack.c.l.b16 %v1304
  %v4218 = vunpack.c.l.b16 %v1305
  %v4219 = vunpack.c.l.b16 %v1306
  %v4220 = vunpack.c.l.b16 %v1307
  %v4221 = vunpack.c.l.b16 %v1308
  %v4222 = vunpack.c.l.b16 %v1309
  %v4223 = vunpack.c.l.b16 %v1310
  %v4224 = vpack.c.b16 %v4161, %v4160
  %v4225 = vpack.c.b16 %v4163, %v4162
  %v4226 = vpack.c.b16 %v4165, %v4164
  %v4227 = vpack.c.b16 %v4167, %v4166
  %v4228 = vpack.c.b16 %v4169, %v4168
  %v4229 = vpack.c.b16 %v4171, %v4170
  %v4230 = vpack.c.b16 %v4173, %v4172
  %v4231 = vpack.c.b16 %v4175, %v4174
  %v4232 = vpack.c.b16 %v4177, %v4176
  %v4233 = vpack.c.b16 %v4179, %v4178
  %v4234 = vpack.c.b16 %v4181, %v4180
  %v4235 = vpack.c.b16 %v4183, %v4182
  %v4236 = vpack.c.b16 %v4185, %v4184
  %v4237 = vpack.c.b16 %v4187, %v4186
  %v4238 = vpack.c.b16 %v4189, %v4188
  %v4239 = vpack.c.b16 %v4191, %v4190
  %v4240 = vpack.c.b16 %v4193, %v4192
  %v4241 = vpack.c.b16 %v4195, %v4194
  %v4242 = vpack.c.b16 %v4197, %v4196
  %v4243 = vpack.c.b16 %v4199, %v4198
  %v4244 = vpack.c.b16 %v4201, %v4200
  %v4245 = vpack.c.b16 %v4203, %v4202
  %v4246 = vpack.c.b16 %v4205, %v4204
  %v4247 = vpack.c.b16 %v4207, %v4206
  %v4248 = vpack.c.b16 %v4209, %v4208
  %v4249 = vpack.c.b16 %v4211, %v4210
  %v4250 = vpack.c.b16 %v4213, %v4212
  %v4251 = vpack.c.b16 %v4215, %v4214
  %v4252 = vpack.c.b16 %v4217, %v4216
  %v4253 = vpack.c.b16 %v4219, %v4218
  %v4254 = vpack.c.b16 %v4221, %v4220
  %v4255 = vpack.c.b16 %v4223, %v4222
  %4256 = vrot.lane.b32.xlu0 %v4224, 12
  %v4257 = vpop.permute.xlu0 %4256
  %4258 = vrot.lane.b32.xlu0 %v4225, 12
  %v4259 = vpop.permute.xlu0 %4258
  %4260 = vrot.lane.b32.xlu0 %v4226, 12
  %v4261 = vpop.permute.xlu0 %4260
  %4262 = vrot.lane.b32.xlu0 %v4227, 12
  %v4263 = vpop.permute.xlu0 %4262
  %4264 = vrot.lane.b32.xlu0 %v4228, 12
  %v4265 = vpop.permute.xlu0 %4264
  %4266 = vrot.lane.b32.xlu0 %v4229, 12
  %v4267 = vpop.permute.xlu0 %4266
  %4268 = vrot.lane.b32.xlu0 %v4230, 12
  %v4269 = vpop.permute.xlu0 %4268
  %4270 = vrot.lane.b32.xlu0 %v4231, 12
  %v4271 = vpop.permute.xlu0 %4270
  %4272 = vrot.lane.b32.xlu0 %v4232, 12
  %v4273 = vpop.permute.xlu0 %4272
  %4274 = vrot.lane.b32.xlu0 %v4233, 12
  %v4275 = vpop.permute.xlu0 %4274
  %4276 = vrot.lane.b32.xlu0 %v4234, 12
  %v4277 = vpop.permute.xlu0 %4276
  %4278 = vrot.lane.b32.xlu0 %v4235, 12
  %v4279 = vpop.permute.xlu0 %4278
  %4280 = vrot.lane.b32.xlu0 %v4236, 12
  %v4281 = vpop.permute.xlu0 %4280
  %4282 = vrot.lane.b32.xlu0 %v4237, 12
  %v4283 = vpop.permute.xlu0 %4282
  %4284 = vrot.lane.b32.xlu0 %v4238, 12
  %v4285 = vpop.permute.xlu0 %4284
  %4286 = vrot.lane.b32.xlu0 %v4239, 12
  %v4287 = vpop.permute.xlu0 %4286
  %4288 = vrot.lane.b32.xlu0 %v4240, 12
  %v4289 = vpop.permute.xlu0 %4288
  %4290 = vrot.lane.b32.xlu0 %v4241, 12
  %v4291 = vpop.permute.xlu0 %4290
  %4292 = vrot.lane.b32.xlu0 %v4242, 12
  %v4293 = vpop.permute.xlu0 %4292
  %4294 = vrot.lane.b32.xlu0 %v4243, 12
  %v4295 = vpop.permute.xlu0 %4294
  %4296 = vrot.lane.b32.xlu0 %v4244, 12
  %v4297 = vpop.permute.xlu0 %4296
  %4298 = vrot.lane.b32.xlu0 %v4245, 12
  %v4299 = vpop.permute.xlu0 %4298
  %4300 = vrot.lane.b32.xlu0 %v4246, 12
  %v4301 = vpop.permute.xlu0 %4300
  %4302 = vrot.lane.b32.xlu0 %v4247, 12
  %v4303 = vpop.permute.xlu0 %4302
  %4304 = vrot.lane.b32.xlu0 %v4248, 12
  %v4305 = vpop.permute.xlu0 %4304
  %4306 = vrot.lane.b32.xlu0 %v4249, 12
  %v4307 = vpop.permute.xlu0 %4306
  %4308 = vrot.lane.b32.xlu0 %v4250, 12
  %v4309 = vpop.permute.xlu0 %4308
  %4310 = vrot.lane.b32.xlu0 %v4251, 12
  %v4311 = vpop.permute.xlu0 %4310
  %4312 = vrot.lane.b32.xlu0 %v4252, 12
  %v4313 = vpop.permute.xlu0 %4312
  %4314 = vrot.lane.b32.xlu0 %v4253, 12
  %v4315 = vpop.permute.xlu0 %4314
  %4316 = vrot.lane.b32.xlu0 %v4254, 12
  %v4317 = vpop.permute.xlu0 %4316
  %4318 = vrot.lane.b32.xlu0 %v4255, 12
  %v4319 = vpop.permute.xlu0 %4318
  %v4320 = vunpack.c.l.b16 %v1356
  %v4321 = vunpack.c.l.b16 %v1366
  %v4322 = vunpack.c.l.b16 %v1380
  %v4323 = vunpack.c.l.b16 %v1390
  %v4324 = vunpack.c.l.b16 %v1404
  %v4325 = vunpack.c.l.b16 %v1414
  %v4326 = vunpack.c.l.b16 %v1428
  %v4327 = vunpack.c.l.b16 %v1438
  %v4328 = vunpack.c.l.b16 %v1452
  %v4329 = vunpack.c.l.b16 %v1462
  %v4330 = vunpack.c.l.b16 %v1476
  %v4331 = vunpack.c.l.b16 %v1486
  %v4332 = vunpack.c.l.b16 %v1500
  %v4333 = vunpack.c.l.b16 %v1510
  %v4334 = vunpack.c.l.b16 %v1524
  %v4335 = vunpack.c.l.b16 %v1534
  %v4336 = vunpack.c.l.b16 %v1548
  %v4337 = vunpack.c.l.b16 %v1558
  %v4338 = vunpack.c.l.b16 %v1572
  %v4339 = vunpack.c.l.b16 %v1582
  %v4340 = vunpack.c.l.b16 %v1596
  %v4341 = vunpack.c.l.b16 %v1606
  %v4342 = vunpack.c.l.b16 %v1620
  %v4343 = vunpack.c.l.b16 %v1630
  %v4344 = vunpack.c.l.b16 %v1644
  %v4345 = vunpack.c.l.b16 %v1654
  %v4346 = vunpack.c.l.b16 %v1668
  %v4347 = vunpack.c.l.b16 %v1678
  %v4348 = vunpack.c.l.b16 %v1692
  %v4349 = vunpack.c.l.b16 %v1702
  %v4350 = vunpack.c.l.b16 %v1716
  %v4351 = vunpack.c.l.b16 %v1726
  %v4352 = vunpack.c.l.b16 %v1740
  %v4353 = vunpack.c.l.b16 %v1750
  %v4354 = vunpack.c.l.b16 %v1764
  %v4355 = vunpack.c.l.b16 %v1774
  %v4356 = vunpack.c.l.b16 %v1788
  %v4357 = vunpack.c.l.b16 %v1798
  %v4358 = vunpack.c.l.b16 %v1812
  %v4359 = vunpack.c.l.b16 %v1822
  %v4360 = vunpack.c.l.b16 %v1836
  %v4361 = vunpack.c.l.b16 %v1846
  %v4362 = vunpack.c.l.b16 %v1860
  %v4363 = vunpack.c.l.b16 %v1870
  %v4364 = vunpack.c.l.b16 %v1884
  %v4365 = vunpack.c.l.b16 %v1894
  %v4366 = vunpack.c.l.b16 %v1908
  %v4367 = vunpack.c.l.b16 %v1918
  %v4368 = vunpack.c.l.b16 %v1932
  %v4369 = vunpack.c.l.b16 %v1942
  %v4370 = vunpack.c.l.b16 %v1956
  %v4371 = vunpack.c.l.b16 %v1966
  %v4372 = vunpack.c.l.b16 %v1980
  %v4373 = vunpack.c.l.b16 %v1990
  %v4374 = vunpack.c.l.b16 %v2004
  %v4375 = vunpack.c.l.b16 %v2014
  %v4376 = vunpack.c.l.b16 %v2028
  %v4377 = vunpack.c.l.b16 %v2038
  %v4378 = vunpack.c.l.b16 %v2052
  %v4379 = vunpack.c.l.b16 %v2062
  %v4380 = vunpack.c.l.b16 %v2076
  %v4381 = vunpack.c.l.b16 %v2086
  %v4382 = vunpack.c.l.b16 %v2100
  %v4383 = vunpack.c.l.b16 %v2110
  %v4384 = vpack.c.b16 %v4321, %v4320
  %v4385 = vpack.c.b16 %v4323, %v4322
  %v4386 = vpack.c.b16 %v4325, %v4324
  %v4387 = vpack.c.b16 %v4327, %v4326
  %v4388 = vpack.c.b16 %v4329, %v4328
  %v4389 = vpack.c.b16 %v4331, %v4330
  %v4390 = vpack.c.b16 %v4333, %v4332
  %v4391 = vpack.c.b16 %v4335, %v4334
  %v4392 = vpack.c.b16 %v4337, %v4336
  %v4393 = vpack.c.b16 %v4339, %v4338
  %v4394 = vpack.c.b16 %v4341, %v4340
  %v4395 = vpack.c.b16 %v4343, %v4342
  %v4396 = vpack.c.b16 %v4345, %v4344
  %v4397 = vpack.c.b16 %v4347, %v4346
  %v4398 = vpack.c.b16 %v4349, %v4348
  %v4399 = vpack.c.b16 %v4351, %v4350
  %v4400 = vpack.c.b16 %v4353, %v4352
  %v4401 = vpack.c.b16 %v4355, %v4354
  %v4402 = vpack.c.b16 %v4357, %v4356
  %v4403 = vpack.c.b16 %v4359, %v4358
  %v4404 = vpack.c.b16 %v4361, %v4360
  %v4405 = vpack.c.b16 %v4363, %v4362
  %v4406 = vpack.c.b16 %v4365, %v4364
  %v4407 = vpack.c.b16 %v4367, %v4366
  %v4408 = vpack.c.b16 %v4369, %v4368
  %v4409 = vpack.c.b16 %v4371, %v4370
  %v4410 = vpack.c.b16 %v4373, %v4372
  %v4411 = vpack.c.b16 %v4375, %v4374
  %v4412 = vpack.c.b16 %v4377, %v4376
  %v4413 = vpack.c.b16 %v4379, %v4378
  %v4414 = vpack.c.b16 %v4381, %v4380
  %v4415 = vpack.c.b16 %v4383, %v4382
  %4416 = vrot.lane.b32.xlu0 %v4384, 16
  %v4417 = vpop.permute.xlu0 %4416
  %4418 = vrot.lane.b32.xlu0 %v4385, 16
  %v4419 = vpop.permute.xlu0 %4418
  %4420 = vrot.lane.b32.xlu0 %v4386, 16
  %v4421 = vpop.permute.xlu0 %4420
  %4422 = vrot.lane.b32.xlu0 %v4387, 16
  %v4423 = vpop.permute.xlu0 %4422
  %4424 = vrot.lane.b32.xlu0 %v4388, 16
  %v4425 = vpop.permute.xlu0 %4424
  %4426 = vrot.lane.b32.xlu0 %v4389, 16
  %v4427 = vpop.permute.xlu0 %4426
  %4428 = vrot.lane.b32.xlu0 %v4390, 16
  %v4429 = vpop.permute.xlu0 %4428
  %4430 = vrot.lane.b32.xlu0 %v4391, 16
  %v4431 = vpop.permute.xlu0 %4430
  %4432 = vrot.lane.b32.xlu0 %v4392, 16
  %v4433 = vpop.permute.xlu0 %4432
  %4434 = vrot.lane.b32.xlu0 %v4393, 16
  %v4435 = vpop.permute.xlu0 %4434
  %4436 = vrot.lane.b32.xlu0 %v4394, 16
  %v4437 = vpop.permute.xlu0 %4436
  %4438 = vrot.lane.b32.xlu0 %v4395, 16
  %v4439 = vpop.permute.xlu0 %4438
  %4440 = vrot.lane.b32.xlu0 %v4396, 16
  %v4441 = vpop.permute.xlu0 %4440
  %4442 = vrot.lane.b32.xlu0 %v4397, 16
  %v4443 = vpop.permute.xlu0 %4442
  %4444 = vrot.lane.b32.xlu0 %v4398, 16
  %v4445 = vpop.permute.xlu0 %4444
  %4446 = vrot.lane.b32.xlu0 %v4399, 16
  %v4447 = vpop.permute.xlu0 %4446
  %4448 = vrot.lane.b32.xlu0 %v4400, 16
  %v4449 = vpop.permute.xlu0 %4448
  %4450 = vrot.lane.b32.xlu0 %v4401, 16
  %v4451 = vpop.permute.xlu0 %4450
  %4452 = vrot.lane.b32.xlu0 %v4402, 16
  %v4453 = vpop.permute.xlu0 %4452
  %4454 = vrot.lane.b32.xlu0 %v4403, 16
  %v4455 = vpop.permute.xlu0 %4454
  %4456 = vrot.lane.b32.xlu0 %v4404, 16
  %v4457 = vpop.permute.xlu0 %4456
  %4458 = vrot.lane.b32.xlu0 %v4405, 16
  %v4459 = vpop.permute.xlu0 %4458
  %4460 = vrot.lane.b32.xlu0 %v4406, 16
  %v4461 = vpop.permute.xlu0 %4460
  %4462 = vrot.lane.b32.xlu0 %v4407, 16
  %v4463 = vpop.permute.xlu0 %4462
  %4464 = vrot.lane.b32.xlu0 %v4408, 16
  %v4465 = vpop.permute.xlu0 %4464
  %4466 = vrot.lane.b32.xlu0 %v4409, 16
  %v4467 = vpop.permute.xlu0 %4466
  %4468 = vrot.lane.b32.xlu0 %v4410, 16
  %v4469 = vpop.permute.xlu0 %4468
  %4470 = vrot.lane.b32.xlu0 %v4411, 16
  %v4471 = vpop.permute.xlu0 %4470
  %4472 = vrot.lane.b32.xlu0 %v4412, 16
  %v4473 = vpop.permute.xlu0 %4472
  %4474 = vrot.lane.b32.xlu0 %v4413, 16
  %v4475 = vpop.permute.xlu0 %4474
  %4476 = vrot.lane.b32.xlu0 %v4414, 16
  %v4477 = vpop.permute.xlu0 %4476
  %4478 = vrot.lane.b32.xlu0 %v4415, 16
  %v4479 = vpop.permute.xlu0 %4478
  %v4480 = vunpack.c.l.b16 %v2242
  %v4481 = vunpack.c.l.b16 %v2245
  %v4482 = vunpack.c.l.b16 %v2249
  %v4483 = vunpack.c.l.b16 %v2252
  %v4484 = vunpack.c.l.b16 %v2256
  %v4485 = vunpack.c.l.b16 %v2259
  %v4486 = vunpack.c.l.b16 %v2263
  %v4487 = vunpack.c.l.b16 %v2266
  %v4488 = vunpack.c.l.b16 %v2270
  %v4489 = vunpack.c.l.b16 %v2273
  %v4490 = vunpack.c.l.b16 %v2277
  %v4491 = vunpack.c.l.b16 %v2280
  %v4492 = vunpack.c.l.b16 %v2284
  %v4493 = vunpack.c.l.b16 %v2287
  %v4494 = vunpack.c.l.b16 %v2291
  %v4495 = vunpack.c.l.b16 %v2294
  %v4496 = vunpack.c.l.b16 %v2298
  %v4497 = vunpack.c.l.b16 %v2301
  %v4498 = vunpack.c.l.b16 %v2305
  %v4499 = vunpack.c.l.b16 %v2308
  %v4500 = vunpack.c.l.b16 %v2312
  %v4501 = vunpack.c.l.b16 %v2315
  %v4502 = vunpack.c.l.b16 %v2319
  %v4503 = vunpack.c.l.b16 %v2322
  %v4504 = vunpack.c.l.b16 %v2326
  %v4505 = vunpack.c.l.b16 %v2329
  %v4506 = vunpack.c.l.b16 %v2333
  %v4507 = vunpack.c.l.b16 %v2336
  %v4508 = vunpack.c.l.b16 %v2340
  %v4509 = vunpack.c.l.b16 %v2343
  %v4510 = vunpack.c.l.b16 %v2347
  %v4511 = vunpack.c.l.b16 %v2350
  %v4512 = vunpack.c.l.b16 %v2354
  %v4513 = vunpack.c.l.b16 %v2357
  %v4514 = vunpack.c.l.b16 %v2361
  %v4515 = vunpack.c.l.b16 %v2364
  %v4516 = vunpack.c.l.b16 %v2368
  %v4517 = vunpack.c.l.b16 %v2371
  %v4518 = vunpack.c.l.b16 %v2375
  %v4519 = vunpack.c.l.b16 %v2378
  %v4520 = vunpack.c.l.b16 %v2382
  %v4521 = vunpack.c.l.b16 %v2385
  %v4522 = vunpack.c.l.b16 %v2389
  %v4523 = vunpack.c.l.b16 %v2392
  %v4524 = vunpack.c.l.b16 %v2396
  %v4525 = vunpack.c.l.b16 %v2399
  %v4526 = vunpack.c.l.b16 %v2403
  %v4527 = vunpack.c.l.b16 %v2406
  %v4528 = vunpack.c.l.b16 %v2410
  %v4529 = vunpack.c.l.b16 %v2413
  %v4530 = vunpack.c.l.b16 %v2417
  %v4531 = vunpack.c.l.b16 %v2420
  %v4532 = vunpack.c.l.b16 %v2424
  %v4533 = vunpack.c.l.b16 %v2427
  %v4534 = vunpack.c.l.b16 %v2431
  %v4535 = vunpack.c.l.b16 %v2434
  %v4536 = vunpack.c.l.b16 %v2438
  %v4537 = vunpack.c.l.b16 %v2441
  %v4538 = vunpack.c.l.b16 %v2445
  %v4539 = vunpack.c.l.b16 %v2448
  %v4540 = vunpack.c.l.b16 %v2452
  %v4541 = vunpack.c.l.b16 %v2455
  %v4542 = vunpack.c.l.b16 %v2459
  %v4543 = vunpack.c.l.b16 %v2462
  %v4544 = vpack.c.b16 %v4481, %v4480
  %v4545 = vpack.c.b16 %v4483, %v4482
  %v4546 = vpack.c.b16 %v4485, %v4484
  %v4547 = vpack.c.b16 %v4487, %v4486
  %v4548 = vpack.c.b16 %v4489, %v4488
  %v4549 = vpack.c.b16 %v4491, %v4490
  %v4550 = vpack.c.b16 %v4493, %v4492
  %v4551 = vpack.c.b16 %v4495, %v4494
  %v4552 = vpack.c.b16 %v4497, %v4496
  %v4553 = vpack.c.b16 %v4499, %v4498
  %v4554 = vpack.c.b16 %v4501, %v4500
  %v4555 = vpack.c.b16 %v4503, %v4502
  %v4556 = vpack.c.b16 %v4505, %v4504
  %v4557 = vpack.c.b16 %v4507, %v4506
  %v4558 = vpack.c.b16 %v4509, %v4508
  %v4559 = vpack.c.b16 %v4511, %v4510
  %v4560 = vpack.c.b16 %v4513, %v4512
  %v4561 = vpack.c.b16 %v4515, %v4514
  %v4562 = vpack.c.b16 %v4517, %v4516
  %v4563 = vpack.c.b16 %v4519, %v4518
  %v4564 = vpack.c.b16 %v4521, %v4520
  %v4565 = vpack.c.b16 %v4523, %v4522
  %v4566 = vpack.c.b16 %v4525, %v4524
  %v4567 = vpack.c.b16 %v4527, %v4526
  %v4568 = vpack.c.b16 %v4529, %v4528
  %v4569 = vpack.c.b16 %v4531, %v4530
  %v4570 = vpack.c.b16 %v4533, %v4532
  %v4571 = vpack.c.b16 %v4535, %v4534
  %v4572 = vpack.c.b16 %v4537, %v4536
  %v4573 = vpack.c.b16 %v4539, %v4538
  %v4574 = vpack.c.b16 %v4541, %v4540
  %v4575 = vpack.c.b16 %v4543, %v4542
  %4576 = vrot.lane.b32.xlu0 %v4544, 20
  %v4577 = vpop.permute.xlu0 %4576
  %4578 = vrot.lane.b32.xlu0 %v4545, 20
  %v4579 = vpop.permute.xlu0 %4578
  %4580 = vrot.lane.b32.xlu0 %v4546, 20
  %v4581 = vpop.permute.xlu0 %4580
  %4582 = vrot.lane.b32.xlu0 %v4547, 20
  %v4583 = vpop.permute.xlu0 %4582
  %4584 = vrot.lane.b32.xlu0 %v4548, 20
  %v4585 = vpop.permute.xlu0 %4584
  %4586 = vrot.lane.b32.xlu0 %v4549, 20
  %v4587 = vpop.permute.xlu0 %4586
  %4588 = vrot.lane.b32.xlu0 %v4550, 20
  %v4589 = vpop.permute.xlu0 %4588
  %4590 = vrot.lane.b32.xlu0 %v4551, 20
  %v4591 = vpop.permute.xlu0 %4590
  %4592 = vrot.lane.b32.xlu0 %v4552, 20
  %v4593 = vpop.permute.xlu0 %4592
  %4594 = vrot.lane.b32.xlu0 %v4553, 20
  %v4595 = vpop.permute.xlu0 %4594
  %4596 = vrot.lane.b32.xlu0 %v4554, 20
  %v4597 = vpop.permute.xlu0 %4596
  %4598 = vrot.lane.b32.xlu0 %v4555, 20
  %v4599 = vpop.permute.xlu0 %4598
  %4600 = vrot.lane.b32.xlu0 %v4556, 20
  %v4601 = vpop.permute.xlu0 %4600
  %4602 = vrot.lane.b32.xlu0 %v4557, 20
  %v4603 = vpop.permute.xlu0 %4602
  %4604 = vrot.lane.b32.xlu0 %v4558, 20
  %v4605 = vpop.permute.xlu0 %4604
  %4606 = vrot.lane.b32.xlu0 %v4559, 20
  %v4607 = vpop.permute.xlu0 %4606
  %4608 = vrot.lane.b32.xlu0 %v4560, 20
  %v4609 = vpop.permute.xlu0 %4608
  %4610 = vrot.lane.b32.xlu0 %v4561, 20
  %v4611 = vpop.permute.xlu0 %4610
  %4612 = vrot.lane.b32.xlu0 %v4562, 20
  %v4613 = vpop.permute.xlu0 %4612
  %4614 = vrot.lane.b32.xlu0 %v4563, 20
  %v4615 = vpop.permute.xlu0 %4614
  %4616 = vrot.lane.b32.xlu0 %v4564, 20
  %v4617 = vpop.permute.xlu0 %4616
  %4618 = vrot.lane.b32.xlu0 %v4565, 20
  %v4619 = vpop.permute.xlu0 %4618
  %4620 = vrot.lane.b32.xlu0 %v4566, 20
  %v4621 = vpop.permute.xlu0 %4620
  %4622 = vrot.lane.b32.xlu0 %v4567, 20
  %v4623 = vpop.permute.xlu0 %4622
  %4624 = vrot.lane.b32.xlu0 %v4568, 20
  %v4625 = vpop.permute.xlu0 %4624
  %4626 = vrot.lane.b32.xlu0 %v4569, 20
  %v4627 = vpop.permute.xlu0 %4626
  %4628 = vrot.lane.b32.xlu0 %v4570, 20
  %v4629 = vpop.permute.xlu0 %4628
  %4630 = vrot.lane.b32.xlu0 %v4571, 20
  %v4631 = vpop.permute.xlu0 %4630
  %4632 = vrot.lane.b32.xlu0 %v4572, 20
  %v4633 = vpop.permute.xlu0 %4632
  %4634 = vrot.lane.b32.xlu0 %v4573, 20
  %v4635 = vpop.permute.xlu0 %4634
  %4636 = vrot.lane.b32.xlu0 %v4574, 20
  %v4637 = vpop.permute.xlu0 %4636
  %4638 = vrot.lane.b32.xlu0 %v4575, 20
  %v4639 = vpop.permute.xlu0 %4638
  %v4672 = vunpack.c.l.b16 %v2464
  %v4673 = vunpack.c.l.b16 %v2465
  %v4674 = vunpack.c.l.b16 %v2466
  %v4675 = vunpack.c.l.b16 %v2467
  %v4676 = vunpack.c.l.b16 %v2468
  %v4677 = vunpack.c.l.b16 %v2469
  %v4678 = vunpack.c.l.b16 %v2470
  %v4679 = vunpack.c.l.b16 %v2471
  %v4680 = vunpack.c.l.b16 %v2472
  %v4681 = vunpack.c.l.b16 %v2473
  %v4682 = vunpack.c.l.b16 %v2474
  %v4683 = vunpack.c.l.b16 %v2475
  %v4684 = vunpack.c.l.b16 %v2476
  %v4685 = vunpack.c.l.b16 %v2477
  %v4686 = vunpack.c.l.b16 %v2478
  %v4687 = vunpack.c.l.b16 %v2479
  %v4688 = vunpack.c.l.b16 %v2480
  %v4689 = vunpack.c.l.b16 %v2481
  %v4690 = vunpack.c.l.b16 %v2482
  %v4691 = vunpack.c.l.b16 %v2483
  %v4692 = vunpack.c.l.b16 %v2484
  %v4693 = vunpack.c.l.b16 %v2485
  %v4694 = vunpack.c.l.b16 %v2486
  %v4695 = vunpack.c.l.b16 %v2487
  %v4696 = vunpack.c.l.b16 %v2488
  %v4697 = vunpack.c.l.b16 %v2489
  %v4698 = vunpack.c.l.b16 %v2490
  %v4699 = vunpack.c.l.b16 %v2491
  %v4700 = vunpack.c.l.b16 %v2492
  %v4701 = vunpack.c.l.b16 %v2493
  %v4702 = vunpack.c.l.b16 %v2494
  %v4703 = vunpack.c.l.b16 %v2495
  %v4704 = vunpack.c.l.b16 %v2496
  %v4705 = vunpack.c.l.b16 %v2497
  %v4706 = vunpack.c.l.b16 %v2498
  %v4707 = vunpack.c.l.b16 %v2499
  %v4708 = vunpack.c.l.b16 %v2500
  %v4709 = vunpack.c.l.b16 %v2501
  %v4710 = vunpack.c.l.b16 %v2502
  %v4711 = vunpack.c.l.b16 %v2503
  %v4712 = vunpack.c.l.b16 %v2504
  %v4713 = vunpack.c.l.b16 %v2505
  %v4714 = vunpack.c.l.b16 %v2506
  %v4715 = vunpack.c.l.b16 %v2507
  %v4716 = vunpack.c.l.b16 %v2508
  %v4717 = vunpack.c.l.b16 %v2509
  %v4718 = vunpack.c.l.b16 %v2510
  %v4719 = vunpack.c.l.b16 %v2511
  %v4720 = vunpack.c.l.b16 %v2512
  %v4721 = vunpack.c.l.b16 %v2513
  %v4722 = vunpack.c.l.b16 %v2514
  %v4723 = vunpack.c.l.b16 %v2515
  %v4724 = vunpack.c.l.b16 %v2516
  %v4725 = vunpack.c.l.b16 %v2517
  %v4726 = vunpack.c.l.b16 %v2518
  %v4727 = vunpack.c.l.b16 %v2519
  %v4728 = vunpack.c.l.b16 %v2520
  %v4729 = vunpack.c.l.b16 %v2521
  %v4730 = vunpack.c.l.b16 %v2522
  %v4731 = vunpack.c.l.b16 %v2523
  %v4732 = vunpack.c.l.b16 %v2524
  %v4733 = vunpack.c.l.b16 %v2525
  %v4734 = vunpack.c.l.b16 %v2526
  %v4735 = vunpack.c.l.b16 %v2527
  %v4736 = vpack.c.b16 %v4673, %v4672
  %v4737 = vpack.c.b16 %v4675, %v4674
  %v4738 = vpack.c.b16 %v4677, %v4676
  %v4739 = vpack.c.b16 %v4679, %v4678
  %v4740 = vpack.c.b16 %v4681, %v4680
  %v4741 = vpack.c.b16 %v4683, %v4682
  %v4742 = vpack.c.b16 %v4685, %v4684
  %v4743 = vpack.c.b16 %v4687, %v4686
  %v4744 = vpack.c.b16 %v4689, %v4688
  %v4745 = vpack.c.b16 %v4691, %v4690
  %v4746 = vpack.c.b16 %v4693, %v4692
  %v4747 = vpack.c.b16 %v4695, %v4694
  %v4748 = vpack.c.b16 %v4697, %v4696
  %v4749 = vpack.c.b16 %v4699, %v4698
  %v4750 = vpack.c.b16 %v4701, %v4700
  %v4751 = vpack.c.b16 %v4703, %v4702
  %v4752 = vpack.c.b16 %v4705, %v4704
  %v4753 = vpack.c.b16 %v4707, %v4706
  %v4754 = vpack.c.b16 %v4709, %v4708
  %v4755 = vpack.c.b16 %v4711, %v4710
  %v4756 = vpack.c.b16 %v4713, %v4712
  %v4757 = vpack.c.b16 %v4715, %v4714
  %v4758 = vpack.c.b16 %v4717, %v4716
  %v4759 = vpack.c.b16 %v4719, %v4718
  %v4760 = vpack.c.b16 %v4721, %v4720
  %v4761 = vpack.c.b16 %v4723, %v4722
  %v4762 = vpack.c.b16 %v4725, %v4724
  %v4763 = vpack.c.b16 %v4727, %v4726
  %v4764 = vpack.c.b16 %v4729, %v4728
  %v4765 = vpack.c.b16 %v4731, %v4730
  %v4766 = vpack.c.b16 %v4733, %v4732
  %v4767 = vpack.c.b16 %v4735, %v4734
  %4768 = vrot.lane.b32.xlu0 %v4736, 24
  %v4769 = vpop.permute.xlu0 %4768
  %4770 = vrot.lane.b32.xlu0 %v4737, 24
  %v4771 = vpop.permute.xlu0 %4770
  %4772 = vrot.lane.b32.xlu0 %v4738, 24
  %v4773 = vpop.permute.xlu0 %4772
  %4774 = vrot.lane.b32.xlu0 %v4739, 24
  %v4775 = vpop.permute.xlu0 %4774
  %4776 = vrot.lane.b32.xlu0 %v4740, 24
  %v4777 = vpop.permute.xlu0 %4776
  %4778 = vrot.lane.b32.xlu0 %v4741, 24
  %v4779 = vpop.permute.xlu0 %4778
  %4780 = vrot.lane.b32.xlu0 %v4742, 24
  %v4781 = vpop.permute.xlu0 %4780
  %4782 = vrot.lane.b32.xlu0 %v4743, 24
  %v4783 = vpop.permute.xlu0 %4782
  %4784 = vrot.lane.b32.xlu0 %v4744, 24
  %v4785 = vpop.permute.xlu0 %4784
  %4786 = vrot.lane.b32.xlu0 %v4745, 24
  %v4787 = vpop.permute.xlu0 %4786
  %4788 = vrot.lane.b32.xlu0 %v4746, 24
  %v4789 = vpop.permute.xlu0 %4788
  %4790 = vrot.lane.b32.xlu0 %v4747, 24
  %v4791 = vpop.permute.xlu0 %4790
  %4792 = vrot.lane.b32.xlu0 %v4748, 24
  %v4793 = vpop.permute.xlu0 %4792
  %4794 = vrot.lane.b32.xlu0 %v4749, 24
  %v4795 = vpop.permute.xlu0 %4794
  %4796 = vrot.lane.b32.xlu0 %v4750, 24
  %v4797 = vpop.permute.xlu0 %4796
  %4798 = vrot.lane.b32.xlu0 %v4751, 24
  %v4799 = vpop.permute.xlu0 %4798
  %4800 = vrot.lane.b32.xlu0 %v4752, 24
  %v4801 = vpop.permute.xlu0 %4800
  %4802 = vrot.lane.b32.xlu0 %v4753, 24
  %v4803 = vpop.permute.xlu0 %4802
  %4804 = vrot.lane.b32.xlu0 %v4754, 24
  %v4805 = vpop.permute.xlu0 %4804
  %4806 = vrot.lane.b32.xlu0 %v4755, 24
  %v4807 = vpop.permute.xlu0 %4806
  %4808 = vrot.lane.b32.xlu0 %v4756, 24
  %v4809 = vpop.permute.xlu0 %4808
  %4810 = vrot.lane.b32.xlu0 %v4757, 24
  %v4811 = vpop.permute.xlu0 %4810
  %4812 = vrot.lane.b32.xlu0 %v4758, 24
  %v4813 = vpop.permute.xlu0 %4812
  %4814 = vrot.lane.b32.xlu0 %v4759, 24
  %v4815 = vpop.permute.xlu0 %4814
  %4816 = vrot.lane.b32.xlu0 %v4760, 24
  %v4817 = vpop.permute.xlu0 %4816
  %4818 = vrot.lane.b32.xlu0 %v4761, 24
  %v4819 = vpop.permute.xlu0 %4818
  %4820 = vrot.lane.b32.xlu0 %v4762, 24
  %v4821 = vpop.permute.xlu0 %4820
  %4822 = vrot.lane.b32.xlu0 %v4763, 24
  %v4823 = vpop.permute.xlu0 %4822
  %4824 = vrot.lane.b32.xlu0 %v4764, 24
  %v4825 = vpop.permute.xlu0 %4824
  %4826 = vrot.lane.b32.xlu0 %v4765, 24
  %v4827 = vpop.permute.xlu0 %4826
  %4828 = vrot.lane.b32.xlu0 %v4766, 24
  %v4829 = vpop.permute.xlu0 %4828
  %4830 = vrot.lane.b32.xlu0 %v4767, 24
  %v4831 = vpop.permute.xlu0 %4830
  %v4832 = vunpack.c.l.b16 %v2573
  %v4833 = vunpack.c.l.b16 %v2583
  %v4834 = vunpack.c.l.b16 %v2597
  %v4835 = vunpack.c.l.b16 %v2607
  %v4836 = vunpack.c.l.b16 %v2621
  %v4837 = vunpack.c.l.b16 %v2631
  %v4838 = vunpack.c.l.b16 %v2645
  %v4839 = vunpack.c.l.b16 %v2655
  %v4840 = vunpack.c.l.b16 %v2669
  %v4841 = vunpack.c.l.b16 %v2679
  %v4842 = vunpack.c.l.b16 %v2693
  %v4843 = vunpack.c.l.b16 %v2703
  %v4844 = vunpack.c.l.b16 %v2717
  %v4845 = vunpack.c.l.b16 %v2727
  %v4846 = vunpack.c.l.b16 %v2741
  %v4847 = vunpack.c.l.b16 %v2751
  %v4848 = vunpack.c.l.b16 %v2765
  %v4849 = vunpack.c.l.b16 %v2775
  %v4850 = vunpack.c.l.b16 %v2789
  %v4851 = vunpack.c.l.b16 %v2799
  %v4852 = vunpack.c.l.b16 %v2813
  %v4853 = vunpack.c.l.b16 %v2823
  %v4854 = vunpack.c.l.b16 %v2837
  %v4855 = vunpack.c.l.b16 %v2847
  %v4856 = vunpack.c.l.b16 %v2861
  %v4857 = vunpack.c.l.b16 %v2871
  %v4858 = vunpack.c.l.b16 %v2885
  %v4859 = vunpack.c.l.b16 %v2895
  %v4860 = vunpack.c.l.b16 %v2909
  %v4861 = vunpack.c.l.b16 %v2919
  %v4862 = vunpack.c.l.b16 %v2933
  %v4863 = vunpack.c.l.b16 %v2943
  %v4864 = vunpack.c.l.b16 %v2957
  %v4865 = vunpack.c.l.b16 %v2967
  %v4866 = vunpack.c.l.b16 %v2981
  %v4867 = vunpack.c.l.b16 %v2991
  %v4868 = vunpack.c.l.b16 %v3005
  %v4869 = vunpack.c.l.b16 %v3015
  %v4870 = vunpack.c.l.b16 %v3029
  %v4871 = vunpack.c.l.b16 %v3039
  %v4872 = vunpack.c.l.b16 %v3053
  %v4873 = vunpack.c.l.b16 %v3063
  %v4874 = vunpack.c.l.b16 %v3077
  %v4875 = vunpack.c.l.b16 %v3087
  %v4876 = vunpack.c.l.b16 %v3101
  %v4877 = vunpack.c.l.b16 %v3111
  %v4878 = vunpack.c.l.b16 %v3125
  %v4879 = vunpack.c.l.b16 %v3135
  %v4880 = vunpack.c.l.b16 %v3149
  %v4881 = vunpack.c.l.b16 %v3159
  %v4882 = vunpack.c.l.b16 %v3173
  %v4883 = vunpack.c.l.b16 %v3183
  %v4884 = vunpack.c.l.b16 %v3197
  %v4885 = vunpack.c.l.b16 %v3207
  %v4886 = vunpack.c.l.b16 %v3221
  %v4887 = vunpack.c.l.b16 %v3231
  %v4888 = vunpack.c.l.b16 %v3245
  %v4889 = vunpack.c.l.b16 %v3255
  %v4890 = vunpack.c.l.b16 %v3269
  %v4891 = vunpack.c.l.b16 %v3279
  %v4892 = vunpack.c.l.b16 %v3293
  %v4893 = vunpack.c.l.b16 %v3303
  %v4894 = vunpack.c.l.b16 %v3317
  %v4895 = vunpack.c.l.b16 %v3327
  %v4896 = vpack.c.b16 %v4833, %v4832
  %v4897 = vpack.c.b16 %v4835, %v4834
  %v4898 = vpack.c.b16 %v4837, %v4836
  %v4899 = vpack.c.b16 %v4839, %v4838
  %v4900 = vpack.c.b16 %v4841, %v4840
  %v4901 = vpack.c.b16 %v4843, %v4842
  %v4902 = vpack.c.b16 %v4845, %v4844
  %v4903 = vpack.c.b16 %v4847, %v4846
  %v4904 = vpack.c.b16 %v4849, %v4848
  %v4905 = vpack.c.b16 %v4851, %v4850
  %v4906 = vpack.c.b16 %v4853, %v4852
  %v4907 = vpack.c.b16 %v4855, %v4854
  %v4908 = vpack.c.b16 %v4857, %v4856
  %v4909 = vpack.c.b16 %v4859, %v4858
  %v4910 = vpack.c.b16 %v4861, %v4860
  %v4911 = vpack.c.b16 %v4863, %v4862
  %v4912 = vpack.c.b16 %v4865, %v4864
  %v4913 = vpack.c.b16 %v4867, %v4866
  %v4914 = vpack.c.b16 %v4869, %v4868
  %v4915 = vpack.c.b16 %v4871, %v4870
  %v4916 = vpack.c.b16 %v4873, %v4872
  %v4917 = vpack.c.b16 %v4875, %v4874
  %v4918 = vpack.c.b16 %v4877, %v4876
  %v4919 = vpack.c.b16 %v4879, %v4878
  %v4920 = vpack.c.b16 %v4881, %v4880
  %v4921 = vpack.c.b16 %v4883, %v4882
  %v4922 = vpack.c.b16 %v4885, %v4884
  %v4923 = vpack.c.b16 %v4887, %v4886
  %v4924 = vpack.c.b16 %v4889, %v4888
  %v4925 = vpack.c.b16 %v4891, %v4890
  %v4926 = vpack.c.b16 %v4893, %v4892
  %v4927 = vpack.c.b16 %v4895, %v4894
  %4928 = vrot.lane.b32.xlu0 %v4896, 28
  %v4929 = vpop.permute.xlu0 %4928
  %4930 = vrot.lane.b32.xlu0 %v4897, 28
  %v4931 = vpop.permute.xlu0 %4930
  %4932 = vrot.lane.b32.xlu0 %v4898, 28
  %v4933 = vpop.permute.xlu0 %4932
  %4934 = vrot.lane.b32.xlu0 %v4899, 28
  %v4935 = vpop.permute.xlu0 %4934
  %4936 = vrot.lane.b32.xlu0 %v4900, 28
  %v4937 = vpop.permute.xlu0 %4936
  %4938 = vrot.lane.b32.xlu0 %v4901, 28
  %v4939 = vpop.permute.xlu0 %4938
  %4940 = vrot.lane.b32.xlu0 %v4902, 28
  %v4941 = vpop.permute.xlu0 %4940
  %4942 = vrot.lane.b32.xlu0 %v4903, 28
  %v4943 = vpop.permute.xlu0 %4942
  %4944 = vrot.lane.b32.xlu0 %v4904, 28
  %v4945 = vpop.permute.xlu0 %4944
  %4946 = vrot.lane.b32.xlu0 %v4905, 28
  %v4947 = vpop.permute.xlu0 %4946
  %4948 = vrot.lane.b32.xlu0 %v4906, 28
  %v4949 = vpop.permute.xlu0 %4948
  %4950 = vrot.lane.b32.xlu0 %v4907, 28
  %v4951 = vpop.permute.xlu0 %4950
  %4952 = vrot.lane.b32.xlu0 %v4908, 28
  %v4953 = vpop.permute.xlu0 %4952
  %4954 = vrot.lane.b32.xlu0 %v4909, 28
  %v4955 = vpop.permute.xlu0 %4954
  %4956 = vrot.lane.b32.xlu0 %v4910, 28
  %v4957 = vpop.permute.xlu0 %4956
  %4958 = vrot.lane.b32.xlu0 %v4911, 28
  %v4959 = vpop.permute.xlu0 %4958
  %4960 = vrot.lane.b32.xlu0 %v4912, 28
  %v4961 = vpop.permute.xlu0 %4960
  %4962 = vrot.lane.b32.xlu0 %v4913, 28
  %v4963 = vpop.permute.xlu0 %4962
  %4964 = vrot.lane.b32.xlu0 %v4914, 28
  %v4965 = vpop.permute.xlu0 %4964
  %4966 = vrot.lane.b32.xlu0 %v4915, 28
  %v4967 = vpop.permute.xlu0 %4966
  %4968 = vrot.lane.b32.xlu0 %v4916, 28
  %v4969 = vpop.permute.xlu0 %4968
  %4970 = vrot.lane.b32.xlu0 %v4917, 28
  %v4971 = vpop.permute.xlu0 %4970
  %4972 = vrot.lane.b32.xlu0 %v4918, 28
  %v4973 = vpop.permute.xlu0 %4972
  %4974 = vrot.lane.b32.xlu0 %v4919, 28
  %v4975 = vpop.permute.xlu0 %4974
  %4976 = vrot.lane.b32.xlu0 %v4920, 28
  %v4977 = vpop.permute.xlu0 %4976
  %4978 = vrot.lane.b32.xlu0 %v4921, 28
  %v4979 = vpop.permute.xlu0 %4978
  %4980 = vrot.lane.b32.xlu0 %v4922, 28
  %v4981 = vpop.permute.xlu0 %4980
  %4982 = vrot.lane.b32.xlu0 %v4923, 28
  %v4983 = vpop.permute.xlu0 %4982
  %4984 = vrot.lane.b32.xlu0 %v4924, 28
  %v4985 = vpop.permute.xlu0 %4984
  %4986 = vrot.lane.b32.xlu0 %v4925, 28
  %v4987 = vpop.permute.xlu0 %4986
  %4988 = vrot.lane.b32.xlu0 %v4926, 28
  %v4989 = vpop.permute.xlu0 %4988
  %4990 = vrot.lane.b32.xlu0 %v4927, 28
  %v4991 = vpop.permute.xlu0 %4990
  %v4992 = vunpack.c.l.b16 %v3459
  %v4993 = vunpack.c.l.b16 %v3462
  %v4994 = vunpack.c.l.b16 %v3466
  %v4995 = vunpack.c.l.b16 %v3469
  %v4996 = vunpack.c.l.b16 %v3473
  %v4997 = vunpack.c.l.b16 %v3476
  %v4998 = vunpack.c.l.b16 %v3480
  %v4999 = vunpack.c.l.b16 %v3483
  %v5000 = vunpack.c.l.b16 %v3487
  %v5001 = vunpack.c.l.b16 %v3490
  %v5002 = vunpack.c.l.b16 %v3494
  %v5003 = vunpack.c.l.b16 %v3497
  %v5004 = vunpack.c.l.b16 %v3501
  %v5005 = vunpack.c.l.b16 %v3504
  %v5006 = vunpack.c.l.b16 %v3508
  %v5007 = vunpack.c.l.b16 %v3511
  %v5008 = vunpack.c.l.b16 %v3515
  %v5009 = vunpack.c.l.b16 %v3518
  %v5010 = vunpack.c.l.b16 %v3522
  %v5011 = vunpack.c.l.b16 %v3525
  %v5012 = vunpack.c.l.b16 %v3529
  %v5013 = vunpack.c.l.b16 %v3532
  %v5014 = vunpack.c.l.b16 %v3536
  %v5015 = vunpack.c.l.b16 %v3539
  %v5016 = vunpack.c.l.b16 %v3543
  %v5017 = vunpack.c.l.b16 %v3546
  %v5018 = vunpack.c.l.b16 %v3550
  %v5019 = vunpack.c.l.b16 %v3553
  %v5020 = vunpack.c.l.b16 %v3557
  %v5021 = vunpack.c.l.b16 %v3560
  %v5022 = vunpack.c.l.b16 %v3564
  %v5023 = vunpack.c.l.b16 %v3567
  %v5024 = vunpack.c.l.b16 %v3571
  %v5025 = vunpack.c.l.b16 %v3574
  %v5026 = vunpack.c.l.b16 %v3578
  %v5027 = vunpack.c.l.b16 %v3581
  %v5028 = vunpack.c.l.b16 %v3585
  %v5029 = vunpack.c.l.b16 %v3588
  %v5030 = vunpack.c.l.b16 %v3592
  %v5031 = vunpack.c.l.b16 %v3595
  %v5032 = vunpack.c.l.b16 %v3599
  %v5033 = vunpack.c.l.b16 %v3602
  %v5034 = vunpack.c.l.b16 %v3606
  %v5035 = vunpack.c.l.b16 %v3609
  %v5036 = vunpack.c.l.b16 %v3613
  %v5037 = vunpack.c.l.b16 %v3616
  %v5038 = vunpack.c.l.b16 %v3620
  %v5039 = vunpack.c.l.b16 %v3623
  %v5040 = vunpack.c.l.b16 %v3627
  %v5041 = vunpack.c.l.b16 %v3630
  %v5042 = vunpack.c.l.b16 %v3634
  %v5043 = vunpack.c.l.b16 %v3637
  %v5044 = vunpack.c.l.b16 %v3641
  %v5045 = vunpack.c.l.b16 %v3644
  %v5046 = vunpack.c.l.b16 %v3648
  %v5047 = vunpack.c.l.b16 %v3651
  %v5048 = vunpack.c.l.b16 %v3655
  %v5049 = vunpack.c.l.b16 %v3658
  %v5050 = vunpack.c.l.b16 %v3662
  %v5051 = vunpack.c.l.b16 %v3665
  %v5052 = vunpack.c.l.b16 %v3669
  %v5053 = vunpack.c.l.b16 %v3672
  %v5054 = vunpack.c.l.b16 %v3676
  %v5055 = vunpack.c.l.b16 %v3679
  %v5056 = vpack.c.b16 %v4993, %v4992
  %v5057 = vpack.c.b16 %v4995, %v4994
  %v5058 = vpack.c.b16 %v4997, %v4996
  %v5059 = vpack.c.b16 %v4999, %v4998
  %v5060 = vpack.c.b16 %v5001, %v5000
  %v5061 = vpack.c.b16 %v5003, %v5002
  %v5062 = vpack.c.b16 %v5005, %v5004
  %v5063 = vpack.c.b16 %v5007, %v5006
  %v5064 = vpack.c.b16 %v5009, %v5008
  %v5065 = vpack.c.b16 %v5011, %v5010
  %v5066 = vpack.c.b16 %v5013, %v5012
  %v5067 = vpack.c.b16 %v5015, %v5014
  %v5068 = vpack.c.b16 %v5017, %v5016
  %v5069 = vpack.c.b16 %v5019, %v5018
  %v5070 = vpack.c.b16 %v5021, %v5020
  %v5071 = vpack.c.b16 %v5023, %v5022
  %v5072 = vpack.c.b16 %v5025, %v5024
  %v5073 = vpack.c.b16 %v5027, %v5026
  %v5074 = vpack.c.b16 %v5029, %v5028
  %v5075 = vpack.c.b16 %v5031, %v5030
  %v5076 = vpack.c.b16 %v5033, %v5032
  %v5077 = vpack.c.b16 %v5035, %v5034
  %v5078 = vpack.c.b16 %v5037, %v5036
  %v5079 = vpack.c.b16 %v5039, %v5038
  %v5080 = vpack.c.b16 %v5041, %v5040
  %v5081 = vpack.c.b16 %v5043, %v5042
  %v5082 = vpack.c.b16 %v5045, %v5044
  %v5083 = vpack.c.b16 %v5047, %v5046
  %v5084 = vpack.c.b16 %v5049, %v5048
  %v5085 = vpack.c.b16 %v5051, %v5050
  %v5086 = vpack.c.b16 %v5053, %v5052
  %v5087 = vpack.c.b16 %v5055, %v5054
  %5088 = vrot.lane.b32.xlu0 %v5056, 32
  %v5089 = vpop.permute.xlu0 %5088
  %5090 = vrot.lane.b32.xlu0 %v5057, 32
  %v5091 = vpop.permute.xlu0 %5090
  %5092 = vrot.lane.b32.xlu0 %v5058, 32
  %v5093 = vpop.permute.xlu0 %5092
  %5094 = vrot.lane.b32.xlu0 %v5059, 32
  %v5095 = vpop.permute.xlu0 %5094
  %5096 = vrot.lane.b32.xlu0 %v5060, 32
  %v5097 = vpop.permute.xlu0 %5096
  %5098 = vrot.lane.b32.xlu0 %v5061, 32
  %v5099 = vpop.permute.xlu0 %5098
  %5100 = vrot.lane.b32.xlu0 %v5062, 32
  %v5101 = vpop.permute.xlu0 %5100
  %5102 = vrot.lane.b32.xlu0 %v5063, 32
  %v5103 = vpop.permute.xlu0 %5102
  %5104 = vrot.lane.b32.xlu0 %v5064, 32
  %v5105 = vpop.permute.xlu0 %5104
  %5106 = vrot.lane.b32.xlu0 %v5065, 32
  %v5107 = vpop.permute.xlu0 %5106
  %5108 = vrot.lane.b32.xlu0 %v5066, 32
  %v5109 = vpop.permute.xlu0 %5108
  %5110 = vrot.lane.b32.xlu0 %v5067, 32
  %v5111 = vpop.permute.xlu0 %5110
  %5112 = vrot.lane.b32.xlu0 %v5068, 32
  %v5113 = vpop.permute.xlu0 %5112
  %5114 = vrot.lane.b32.xlu0 %v5069, 32
  %v5115 = vpop.permute.xlu0 %5114
  %5116 = vrot.lane.b32.xlu0 %v5070, 32
  %v5117 = vpop.permute.xlu0 %5116
  %5118 = vrot.lane.b32.xlu0 %v5071, 32
  %v5119 = vpop.permute.xlu0 %5118
  %5120 = vrot.lane.b32.xlu0 %v5072, 32
  %v5121 = vpop.permute.xlu0 %5120
  %5122 = vrot.lane.b32.xlu0 %v5073, 32
  %v5123 = vpop.permute.xlu0 %5122
  %5124 = vrot.lane.b32.xlu0 %v5074, 32
  %v5125 = vpop.permute.xlu0 %5124
  %5126 = vrot.lane.b32.xlu0 %v5075, 32
  %v5127 = vpop.permute.xlu0 %5126
  %5128 = vrot.lane.b32.xlu0 %v5076, 32
  %v5129 = vpop.permute.xlu0 %5128
  %5130 = vrot.lane.b32.xlu0 %v5077, 32
  %v5131 = vpop.permute.xlu0 %5130
  %5132 = vrot.lane.b32.xlu0 %v5078, 32
  %v5133 = vpop.permute.xlu0 %5132
  %5134 = vrot.lane.b32.xlu0 %v5079, 32
  %v5135 = vpop.permute.xlu0 %5134
  %5136 = vrot.lane.b32.xlu0 %v5080, 32
  %v5137 = vpop.permute.xlu0 %5136
  %5138 = vrot.lane.b32.xlu0 %v5081, 32
  %v5139 = vpop.permute.xlu0 %5138
  %5140 = vrot.lane.b32.xlu0 %v5082, 32
  %v5141 = vpop.permute.xlu0 %5140
  %5142 = vrot.lane.b32.xlu0 %v5083, 32
  %v5143 = vpop.permute.xlu0 %5142
  %5144 = vrot.lane.b32.xlu0 %v5084, 32
  %v5145 = vpop.permute.xlu0 %5144
  %5146 = vrot.lane.b32.xlu0 %v5085, 32
  %v5147 = vpop.permute.xlu0 %5146
  %5148 = vrot.lane.b32.xlu0 %v5086, 32
  %v5149 = vpop.permute.xlu0 %5148
  %5150 = vrot.lane.b32.xlu0 %v5087, 32
  %v5151 = vpop.permute.xlu0 %5150
  %vm5152 = vcmask 31744
  %v5155 = vsel %vm5152, %v3776, %v3905
  %v5158 = vsel %vm5152, %v3777, %v3907
  %v5161 = vsel %vm5152, %v3778, %v3909
  %v5164 = vsel %vm5152, %v3779, %v3911
  %v5167 = vsel %vm5152, %v3780, %v3913
  %v5170 = vsel %vm5152, %v3781, %v3915
  %v5173 = vsel %vm5152, %v3782, %v3917
  %v5176 = vsel %vm5152, %v3783, %v3919
  %v5179 = vsel %vm5152, %v3784, %v3921
  %v5182 = vsel %vm5152, %v3785, %v3923
  %v5185 = vsel %vm5152, %v3786, %v3925
  %v5188 = vsel %vm5152, %v3787, %v3927
  %v5191 = vsel %vm5152, %v3788, %v3929
  %v5194 = vsel %vm5152, %v3789, %v3931
  %v5197 = vsel %vm5152, %v3790, %v3933
  %v5200 = vsel %vm5152, %v3791, %v3935
  %v5203 = vsel %vm5152, %v3792, %v3937
  %v5206 = vsel %vm5152, %v3793, %v3939
  %v5209 = vsel %vm5152, %v3794, %v3941
  %v5212 = vsel %vm5152, %v3795, %v3943
  %v5215 = vsel %vm5152, %v3796, %v3945
  %v5218 = vsel %vm5152, %v3797, %v3947
  %v5221 = vsel %vm5152, %v3798, %v3949
  %v5224 = vsel %vm5152, %v3799, %v3951
  %v5227 = vsel %vm5152, %v3800, %v3953
  %v5230 = vsel %vm5152, %v3801, %v3955
  %v5233 = vsel %vm5152, %v3802, %v3957
  %v5236 = vsel %vm5152, %v3803, %v3959
  %v5239 = vsel %vm5152, %v3804, %v3961
  %v5242 = vsel %vm5152, %v3805, %v3963
  %v5245 = vsel %vm5152, %v3806, %v3965
  %v5248 = vsel %vm5152, %v3807, %v3967
  %vm5249 = vcmask 64512
  %v5251 = vsel %vm5249, %v5155, %v4065
  %v5253 = vsel %vm5249, %v5158, %v4067
  %v5255 = vsel %vm5249, %v5161, %v4069
  %v5257 = vsel %vm5249, %v5164, %v4071
  %v5259 = vsel %vm5249, %v5167, %v4073
  %v5261 = vsel %vm5249, %v5170, %v4075
  %v5263 = vsel %vm5249, %v5173, %v4077
  %v5265 = vsel %vm5249, %v5176, %v4079
  %v5267 = vsel %vm5249, %v5179, %v4081
  %v5269 = vsel %vm5249, %v5182, %v4083
  %v5271 = vsel %vm5249, %v5185, %v4085
  %v5273 = vsel %vm5249, %v5188, %v4087
  %v5275 = vsel %vm5249, %v5191, %v4089
  %v5277 = vsel %vm5249, %v5194, %v4091
  %v5279 = vsel %vm5249, %v5197, %v4093
  %v5281 = vsel %vm5249, %v5200, %v4095
  %v5283 = vsel %vm5249, %v5203, %v4097
  %v5285 = vsel %vm5249, %v5206, %v4099
  %v5287 = vsel %vm5249, %v5209, %v4101
  %v5289 = vsel %vm5249, %v5212, %v4103
  %v5291 = vsel %vm5249, %v5215, %v4105
  %v5293 = vsel %vm5249, %v5218, %v4107
  %v5295 = vsel %vm5249, %v5221, %v4109
  %v5297 = vsel %vm5249, %v5224, %v4111
  %v5299 = vsel %vm5249, %v5227, %v4113
  %v5301 = vsel %vm5249, %v5230, %v4115
  %v5303 = vsel %vm5249, %v5233, %v4117
  %v5305 = vsel %vm5249, %v5236, %v4119
  %v5307 = vsel %vm5249, %v5239, %v4121
  %v5309 = vsel %vm5249, %v5242, %v4123
  %v5311 = vsel %vm5249, %v5245, %v4125
  %v5313 = vsel %vm5249, %v5248, %v4127
  %vm5314 = vcmask 97280
  %v5316 = vsel %vm5314, %v5251, %v4257
  %v5318 = vsel %vm5314, %v5253, %v4259
  %v5320 = vsel %vm5314, %v5255, %v4261
  %v5322 = vsel %vm5314, %v5257, %v4263
  %v5324 = vsel %vm5314, %v5259, %v4265
  %v5326 = vsel %vm5314, %v5261, %v4267
  %v5328 = vsel %vm5314, %v5263, %v4269
  %v5330 = vsel %vm5314, %v5265, %v4271
  %v5332 = vsel %vm5314, %v5267, %v4273
  %v5334 = vsel %vm5314, %v5269, %v4275
  %v5336 = vsel %vm5314, %v5271, %v4277
  %v5338 = vsel %vm5314, %v5273, %v4279
  %v5340 = vsel %vm5314, %v5275, %v4281
  %v5342 = vsel %vm5314, %v5277, %v4283
  %v5344 = vsel %vm5314, %v5279, %v4285
  %v5346 = vsel %vm5314, %v5281, %v4287
  %v5348 = vsel %vm5314, %v5283, %v4289
  %v5350 = vsel %vm5314, %v5285, %v4291
  %v5352 = vsel %vm5314, %v5287, %v4293
  %v5354 = vsel %vm5314, %v5289, %v4295
  %v5356 = vsel %vm5314, %v5291, %v4297
  %v5358 = vsel %vm5314, %v5293, %v4299
  %v5360 = vsel %vm5314, %v5295, %v4301
  %v5362 = vsel %vm5314, %v5297, %v4303
  %v5364 = vsel %vm5314, %v5299, %v4305
  %v5366 = vsel %vm5314, %v5301, %v4307
  %v5368 = vsel %vm5314, %v5303, %v4309
  %v5370 = vsel %vm5314, %v5305, %v4311
  %v5372 = vsel %vm5314, %v5307, %v4313
  %v5374 = vsel %vm5314, %v5309, %v4315
  %v5376 = vsel %vm5314, %v5311, %v4317
  %v5378 = vsel %vm5314, %v5313, %v4319
  %vm5379 = vcmask 130048
  %v5381 = vsel %vm5379, %v5316, %v4417
  %v5383 = vsel %vm5379, %v5318, %v4419
  %v5385 = vsel %vm5379, %v5320, %v4421
  %v5387 = vsel %vm5379, %v5322, %v4423
  %v5389 = vsel %vm5379, %v5324, %v4425
  %v5391 = vsel %vm5379, %v5326, %v4427
  %v5393 = vsel %vm5379, %v5328, %v4429
  %v5395 = vsel %vm5379, %v5330, %v4431
  %v5397 = vsel %vm5379, %v5332, %v4433
  %v5399 = vsel %vm5379, %v5334, %v4435
  %v5401 = vsel %vm5379, %v5336, %v4437
  %v5403 = vsel %vm5379, %v5338, %v4439
  %v5405 = vsel %vm5379, %v5340, %v4441
  %v5407 = vsel %vm5379, %v5342, %v4443
  %v5409 = vsel %vm5379, %v5344, %v4445
  %v5411 = vsel %vm5379, %v5346, %v4447
  %v5413 = vsel %vm5379, %v5348, %v4449
  %v5415 = vsel %vm5379, %v5350, %v4451
  %v5417 = vsel %vm5379, %v5352, %v4453
  %v5419 = vsel %vm5379, %v5354, %v4455
  %v5421 = vsel %vm5379, %v5356, %v4457
  %v5423 = vsel %vm5379, %v5358, %v4459
  %v5425 = vsel %vm5379, %v5360, %v4461
  %v5427 = vsel %vm5379, %v5362, %v4463
  %v5429 = vsel %vm5379, %v5364, %v4465
  %v5431 = vsel %vm5379, %v5366, %v4467
  %v5433 = vsel %vm5379, %v5368, %v4469
  %v5435 = vsel %vm5379, %v5370, %v4471
  %v5437 = vsel %vm5379, %v5372, %v4473
  %v5439 = vsel %vm5379, %v5374, %v4475
  %v5441 = vsel %vm5379, %v5376, %v4477
  %v5443 = vsel %vm5379, %v5378, %v4479
  %vm5444 = vcmask 162816
  %v5446 = vsel %vm5444, %v5381, %v4577
  %v5448 = vsel %vm5444, %v5383, %v4579
  %v5450 = vsel %vm5444, %v5385, %v4581
  %v5452 = vsel %vm5444, %v5387, %v4583
  %v5454 = vsel %vm5444, %v5389, %v4585
  %v5456 = vsel %vm5444, %v5391, %v4587
  %v5458 = vsel %vm5444, %v5393, %v4589
  %v5460 = vsel %vm5444, %v5395, %v4591
  %v5462 = vsel %vm5444, %v5397, %v4593
  %v5464 = vsel %vm5444, %v5399, %v4595
  %v5466 = vsel %vm5444, %v5401, %v4597
  %v5468 = vsel %vm5444, %v5403, %v4599
  %v5470 = vsel %vm5444, %v5405, %v4601
  %v5472 = vsel %vm5444, %v5407, %v4603
  %v5474 = vsel %vm5444, %v5409, %v4605
  %v5476 = vsel %vm5444, %v5411, %v4607
  %v5478 = vsel %vm5444, %v5413, %v4609
  %v5480 = vsel %vm5444, %v5415, %v4611
  %v5482 = vsel %vm5444, %v5417, %v4613
  %v5484 = vsel %vm5444, %v5419, %v4615
  %v5486 = vsel %vm5444, %v5421, %v4617
  %v5488 = vsel %vm5444, %v5423, %v4619
  %v5490 = vsel %vm5444, %v5425, %v4621
  %v5492 = vsel %vm5444, %v5427, %v4623
  %v5494 = vsel %vm5444, %v5429, %v4625
  %v5496 = vsel %vm5444, %v5431, %v4627
  %v5498 = vsel %vm5444, %v5433, %v4629
  %v5500 = vsel %vm5444, %v5435, %v4631
  %v5502 = vsel %vm5444, %v5437, %v4633
  %v5504 = vsel %vm5444, %v5439, %v4635
  %v5506 = vsel %vm5444, %v5441, %v4637
  %v5508 = vsel %vm5444, %v5443, %v4639
  %vm5509 = vcmask 195584
  %v5511 = vsel %vm5509, %v5446, %v4769
  %v5513 = vsel %vm5509, %v5448, %v4771
  %v5515 = vsel %vm5509, %v5450, %v4773
  %v5517 = vsel %vm5509, %v5452, %v4775
  %v5519 = vsel %vm5509, %v5454, %v4777
  %v5521 = vsel %vm5509, %v5456, %v4779
  %v5523 = vsel %vm5509, %v5458, %v4781
  %v5525 = vsel %vm5509, %v5460, %v4783
  %v5527 = vsel %vm5509, %v5462, %v4785
  %v5529 = vsel %vm5509, %v5464, %v4787
  %v5531 = vsel %vm5509, %v5466, %v4789
  %v5533 = vsel %vm5509, %v5468, %v4791
  %v5535 = vsel %vm5509, %v5470, %v4793
  %v5537 = vsel %vm5509, %v5472, %v4795
  %v5539 = vsel %vm5509, %v5474, %v4797
  %v5541 = vsel %vm5509, %v5476, %v4799
  %v5543 = vsel %vm5509, %v5478, %v4801
  %v5545 = vsel %vm5509, %v5480, %v4803
  %v5547 = vsel %vm5509, %v5482, %v4805
  %v5549 = vsel %vm5509, %v5484, %v4807
  %v5551 = vsel %vm5509, %v5486, %v4809
  %v5553 = vsel %vm5509, %v5488, %v4811
  %v5555 = vsel %vm5509, %v5490, %v4813
  %v5557 = vsel %vm5509, %v5492, %v4815
  %v5559 = vsel %vm5509, %v5494, %v4817
  %v5561 = vsel %vm5509, %v5496, %v4819
  %v5563 = vsel %vm5509, %v5498, %v4821
  %v5565 = vsel %vm5509, %v5500, %v4823
  %v5567 = vsel %vm5509, %v5502, %v4825
  %v5569 = vsel %vm5509, %v5504, %v4827
  %v5571 = vsel %vm5509, %v5506, %v4829
  %v5573 = vsel %vm5509, %v5508, %v4831
  %vm5574 = vcmask 228352
  %v5576 = vsel %vm5574, %v5511, %v4929
  %v5578 = vsel %vm5574, %v5513, %v4931
  %v5580 = vsel %vm5574, %v5515, %v4933
  %v5582 = vsel %vm5574, %v5517, %v4935
  %v5584 = vsel %vm5574, %v5519, %v4937
  %v5586 = vsel %vm5574, %v5521, %v4939
  %v5588 = vsel %vm5574, %v5523, %v4941
  %v5590 = vsel %vm5574, %v5525, %v4943
  %v5592 = vsel %vm5574, %v5527, %v4945
  %v5594 = vsel %vm5574, %v5529, %v4947
  %v5596 = vsel %vm5574, %v5531, %v4949
  %v5598 = vsel %vm5574, %v5533, %v4951
  %v5600 = vsel %vm5574, %v5535, %v4953
  %v5602 = vsel %vm5574, %v5537, %v4955
  %v5604 = vsel %vm5574, %v5539, %v4957
  %v5606 = vsel %vm5574, %v5541, %v4959
  %v5608 = vsel %vm5574, %v5543, %v4961
  %v5610 = vsel %vm5574, %v5545, %v4963
  %v5612 = vsel %vm5574, %v5547, %v4965
  %v5614 = vsel %vm5574, %v5549, %v4967
  %v5616 = vsel %vm5574, %v5551, %v4969
  %v5618 = vsel %vm5574, %v5553, %v4971
  %v5620 = vsel %vm5574, %v5555, %v4973
  %v5622 = vsel %vm5574, %v5557, %v4975
  %v5624 = vsel %vm5574, %v5559, %v4977
  %v5626 = vsel %vm5574, %v5561, %v4979
  %v5628 = vsel %vm5574, %v5563, %v4981
  %v5630 = vsel %vm5574, %v5565, %v4983
  %v5632 = vsel %vm5574, %v5567, %v4985
  %v5634 = vsel %vm5574, %v5569, %v4987
  %v5636 = vsel %vm5574, %v5571, %v4989
  %v5638 = vsel %vm5574, %v5573, %v4991
  %vm5639 = vcmask 261120
  %v5641 = vsel %vm5639, %v5576, %v5089
  %v5643 = vsel %vm5639, %v5578, %v5091
  %v5645 = vsel %vm5639, %v5580, %v5093
  %v5647 = vsel %vm5639, %v5582, %v5095
  %v5649 = vsel %vm5639, %v5584, %v5097
  %v5651 = vsel %vm5639, %v5586, %v5099
  %v5653 = vsel %vm5639, %v5588, %v5101
  %v5655 = vsel %vm5639, %v5590, %v5103
  %v5657 = vsel %vm5639, %v5592, %v5105
  %v5659 = vsel %vm5639, %v5594, %v5107
  %v5661 = vsel %vm5639, %v5596, %v5109
  %v5663 = vsel %vm5639, %v5598, %v5111
  %v5665 = vsel %vm5639, %v5600, %v5113
  %v5667 = vsel %vm5639, %v5602, %v5115
  %v5669 = vsel %vm5639, %v5604, %v5117
  %v5671 = vsel %vm5639, %v5606, %v5119
  %v5673 = vsel %vm5639, %v5608, %v5121
  %v5675 = vsel %vm5639, %v5610, %v5123
  %v5677 = vsel %vm5639, %v5612, %v5125
  %v5679 = vsel %vm5639, %v5614, %v5127
  %v5681 = vsel %vm5639, %v5616, %v5129
  %v5683 = vsel %vm5639, %v5618, %v5131
  %v5685 = vsel %vm5639, %v5620, %v5133
  %v5687 = vsel %vm5639, %v5622, %v5135
  %v5689 = vsel %vm5639, %v5624, %v5137
  %v5691 = vsel %vm5639, %v5626, %v5139
  %v5693 = vsel %vm5639, %v5628, %v5141
  %v5695 = vsel %vm5639, %v5630, %v5143
  %v5697 = vsel %vm5639, %v5632, %v5145
  %v5699 = vsel %vm5639, %v5634, %v5147
  %v5701 = vsel %vm5639, %v5636, %v5149
  %v5703 = vsel %vm5639, %v5638, %v5151
  %v5704 = vld [vmem:[%s1] sm:$0xf]
  %v5705 = vld [vmem:[%s1 + $0x4] sm:$0xf]
  %v5706 = vld [vmem:[%s1 + $0x8] sm:$0xf]
  %v5707 = vld [vmem:[%s1 + $0xc] sm:$0xf]
  %v5708 = vld [vmem:[%s1 + $0x10] sm:$0x3]
  %v5709 = vld [vmem:[%s2] sm:$0x1]
  %v5711 = vlaneseq
  %v5712 = vshrl.u32 %v5711, 7
  %v5713 = vsub.s32 0, %v5712
  %v5714 = vrot.slane %v5709, %v5713
  %v5721 = vunpack.c.l.b16 %v5704
  %v5722 = vunpack.c.l.b16 %v5705
  %v5723 = vunpack.c.l.b16 %v5706
  %v5724 = vunpack.c.l.b16 %v5707
  %v5725 = vunpack.c.l.b16 %v5708
  %v5726 = vpack.c.b16 %v5722, %v5721
  %v5727 = vpack.c.b16 %v5724, %v5723
  %v5728 = vpack.c.b16 %v5725, %v5725
  %vm5731 = vcmask 293888
  %v5732 = vsel %vm5731, %v5641, 0
  %v5734 = vsel %vm5731, %v5643, 0
  %v5736 = vsel %vm5731, %v5645, 0
  %v5738 = vsel %vm5731, %v5647, 0
  %v5740 = vsel %vm5731, %v5649, 0
  %v5742 = vsel %vm5731, %v5651, 0
  %v5744 = vsel %vm5731, %v5653, 0
  %v5746 = vsel %vm5731, %v5655, 0
  %v5748 = vsel %vm5731, %v5657, 0
  %v5750 = vsel %vm5731, %v5659, 0
  %v5752 = vsel %vm5731, %v5661, 0
  %v5754 = vsel %vm5731, %v5663, 0
  %v5756 = vsel %vm5731, %v5665, 0
  %v5758 = vsel %vm5731, %v5667, 0
  %v5760 = vsel %vm5731, %v5669, 0
  %v5762 = vsel %vm5731, %v5671, 0
  %v5764 = vsel %vm5731, %v5673, 0
  %v5766 = vsel %vm5731, %v5675, 0
  %v5768 = vsel %vm5731, %v5677, 0
  %v5770 = vsel %vm5731, %v5679, 0
  %v5772 = vsel %vm5731, %v5681, 0
  %v5774 = vsel %vm5731, %v5683, 0
  %v5776 = vsel %vm5731, %v5685, 0
  %v5778 = vsel %vm5731, %v5687, 0
  %v5780 = vsel %vm5731, %v5689, 0
  %v5782 = vsel %vm5731, %v5691, 0
  %v5784 = vsel %vm5731, %v5693, 0
  %v5786 = vsel %vm5731, %v5695, 0
  %v5788 = vsel %vm5731, %v5697, 0
  %v5790 = vsel %vm5731, %v5699, 0
  %v5792 = vsel %vm5731, %v5701, 0
  %v5794 = vsel %vm5731, %v5703, 0
  %vm5796 = vcmask 1041408
  %v5798 = vsel %vm5796, %v5728, 0
  %5800 = vmatprep.subr.bf16.mxu0 0
  %5801 = vmatpush1.bf16.msra.mxu0 %v5726
  %5802 = vmatprep.subr.bf16.mxu0 0
  %5803 = vmatpush1.bf16.msra.mxu0 %v5727
  %5804 = vmatprep.subr.bf16.mxu0 0
  %5805 = vmatpush1.bf16.msra.mxu0 %v5798
  %5806 = vmatprep.subr.bf16.mxu0 0
  %5807 = vmatpush1.bf16.msra.mxu0 0
  %5808 = vmatprep.subr.bf16.mxu0 0
  %5809 = vmatpush1.bf16.msra.mxu0 0
  %5810 = vmatprep.subr.bf16.mxu0 0
  %5811 = vmatpush1.bf16.msra.mxu0 0
  %5812 = vmatprep.subr.bf16.mxu0 0
  %5813 = vmatpush1.bf16.msra.mxu0 0
  %5814 = vmatprep.subr.bf16.mxu0 0
  %5815 = vmatpush1.bf16.msra.mxu0 0
  %5816 = vmatprep.subr.bf16.mxu0 0
  %5817 = vmatpush1.bf16.msra.mxu0 0
  %5818 = vmatprep.subr.bf16.mxu0 0
  %5819 = vmatpush1.bf16.msra.mxu0 0
  %5820 = vmatprep.subr.bf16.mxu0 0
  %5821 = vmatpush1.bf16.msra.mxu0 0
  %5822 = vmatprep.subr.bf16.mxu0 0
  %5823 = vmatpush1.bf16.msra.mxu0 0
  %5824 = vmatprep.subr.bf16.mxu0 0
  %5825 = vmatpush1.bf16.msra.mxu0 0
  %5826 = vmatprep.subr.bf16.mxu0 0
  %5827 = vmatpush1.bf16.msra.mxu0 0
  %5828 = vmatprep.subr.bf16.mxu0 0
  %5829 = vmatpush1.bf16.msra.mxu0 0
  %5830 = vmatprep.subr.bf16.mxu0 0
  %5831 = vmatpush1.bf16.msra.mxu0 0
  %5832 = vmatprep.mubr.bf16.mxu0 0
  %5833 = vmatmul.mubr.bf16.gmra.mrb[0].mxu0 %v5732
  %v5834 = vpop.f32.mrb[0].mxu0
  %v5835 = vadd.f32 %v5714, %v5834
  %v5836 = vpop.f32.mrb[0].mxu0
  %v5837 = vpop.f32.mrb[0].mxu0
  %v5838 = vadd.f32 %v5714, %v5837
  %v5839 = vpop.f32.mrb[0].mxu0
  %5840 = vmatprep.mubr.bf16.mxu0 0
  %5841 = vmatmul.mubr.bf16.gmra.mrb[0].mxu0 %v5734
  %v5842 = vpop.f32.mrb[0].mxu0
  %v5843 = vadd.f32 %v5714, %v5842
  %v5844 = vpop.f32.mrb[0].mxu0
  %v5845 = vpop.f32.mrb[0].mxu0
  %v5846 = vadd.f32 %v5714, %v5845
  %v5847 = vpop.f32.mrb[0].mxu0
  %5848 = vmatprep.mubr.bf16.mxu0 0
  %5849 = vmatmul.mubr.bf16.gmra.mrb[0].mxu0 %v5736
  %v5850 = vpop.f32.mrb[0].mxu0
  %v5851 = vadd.f32 %v5714, %v5850
  %v5852 = vpop.f32.mrb[0].mxu0
  %v5853 = vpop.f32.mrb[0].mxu0
  %v5854 = vadd.f32 %v5714, %v5853
  %v5855 = vpop.f32.mrb[0].mxu0
  %5856 = vmatprep.mubr.bf16.mxu0 0
  %5857 = vmatmul.mubr.bf16.gmra.mrb[0].mxu0 %v5738
  %v5858 = vpop.f32.mrb[0].mxu0
  %v5859 = vadd.f32 %v5714, %v5858
  %v5860 = vpop.f32.mrb[0].mxu0
  %v5861 = vpop.f32.mrb[0].mxu0
  %v5862 = vadd.f32 %v5714, %v5861
  %v5863 = vpop.f32.mrb[0].mxu0
  %5864 = vmatprep.mubr.bf16.mxu0 0
  %5865 = vmatmul.mubr.bf16.gmra.mrb[0].mxu0 %v5740
  %v5866 = vpop.f32.mrb[0].mxu0
  %v5867 = vadd.f32 %v5714, %v5866
  %v5868 = vpop.f32.mrb[0].mxu0
  %v5869 = vpop.f32.mrb[0].mxu0
  %v5870 = vadd.f32 %v5714, %v5869
  %v5871 = vpop.f32.mrb[0].mxu0
  %5872 = vmatprep.mubr.bf16.mxu0 0
  %5873 = vmatmul.mubr.bf16.gmra.mrb[0].mxu0 %v5742
  %v5874 = vpop.f32.mrb[0].mxu0
  %v5875 = vadd.f32 %v5714, %v5874
  %v5876 = vpop.f32.mrb[0].mxu0
  %v5877 = vpop.f32.mrb[0].mxu0
  %v5878 = vadd.f32 %v5714, %v5877
  %v5879 = vpop.f32.mrb[0].mxu0
  %5880 = vmatprep.mubr.bf16.mxu0 0
  %5881 = vmatmul.mubr.bf16.gmra.mrb[0].mxu0 %v5744
  %v5882 = vpop.f32.mrb[0].mxu0
  %v5883 = vadd.f32 %v5714, %v5882
  %v5884 = vpop.f32.mrb[0].mxu0
  %v5885 = vpop.f32.mrb[0].mxu0
  %v5886 = vadd.f32 %v5714, %v5885
  %v5887 = vpop.f32.mrb[0].mxu0
  %5888 = vmatprep.mubr.bf16.mxu0 0
  %5889 = vmatmul.mubr.bf16.gmra.mrb[0].mxu0 %v5746
  %v5890 = vpop.f32.mrb[0].mxu0
  %v5891 = vadd.f32 %v5714, %v5890
  %v5892 = vpop.f32.mrb[0].mxu0
  %v5893 = vpop.f32.mrb[0].mxu0
  %v5894 = vadd.f32 %v5714, %v5893
  %v5895 = vpop.f32.mrb[0].mxu0
  %5896 = vmatprep.mubr.bf16.mxu0 0
  %5897 = vmatmul.mubr.bf16.gmra.mrb[0].mxu0 %v5748
  %v5898 = vpop.f32.mrb[0].mxu0
  %v5899 = vadd.f32 %v5714, %v5898
  %v5900 = vpop.f32.mrb[0].mxu0
  %v5901 = vpop.f32.mrb[0].mxu0
  %v5902 = vadd.f32 %v5714, %v5901
  %v5903 = vpop.f32.mrb[0].mxu0
  %5904 = vmatprep.mubr.bf16.mxu0 0
  %5905 = vmatmul.mubr.bf16.gmra.mrb[0].mxu0 %v5750
  %v5906 = vpop.f32.mrb[0].mxu0
  %v5907 = vadd.f32 %v5714, %v5906
  %v5908 = vpop.f32.mrb[0].mxu0
  %v5909 = vpop.f32.mrb[0].mxu0
  %v5910 = vadd.f32 %v5714, %v5909
  %v5911 = vpop.f32.mrb[0].mxu0
  %5912 = vmatprep.mubr.bf16.mxu0 0
  %5913 = vmatmul.mubr.bf16.gmra.mrb[0].mxu0 %v5752
  %v5914 = vpop.f32.mrb[0].mxu0
  %v5915 = vadd.f32 %v5714, %v5914
  %v5916 = vpop.f32.mrb[0].mxu0
  %v5917 = vpop.f32.mrb[0].mxu0
  %v5918 = vadd.f32 %v5714, %v5917
  %v5919 = vpop.f32.mrb[0].mxu0
  %5920 = vmatprep.mubr.bf16.mxu0 0
  %5921 = vmatmul.mubr.bf16.gmra.mrb[0].mxu0 %v5754
  %v5922 = vpop.f32.mrb[0].mxu0
  %v5923 = vadd.f32 %v5714, %v5922
  %v5924 = vpop.f32.mrb[0].mxu0
  %v5925 = vpop.f32.mrb[0].mxu0
  %v5926 = vadd.f32 %v5714, %v5925
  %v5927 = vpop.f32.mrb[0].mxu0
  %5928 = vmatprep.mubr.bf16.mxu0 0
  %5929 = vmatmul.mubr.bf16.gmra.mrb[0].mxu0 %v5756
  %v5930 = vpop.f32.mrb[0].mxu0
  %v5931 = vadd.f32 %v5714, %v5930
  %v5932 = vpop.f32.mrb[0].mxu0
  %v5933 = vpop.f32.mrb[0].mxu0
  %v5934 = vadd.f32 %v5714, %v5933
  %v5935 = vpop.f32.mrb[0].mxu0
  %5936 = vmatprep.mubr.bf16.mxu0 0
  %5937 = vmatmul.mubr.bf16.gmra.mrb[0].mxu0 %v5758
  %v5938 = vpop.f32.mrb[0].mxu0
  %v5939 = vadd.f32 %v5714, %v5938
  %v5940 = vpop.f32.mrb[0].mxu0
  %v5941 = vpop.f32.mrb[0].mxu0
  %v5942 = vadd.f32 %v5714, %v5941
  %v5943 = vpop.f32.mrb[0].mxu0
  %5944 = vmatprep.mubr.bf16.mxu0 0
  %5945 = vmatmul.mubr.bf16.gmra.mrb[0].mxu0 %v5760
  %v5946 = vpop.f32.mrb[0].mxu0
  %v5947 = vadd.f32 %v5714, %v5946
  %v5948 = vpop.f32.mrb[0].mxu0
  %v5949 = vpop.f32.mrb[0].mxu0
  %v5950 = vadd.f32 %v5714, %v5949
  %v5951 = vpop.f32.mrb[0].mxu0
  %5952 = vmatprep.mubr.bf16.mxu0 0
  %5953 = vmatmul.mubr.bf16.gmra.mrb[0].mxu0 %v5762
  %v5954 = vpop.f32.mrb[0].mxu0
  %v5955 = vadd.f32 %v5714, %v5954
  %v5956 = vpop.f32.mrb[0].mxu0
  %v5957 = vpop.f32.mrb[0].mxu0
  %v5958 = vadd.f32 %v5714, %v5957
  %v5959 = vpop.f32.mrb[0].mxu0
  %5960 = vmatprep.mubr.bf16.mxu0 0
  %5961 = vmatmul.mubr.bf16.gmra.mrb[0].mxu0 %v5764
  %v5962 = vpop.f32.mrb[0].mxu0
  %v5963 = vadd.f32 %v5714, %v5962
  %v5964 = vpop.f32.mrb[0].mxu0
  %v5965 = vpop.f32.mrb[0].mxu0
  %v5966 = vadd.f32 %v5714, %v5965
  %v5967 = vpop.f32.mrb[0].mxu0
  %5968 = vmatprep.mubr.bf16.mxu0 0
  %5969 = vmatmul.mubr.bf16.gmra.mrb[0].mxu0 %v5766
  %v5970 = vpop.f32.mrb[0].mxu0
  %v5971 = vadd.f32 %v5714, %v5970
  %v5972 = vpop.f32.mrb[0].mxu0
  %v5973 = vpop.f32.mrb[0].mxu0
  %v5974 = vadd.f32 %v5714, %v5973
  %v5975 = vpop.f32.mrb[0].mxu0
  %5976 = vmatprep.mubr.bf16.mxu0 0
  %5977 = vmatmul.mubr.bf16.gmra.mrb[0].mxu0 %v5768
  %v5978 = vpop.f32.mrb[0].mxu0
  %v5979 = vadd.f32 %v5714, %v5978
  %v5980 = vpop.f32.mrb[0].mxu0
  %v5981 = vpop.f32.mrb[0].mxu0
  %v5982 = vadd.f32 %v5714, %v5981
  %v5983 = vpop.f32.mrb[0].mxu0
  %5984 = vmatprep.mubr.bf16.mxu0 0
  %5985 = vmatmul.mubr.bf16.gmra.mrb[0].mxu0 %v5770
  %v5986 = vpop.f32.mrb[0].mxu0
  %v5987 = vadd.f32 %v5714, %v5986
  %v5988 = vpop.f32.mrb[0].mxu0
  %v5989 = vpop.f32.mrb[0].mxu0
  %v5990 = vadd.f32 %v5714, %v5989
  %v5991 = vpop.f32.mrb[0].mxu0
  %5992 = vmatprep.mubr.bf16.mxu0 0
  %5993 = vmatmul.mubr.bf16.gmra.mrb[0].mxu0 %v5772
  %v5994 = vpop.f32.mrb[0].mxu0
  %v5995 = vadd.f32 %v5714, %v5994
  %v5996 = vpop.f32.mrb[0].mxu0
  %v5997 = vpop.f32.mrb[0].mxu0
  %v5998 = vadd.f32 %v5714, %v5997
  %v5999 = vpop.f32.mrb[0].mxu0
  %6000 = vmatprep.mubr.bf16.mxu0 0
  %6001 = vmatmul.mubr.bf16.gmra.mrb[0].mxu0 %v5774
  %v6002 = vpop.f32.mrb[0].mxu0
  %v6003 = vadd.f32 %v5714, %v6002
  %v6004 = vpop.f32.mrb[0].mxu0
  %v6005 = vpop.f32.mrb[0].mxu0
  %v6006 = vadd.f32 %v5714, %v6005
  %v6007 = vpop.f32.mrb[0].mxu0
  %6008 = vmatprep.mubr.bf16.mxu0 0
  %6009 = vmatmul.mubr.bf16.gmra.mrb[0].mxu0 %v5776
  %v6010 = vpop.f32.mrb[0].mxu0
  %v6011 = vadd.f32 %v5714, %v6010
  %v6012 = vpop.f32.mrb[0].mxu0
  %v6013 = vpop.f32.mrb[0].mxu0
  %v6014 = vadd.f32 %v5714, %v6013
  %v6015 = vpop.f32.mrb[0].mxu0
  %6016 = vmatprep.mubr.bf16.mxu0 0
  %6017 = vmatmul.mubr.bf16.gmra.mrb[0].mxu0 %v5778
  %v6018 = vpop.f32.mrb[0].mxu0
  %v6019 = vadd.f32 %v5714, %v6018
  %v6020 = vpop.f32.mrb[0].mxu0
  %v6021 = vpop.f32.mrb[0].mxu0
  %v6022 = vadd.f32 %v5714, %v6021
  %v6023 = vpop.f32.mrb[0].mxu0
  %6024 = vmatprep.mubr.bf16.mxu0 0
  %6025 = vmatmul.mubr.bf16.gmra.mrb[0].mxu0 %v5780
  %v6026 = vpop.f32.mrb[0].mxu0
  %v6027 = vadd.f32 %v5714, %v6026
  %v6028 = vpop.f32.mrb[0].mxu0
  %v6029 = vpop.f32.mrb[0].mxu0
  %v6030 = vadd.f32 %v5714, %v6029
  %v6031 = vpop.f32.mrb[0].mxu0
  %6032 = vmatprep.mubr.bf16.mxu0 0
  %6033 = vmatmul.mubr.bf16.gmra.mrb[0].mxu0 %v5782
  %v6034 = vpop.f32.mrb[0].mxu0
  %v6035 = vadd.f32 %v5714, %v6034
  %v6036 = vpop.f32.mrb[0].mxu0
  %v6037 = vpop.f32.mrb[0].mxu0
  %v6038 = vadd.f32 %v5714, %v6037
  %v6039 = vpop.f32.mrb[0].mxu0
  %6040 = vmatprep.mubr.bf16.mxu0 0
  %6041 = vmatmul.mubr.bf16.gmra.mrb[0].mxu0 %v5784
  %v6042 = vpop.f32.mrb[0].mxu0
  %v6043 = vadd.f32 %v5714, %v6042
  %v6044 = vpop.f32.mrb[0].mxu0
  %v6045 = vpop.f32.mrb[0].mxu0
  %v6046 = vadd.f32 %v5714, %v6045
  %v6047 = vpop.f32.mrb[0].mxu0
  %6048 = vmatprep.mubr.bf16.mxu0 0
  %6049 = vmatmul.mubr.bf16.gmra.mrb[0].mxu0 %v5786
  %v6050 = vpop.f32.mrb[0].mxu0
  %v6051 = vadd.f32 %v5714, %v6050
  %v6052 = vpop.f32.mrb[0].mxu0
  %v6053 = vpop.f32.mrb[0].mxu0
  %v6054 = vadd.f32 %v5714, %v6053
  %v6055 = vpop.f32.mrb[0].mxu0
  %6056 = vmatprep.mubr.bf16.mxu0 0
  %6057 = vmatmul.mubr.bf16.gmra.mrb[0].mxu0 %v5788
  %v6058 = vpop.f32.mrb[0].mxu0
  %v6059 = vadd.f32 %v5714, %v6058
  %v6060 = vpop.f32.mrb[0].mxu0
  %v6061 = vpop.f32.mrb[0].mxu0
  %v6062 = vadd.f32 %v5714, %v6061
  %v6063 = vpop.f32.mrb[0].mxu0
  %6064 = vmatprep.mubr.bf16.mxu0 0
  %6065 = vmatmul.mubr.bf16.gmra.mrb[0].mxu0 %v5790
  %v6066 = vpop.f32.mrb[0].mxu0
  %v6067 = vadd.f32 %v5714, %v6066
  %v6068 = vpop.f32.mrb[0].mxu0
  %v6069 = vpop.f32.mrb[0].mxu0
  %v6070 = vadd.f32 %v5714, %v6069
  %v6071 = vpop.f32.mrb[0].mxu0
  %6072 = vmatprep.mubr.bf16.mxu0 0
  %6073 = vmatmul.mubr.bf16.gmra.mrb[0].mxu0 %v5792
  %v6074 = vpop.f32.mrb[0].mxu0
  %v6075 = vadd.f32 %v5714, %v6074
  %v6076 = vpop.f32.mrb[0].mxu0
  %v6077 = vpop.f32.mrb[0].mxu0
  %v6078 = vadd.f32 %v5714, %v6077
  %v6079 = vpop.f32.mrb[0].mxu0
  %6080 = vmatprep.mubr.bf16.mxu0 0
  %6081 = vmatmul.mubr.bf16.gmra.mrb[0].mxu0 %v5794
  %v6082 = vpop.f32.mrb[0].mxu0
  %v6083 = vadd.f32 %v5714, %v6082
  %v6084 = vpop.f32.mrb[0].mxu0
  %v6085 = vpop.f32.mrb[0].mxu0
  %v6086 = vadd.f32 %v5714, %v6085
  %v6087 = vpop.f32.mrb[0].mxu0
  %6088 = vdwg.mxu0
  %v6089 = vmax.f32 %v5835, 0.0
  %v6090 = vmax.f32 %v5838, 0.0
  %v6091 = vmax.f32 %v5843, 0.0
  %v6092 = vmax.f32 %v5846, 0.0
  %v6093 = vmax.f32 %v5851, 0.0
  %v6094 = vmax.f32 %v5854, 0.0
  %v6095 = vmax.f32 %v5859, 0.0
  %v6096 = vmax.f32 %v5862, 0.0
  %v6097 = vmax.f32 %v5867, 0.0
  %v6098 = vmax.f32 %v5870, 0.0
  %v6099 = vmax.f32 %v5875, 0.0
  %v6100 = vmax.f32 %v5878, 0.0
  %v6101 = vmax.f32 %v5883, 0.0
  %v6102 = vmax.f32 %v5886, 0.0
  %v6103 = vmax.f32 %v5891, 0.0
  %v6104 = vmax.f32 %v5894, 0.0
  %v6105 = vmax.f32 %v5899, 0.0
  %v6106 = vmax.f32 %v5902, 0.0
  %v6107 = vmax.f32 %v5907, 0.0
  %v6108 = vmax.f32 %v5910, 0.0
  %v6109 = vmax.f32 %v5915, 0.0
  %v6110 = vmax.f32 %v5918, 0.0
  %v6111 = vmax.f32 %v5923, 0.0
  %v6112 = vmax.f32 %v5926, 0.0
  %v6113 = vmax.f32 %v5931, 0.0
  %v6114 = vmax.f32 %v5934, 0.0
  %v6115 = vmax.f32 %v5939, 0.0
  %v6116 = vmax.f32 %v5942, 0.0
  %v6117 = vmax.f32 %v5947, 0.0
  %v6118 = vmax.f32 %v5950, 0.0
  %v6119 = vmax.f32 %v5955, 0.0
  %v6120 = vmax.f32 %v5958, 0.0
  %v6121 = vmax.f32 %v5963, 0.0
  %v6122 = vmax.f32 %v5966, 0.0
  %v6123 = vmax.f32 %v5971, 0.0
  %v6124 = vmax.f32 %v5974, 0.0
  %v6125 = vmax.f32 %v5979, 0.0
  %v6126 = vmax.f32 %v5982, 0.0
  %v6127 = vmax.f32 %v5987, 0.0
  %v6128 = vmax.f32 %v5990, 0.0
  %v6129 = vmax.f32 %v5995, 0.0
  %v6130 = vmax.f32 %v5998, 0.0
  %v6131 = vmax.f32 %v6003, 0.0
  %v6132 = vmax.f32 %v6006, 0.0
  %v6133 = vmax.f32 %v6011, 0.0
  %v6134 = vmax.f32 %v6014, 0.0
  %v6135 = vmax.f32 %v6019, 0.0
  %v6136 = vmax.f32 %v6022, 0.0
  %v6137 = vmax.f32 %v6027, 0.0
  %v6138 = vmax.f32 %v6030, 0.0
  %v6139 = vmax.f32 %v6035, 0.0
  %v6140 = vmax.f32 %v6038, 0.0
  %v6141 = vmax.f32 %v6043, 0.0
  %v6142 = vmax.f32 %v6046, 0.0
  %v6143 = vmax.f32 %v6051, 0.0
  %v6144 = vmax.f32 %v6054, 0.0
  %v6145 = vmax.f32 %v6059, 0.0
  %v6146 = vmax.f32 %v6062, 0.0
  %v6147 = vmax.f32 %v6067, 0.0
  %v6148 = vmax.f32 %v6070, 0.0
  %v6149 = vmax.f32 %v6075, 0.0
  %v6150 = vmax.f32 %v6078, 0.0
  %v6151 = vmax.f32 %v6083, 0.0
  %v6152 = vmax.f32 %v6086, 0.0
  %v6153 = vld [vmem:[%s5] sm:$0xff]
  %v6154 = vld [vmem:[%s5 + $0x8] sm:$0xff]
  %v6155 = vpack.c.bf16 %v6090, %v6089
  %v6156 = vpack.c.bf16 %v6092, %v6091
  %v6157 = vpack.c.bf16 %v6094, %v6093
  %v6158 = vpack.c.bf16 %v6096, %v6095
  %v6159 = vpack.c.bf16 %v6098, %v6097
  %v6160 = vpack.c.bf16 %v6100, %v6099
  %v6161 = vpack.c.bf16 %v6102, %v6101
  %v6162 = vpack.c.bf16 %v6104, %v6103
  %v6163 = vpack.c.bf16 %v6106, %v6105
  %v6164 = vpack.c.bf16 %v6108, %v6107
  %v6165 = vpack.c.bf16 %v6110, %v6109
  %v6166 = vpack.c.bf16 %v6112, %v6111
  %v6167 = vpack.c.bf16 %v6114, %v6113
  %v6168 = vpack.c.bf16 %v6116, %v6115
  %v6169 = vpack.c.bf16 %v6118, %v6117
  %v6170 = vpack.c.bf16 %v6120, %v6119
  %v6171 = vpack.c.bf16 %v6122, %v6121
  %v6172 = vpack.c.bf16 %v6124, %v6123
  %v6173 = vpack.c.bf16 %v6126, %v6125
  %v6174 = vpack.c.bf16 %v6128, %v6127
  %v6175 = vpack.c.bf16 %v6130, %v6129
  %v6176 = vpack.c.bf16 %v6132, %v6131
  %v6177 = vpack.c.bf16 %v6134, %v6133
  %v6178 = vpack.c.bf16 %v6136, %v6135
  %v6179 = vpack.c.bf16 %v6138, %v6137
  %v6180 = vpack.c.bf16 %v6140, %v6139
  %v6181 = vpack.c.bf16 %v6142, %v6141
  %v6182 = vpack.c.bf16 %v6144, %v6143
  %v6183 = vpack.c.bf16 %v6146, %v6145
  %v6184 = vpack.c.bf16 %v6148, %v6147
  %v6185 = vpack.c.bf16 %v6150, %v6149
  %v6186 = vpack.c.bf16 %v6152, %v6151
  %v6189 = vunpack.c.l.b16 %v6153
  %v6190 = vunpack.c.h.b16 %v6153
  %v6191 = vunpack.c.l.b16 %v6154
  %v6192 = vunpack.c.h.b16 %v6154
  %v6193 = vpack.c.b16 %v6189, %v6189
  %v6194 = vpack.c.b16 %v6190, %v6190
  %v6195 = vpack.c.b16 %v6191, %v6191
  %v6196 = vpack.c.b16 %v6192, %v6192
  %6201 = vmatprep.subr.bf16.mxu0 0
  %6202 = vmatpush1.bf16.msra.mxu0 %v6155
  %6203 = vmatprep.subr.bf16.mxu0 0
  %6204 = vmatpush1.bf16.msra.mxu0 %v6156
  %6205 = vmatprep.subr.bf16.mxu0 0
  %6206 = vmatpush1.bf16.msra.mxu0 %v6157
  %6207 = vmatprep.subr.bf16.mxu0 0
  %6208 = vmatpush1.bf16.msra.mxu0 %v6158
  %6209 = vmatprep.subr.bf16.mxu0 0
  %6210 = vmatpush1.bf16.msra.mxu0 %v6159
  %6211 = vmatprep.subr.bf16.mxu0 0
  %6212 = vmatpush1.bf16.msra.mxu0 %v6160
  %6213 = vmatprep.subr.bf16.mxu0 0
  %6214 = vmatpush1.bf16.msra.mxu0 %v6161
  %6215 = vmatprep.subr.bf16.mxu0 0
  %6216 = vmatpush1.bf16.msra.mxu0 %v6162
  %6217 = vmatprep.subr.bf16.mxu0 0
  %6218 = vmatpush1.bf16.msra.mxu0 %v6163
  %6219 = vmatprep.subr.bf16.mxu0 0
  %6220 = vmatpush1.bf16.msra.mxu0 %v6164
  %6221 = vmatprep.subr.bf16.mxu0 0
  %6222 = vmatpush1.bf16.msra.mxu0 %v6165
  %6223 = vmatprep.subr.bf16.mxu0 0
  %6224 = vmatpush1.bf16.msra.mxu0 %v6166
  %6225 = vmatprep.subr.bf16.mxu0 0
  %6226 = vmatpush1.bf16.msra.mxu0 %v6167
  %6227 = vmatprep.subr.bf16.mxu0 0
  %6228 = vmatpush1.bf16.msra.mxu0 %v6168
  %6229 = vmatprep.subr.bf16.mxu0 0
  %6230 = vmatpush1.bf16.msra.mxu0 %v6169
  %6231 = vmatprep.subr.bf16.mxu0 0
  %6232 = vmatpush1.bf16.msra.mxu0 %v6170
  %6233 = vmatprep.mubr.bf16.mxu0 %v6194
  %6234 = vmatmul.mubr.bf16.gmra.mrb[0].mxu0 %v6193
  %v6235 = vpop.f32.mrb[0].mxu0
  %v6236 = vadd.f32 0.0, %v6235
  %v6237 = vpop.f32.mrb[0].mxu0
  %v6238 = vpop.f32.mrb[0].mxu0
  %v6239 = vpop.f32.mrb[0].mxu0
  %6240 = vdwg.mxu0
  %6241 = vmatprep.subr.bf16.mxu0 0
  %6242 = vmatpush1.bf16.msra.mxu0 %v6171
  %6243 = vmatprep.subr.bf16.mxu0 0
  %6244 = vmatpush1.bf16.msra.mxu0 %v6172
  %6245 = vmatprep.subr.bf16.mxu0 0
  %6246 = vmatpush1.bf16.msra.mxu0 %v6173
  %6247 = vmatprep.subr.bf16.mxu0 0
  %6248 = vmatpush1.bf16.msra.mxu0 %v6174
  %6249 = vmatprep.subr.bf16.mxu0 0
  %6250 = vmatpush1.bf16.msra.mxu0 %v6175
  %6251 = vmatprep.subr.bf16.mxu0 0
  %6252 = vmatpush1.bf16.msra.mxu0 %v6176
  %6253 = vmatprep.subr.bf16.mxu0 0
  %6254 = vmatpush1.bf16.msra.mxu0 %v6177
  %6255 = vmatprep.subr.bf16.mxu0 0
  %6256 = vmatpush1.bf16.msra.mxu0 %v6178
  %6257 = vmatprep.subr.bf16.mxu0 0
  %6258 = vmatpush1.bf16.msra.mxu0 %v6179
  %6259 = vmatprep.subr.bf16.mxu0 0
  %6260 = vmatpush1.bf16.msra.mxu0 %v6180
  %6261 = vmatprep.subr.bf16.mxu0 0
  %6262 = vmatpush1.bf16.msra.mxu0 %v6181
  %6263 = vmatprep.subr.bf16.mxu0 0
  %6264 = vmatpush1.bf16.msra.mxu0 %v6182
  %6265 = vmatprep.subr.bf16.mxu0 0
  %6266 = vmatpush1.bf16.msra.mxu0 %v6183
  %6267 = vmatprep.subr.bf16.mxu0 0
  %6268 = vmatpush1.bf16.msra.mxu0 %v6184
  %6269 = vmatprep.subr.bf16.mxu0 0
  %6270 = vmatpush1.bf16.msra.mxu0 %v6185
  %6271 = vmatprep.subr.bf16.mxu0 0
  %6272 = vmatpush1.bf16.msra.mxu0 %v6186
  %6273 = vmatprep.mubr.bf16.mxu0 %v6196
  %6274 = vmatmul.mubr.bf16.gmra.mrb[0].mxu0 %v6195
  %v6275 = vpop.f32.mrb[0].mxu0
  %v6276 = vadd.f32 %v6236, %v6275
  %v6277 = vpop.f32.mrb[0].mxu0
  %v6278 = vpop.f32.mrb[0].mxu0
  %v6279 = vpop.f32.mrb[0].mxu0
  %6280 = vdwg.mxu0
  %v6281 = vpack.c.bf16 %v6276, %v6276
  %v6282 = vld [vmem:[%s3] sm:$0xf]
  %v6283 = vld [vmem:[%s3 + $0x4] sm:$0xf]
  %v6284 = vld [vmem:[%s3 + $0x8] sm:$0xf]
  %v6285 = vld [vmem:[%s3 + $0xc] sm:$0xf]
  %v6286 = vld [vmem:[%s3 + $0x10] sm:$0xf]
  %v6287 = vld [vmem:[%s3 + $0x14] sm:$0xf]
  %v6288 = vld [vmem:[%s3 + $0x18] sm:$0xf]
  %v6289 = vld [vmem:[%s3 + $0x1c] sm:$0xf]
  %v6290 = vld [vmem:[%s3 + $0x20] sm:$0xf]
  %v6291 = vld [vmem:[%s3 + $0x24] sm:$0xf]
  %v6292 = vld [vmem:[%s3 + $0x28] sm:$0xf]
  %v6293 = vld [vmem:[%s3 + $0x2c] sm:$0xf]
  %v6294 = vld [vmem:[%s3 + $0x30] sm:$0xf]
  %v6295 = vld [vmem:[%s3 + $0x34] sm:$0xf]
  %v6296 = vld [vmem:[%s3 + $0x38] sm:$0xf]
  %v6297 = vld [vmem:[%s3 + $0x3c] sm:$0xf]
  %v6298 = vld [vmem:[%s4] sm:$0x1]
  %v6300 = vlaneseq
  %v6301 = vshrl.u32 %v6300, 7
  %v6302 = vsub.s32 0, %v6301
  %v6303 = vrot.slane %v6298, %v6302
  %v6321 = vunpack.c.l.b16 %v6282
  %v6322 = vunpack.c.l.b16 %v6283
  %v6323 = vunpack.c.l.b16 %v6284
  %v6324 = vunpack.c.l.b16 %v6285
  %v6325 = vunpack.c.l.b16 %v6286
  %v6326 = vunpack.c.l.b16 %v6287
  %v6327 = vunpack.c.l.b16 %v6288
  %v6328 = vunpack.c.l.b16 %v6289
  %v6329 = vunpack.c.l.b16 %v6290
  %v6330 = vunpack.c.l.b16 %v6291
  %v6331 = vunpack.c.l.b16 %v6292
  %v6332 = vunpack.c.l.b16 %v6293
  %v6333 = vunpack.c.l.b16 %v6294
  %v6334 = vunpack.c.l.b16 %v6295
  %v6335 = vunpack.c.l.b16 %v6296
  %v6336 = vunpack.c.l.b16 %v6297
  %v6337 = vpack.c.b16 %v6322, %v6321
  %v6338 = vpack.c.b16 %v6324, %v6323
  %v6339 = vpack.c.b16 %v6326, %v6325
  %v6340 = vpack.c.b16 %v6328, %v6327
  %v6341 = vpack.c.b16 %v6330, %v6329
  %v6342 = vpack.c.b16 %v6332, %v6331
  %v6343 = vpack.c.b16 %v6334, %v6333
  %v6344 = vpack.c.b16 %v6336, %v6335
  %6353 = vmatprep.subr.bf16.mxu0 0
  %6354 = vmatpush1.bf16.msra.mxu0 %v6337
  %6355 = vmatprep.subr.bf16.mxu0 0
  %6356 = vmatpush1.bf16.msra.mxu0 %v6338
  %6357 = vmatprep.subr.bf16.mxu0 0
  %6358 = vmatpush1.bf16.msra.mxu0 %v6339
  %6359 = vmatprep.subr.bf16.mxu0 0
  %6360 = vmatpush1.bf16.msra.mxu0 %v6340
  %6361 = vmatprep.subr.bf16.mxu0 0
  %6362 = vmatpush1.bf16.msra.mxu0 %v6341
  %6363 = vmatprep.subr.bf16.mxu0 0
  %6364 = vmatpush1.bf16.msra.mxu0 %v6342
  %6365 = vmatprep.subr.bf16.mxu0 0
  %6366 = vmatpush1.bf16.msra.mxu0 %v6343
  %6367 = vmatprep.subr.bf16.mxu0 0
  %6368 = vmatpush1.bf16.msra.mxu0 %v6344
  %6369 = vmatprep.subr.bf16.mxu0 0
  %6370 = vmatpush1.bf16.msra.mxu0 0
  %6371 = vmatprep.subr.bf16.mxu0 0
  %6372 = vmatpush1.bf16.msra.mxu0 0
  %6373 = vmatprep.subr.bf16.mxu0 0
  %6374 = vmatpush1.bf16.msra.mxu0 0
  %6375 = vmatprep.subr.bf16.mxu0 0
  %6376 = vmatpush1.bf16.msra.mxu0 0
  %6377 = vmatprep.subr.bf16.mxu0 0
  %6378 = vmatpush1.bf16.msra.mxu0 0
  %6379 = vmatprep.subr.bf16.mxu0 0
  %6380 = vmatpush1.bf16.msra.mxu0 0
  %6381 = vmatprep.subr.bf16.mxu0 0
  %6382 = vmatpush1.bf16.msra.mxu0 0
  %6383 = vmatprep.subr.bf16.mxu0 0
  %6384 = vmatpush1.bf16.msra.mxu0 0
  %6385 = vmatprep.mubr.bf16.mxu0 0
  %6386 = vmatmul.mubr.bf16.gmra.mrb[0].mxu0 %v6281
  %v6387 = vpop.f32.mrb[0].mxu0
  %v6388 = vadd.f32 %v6303, %v6387
  %v6389 = vpop.f32.mrb[0].mxu0
  %v6390 = vpop.f32.mrb[0].mxu0
  %v6391 = vpop.f32.mrb[0].mxu0
  %6392 = vdwg.mxu0
  %6393 = vst [vmem:[%s6] sm:$0xff] %v6388
  // Predicated region
  $region26: #{ref_model_forward.1} parent=0 // pred_check
    _
  $region27: #{ref_model_forward.1} parent=0 // pred_check_branch
    %6395 = sbr.rel (0) target = $region29
  $region28: #{ref_model_forward.1} parent=0 // pred_region
    _
  $region29: #{ref_model_forward.1} parent=0 // pred_fallthru
    _
  // Predicated region
  $region30: #{ref_model_forward.1} parent=0 // pred_check
    _
  $region31: #{ref_model_forward.1} parent=0 // pred_check_branch
    %6397 = sbr.rel (0) target = $region33
  $region32: #{ref_model_forward.1} parent=0 // pred_region
    _
  $region33: #{ref_model_forward.1} parent=0 // pred_fallthru
    _

</llo_original>
